<compile_context>
chip_gen: v6e
topology: v6e:2x2x1
jax: 0.10.0
libtpu: 0.0.40
codegen_flags: <defaults>
</compile_context>

<pallas_src>
import jax
import jax.numpy as jnp
from jax.experimental import pallas as pl
from jax.experimental.pallas import tpu as pltpu

# ---- model hyper-parameters (consistent with the PyTorch module's __init__) ----
D_MODEL = 64                      # must be a multiple of 32 (num_heads = d_model // 32)
NUM_LAYERS = 2
PATCH = 4
IMG = 16
CHANNELS = 3                      # hardcoded 3 channels in the PyTorch module
NUM_HEADS = D_MODEL // 32
HEAD_DIM = D_MODEL // NUM_HEADS
D_FF = 4 * D_MODEL
N_PATCHES = (IMG // PATCH) ** 2
P_DIM = PATCH * PATCH * CHANNELS  # 48
EPS = 1e-5                        # PyTorch LayerNorm default eps

# ---- packed small-parameter slab layout (one row per tiny vector, 256 lanes) ----
SLAB_W = 256                      # multiple of 128; wide enough for bff1 (d_ff = 256)
_SLAB_ROWS = [
    ("lnp1_g", P_DIM), ("lnp1_b", P_DIM),
    ("bpe", D_MODEL), ("lnp2_g", D_MODEL), ("lnp2_b", D_MODEL),
]
for _l in range(NUM_LAYERS):
    _SLAB_ROWS += [
        (f"bqkv{_l}", 3 * D_MODEL), (f"bo{_l}", D_MODEL),
        (f"ln1_g{_l}", D_MODEL), (f"ln1_b{_l}", D_MODEL),
        (f"bff1{_l}", D_FF), (f"bff2{_l}", D_MODEL),
        (f"ln2_g{_l}", D_MODEL), (f"ln2_b{_l}", D_MODEL),
    ]
_SLAB_ROWS += [("lno_g", D_MODEL), ("lno_b", D_MODEL),
               ("bp1", D_MODEL), ("bp2", D_MODEL)]
SLAB_IDX = {name: i for i, (name, _) in enumerate(_SLAB_ROWS)}
SLAB_LEN = dict(_SLAB_ROWS)
N_SLAB_ROWS = len(_SLAB_ROWS)


def _layernorm(x, g, b):
    """LayerNorm over the last axis (biased variance, like torch.nn.LayerNorm)."""
    mu = jnp.mean(x, axis=-1, keepdims=True)
    var = jnp.mean((x - mu) ** 2, axis=-1, keepdims=True)
    return (x - mu) * jax.lax.rsqrt(var + EPS) * g + b


def vit_kernel(patches_ref, pos_ref, slab_ref, wpe_ref, wqkv_ref, wo_ref,
               wff1_ref, wff2_ref, wp1_ref, wp2_ref, out_ref):
    TB = patches_ref.shape[0]
    BN = TB * N_PATCHES
    bf16 = jnp.bfloat16

    def row(name):
        # Static (1, n) slice of the packed small-parameter slab (f32).
        r = SLAB_IDX[name]
        return slab_ref[r:r + 1, 0:SLAB_LEN[name]]

    # ---- patch embedding: LayerNorm(P) -> Linear(P, D) -> LayerNorm(D) ----
    x = patches_ref[...].reshape(BN, P_DIM)
    x = _layernorm(x, row("lnp1_g"), row("lnp1_b"))
    x = jnp.dot(x.astype(bf16), wpe_ref[...],
                preferred_element_type=jnp.float32) + row("bpe")
    x = _layernorm(x, row("lnp2_g"), row("lnp2_b"))                     # [BN, D] f32

    # ---- fixed 2D sin/cos positional embedding (pre-tiled to [TB*N, D]) ----
    x = x + pos_ref[...]
    # TODO(synk): nn.Dropout is identity at inference; training-mode dropout not implemented.

    for l in range(NUM_LAYERS):
        # ---- self-attention (post-norm, PyTorch TransformerEncoderLayer default) ----
        # One fused [BN, D] @ [D, 3D] bf16 MXU matmul; the 1/sqrt(head_dim) softmax
        # scale is pre-folded into the q columns of wqkv / bqkv.
        qkv = jnp.dot(x.astype(bf16), wqkv_ref[l],
                      preferred_element_type=jnp.float32) + row(f"bqkv{l}")
        ctx_heads = []
        for h in range(NUM_HEADS):
            q = qkv[:, h * HEAD_DIM:(h + 1) * HEAD_DIM]
            k = qkv[:, D_MODEL + h * HEAD_DIM:D_MODEL + (h + 1) * HEAD_DIM]
            v = qkv[:, 2 * D_MODEL + h * HEAD_DIM:2 * D_MODEL + (h + 1) * HEAD_DIM]
            qb = q.reshape(TB, N_PATCHES, HEAD_DIM).astype(bf16)
            kb = k.reshape(TB, N_PATCHES, HEAD_DIM).astype(bf16)
            vb = v.reshape(TB, N_PATCHES, HEAD_DIM).astype(bf16)
            s = jnp.einsum('bnd,bmd->bnm', qb, kb,
                           preferred_element_type=jnp.float32)          # [TB, N, N]
            s = s - jnp.max(s, axis=-1, keepdims=True)
            e = jnp.exp(s)
            # softmax denominator -> EUP reciprocal (free slot) instead of VALU divide
            p = e * pl.reciprocal(jnp.sum(e, axis=-1, keepdims=True), approx=True)
            ctx = jnp.einsum('bnm,bmd->bnd', p.astype(bf16), vb,
                             preferred_element_type=jnp.float32)        # [TB, N, Hd]
            ctx_heads.append(ctx.reshape(BN, HEAD_DIM))
        ctx_all = jnp.concatenate(ctx_heads, axis=-1)                   # [BN, D] lane concat
        attn = jnp.dot(ctx_all.astype(bf16), wo_ref[l],
                       preferred_element_type=jnp.float32) + row(f"bo{l}")
        x = _layernorm(x + attn, row(f"ln1_g{l}"), row(f"ln1_b{l}"))

        # ---- feed-forward block (ReLU activation, PyTorch default) ----
        hdn = jnp.dot(x.astype(bf16), wff1_ref[l],
                      preferred_element_type=jnp.float32) + row(f"bff1{l}")
        hdn = jnp.maximum(hdn, 0.0)
        ff = jnp.dot(hdn.astype(bf16), wff2_ref[l],
                     preferred_element_type=jnp.float32) + row(f"bff2{l}")
        x = _layernorm(x + ff, row(f"ln2_g{l}"), row(f"ln2_b{l}"))

    # ---- output LayerNorm, mean pool over patches, projection head ----
    x = _layernorm(x, row("lno_g"), row("lno_b"))
    pooled = jnp.mean(x.reshape(TB, N_PATCHES, D_MODEL), axis=1)        # [TB, D]
    h1 = jnp.dot(pooled.astype(bf16), wp1_ref[...],
                 preferred_element_type=jnp.float32) + row("bp1")
    h1 = h1 * jax.nn.sigmoid(h1)                                        # SiLU
    out_ref[...] = jnp.dot(h1.astype(bf16), wp2_ref[...],
                           preferred_element_type=jnp.float32) + row("bp2")


# ----------------------------- plain-JAX glue -----------------------------

def posemb_sincos_2d(h, w, dim, temperature=10000.0):
    y, x = jnp.meshgrid(jnp.arange(h), jnp.arange(w), indexing='ij')
    omega = jnp.arange(dim // 4) / (dim // 4 - 1)
    omega = 1.0 / (temperature ** omega)
    y = y.reshape(-1)[:, None] * omega[None, :]
    x = x.reshape(-1)[:, None] * omega[None, :]
    pe = jnp.concatenate((jnp.sin(x), jnp.cos(x), jnp.sin(y), jnp.cos(y)), axis=1)
    return pe.astype(jnp.float32)                                       # [h*w, dim]


def rearrange_patches(img):
    """'b c (h p1) (w p2) -> b (h w) (p1 p2 c)' — pure layout glue."""
    B, C, H, W = img.shape
    h, w = H // PATCH, W // PATCH
    x = img.reshape(B, C, h, PATCH, w, PATCH)
    x = jnp.transpose(x, (0, 2, 4, 3, 5, 1))          # [B, h, w, p1, p2, C]
    return x.reshape(B, h * w, PATCH * PATCH * C)


def _pack_slab(small):
    rows = []
    for name, n in _SLAB_ROWS:
        v = small[name].astype(jnp.float32)
        rows.append(jnp.pad(v, (0, SLAB_W - n))[None, :])
    return jnp.concatenate(rows, axis=0)               # [N_SLAB_ROWS, SLAB_W] f32


def init_params(key):
    """Deterministic synthetic parameters, pre-packed for the kernel.

    Big weights are stored [in, out] (right-multiply), pre-cast to bf16; the fused
    qkv weight is [L, D, 3D] with the softmax scale folded into its q columns.  All
    tiny LayerNorm/bias vectors are packed into one f32 slab.
    """
    ks = jax.random.split(key, 8)
    w = lambda k, shape: 0.02 * jax.random.normal(k, shape, dtype=jnp.float32)
    L, D, F, P, Hd = NUM_LAYERS, D_MODEL, D_FF, P_DIM, HEAD_DIM

    wpe = w(ks[0], (P, D))
    wqkv = w(ks[1], (L, D, 3 * D))
    wo = w(ks[2], (L, D, D))
    wff1 = w(ks[3], (L, D, F))
    wff2 = w(ks[4], (L, F, D))
    wp1 = w(ks[5], (D, D))
    wp2 = w(ks[6], (D, D))

    # fold 1/sqrt(head_dim) attention scale into the q projection (constant transform)
    scale = 1.0 / (Hd ** 0.5)
    wqkv = wqkv.at[:, :, :D].multiply(scale)

    small = {
        "lnp1_g": jnp.ones((P,)), "lnp1_b": jnp.zeros((P,)),
        "bpe": jnp.zeros((D,)), "lnp2_g": jnp.ones((D,)), "lnp2_b": jnp.zeros((D,)),
        "lno_g": jnp.ones((D,)), "lno_b": jnp.zeros((D,)),
        "bp1": jnp.zeros((D,)), "bp2": jnp.zeros((D,)),
    }
    for l in range(L):
        bqkv = jnp.zeros((3 * D,))
        small[f"bqkv{l}"] = bqkv.at[:D].multiply(scale)   # fold scale into q bias too
        small[f"bo{l}"] = jnp.zeros((D,))
        small[f"ln1_g{l}"] = jnp.ones((D,))
        small[f"ln1_b{l}"] = jnp.zeros((D,))
        small[f"bff1{l}"] = jnp.zeros((F,))
        small[f"bff2{l}"] = jnp.zeros((D,))
        small[f"ln2_g{l}"] = jnp.ones((D,))
        small[f"ln2_b{l}"] = jnp.zeros((D,))
    slab = _pack_slab(small)

    bf = lambda a: a.astype(jnp.bfloat16)
    return (slab, bf(wpe), bf(wqkv), bf(wo), bf(wff1), bf(wff2), bf(wp1), bf(wp2))


def _pick_tb(B):
    # One grid step handles up to 128 images (BN = 2048 rows, a few MiB of VMEM —
    # far under every generation's limit).  Larger batches tile in blocks of 128
    # (multiple of 8, keeps the (8,128) constraint on the [TB, D] output block) and
    # shard across TensorCores via the "parallel" grid dimension on v7x.
    return B if B <= 128 else 128


@jax.jit
def vit_forward(img, params):
    B = img.shape[0]
    TB = _pick_tb(B)
    B_pad = ((B + TB - 1) // TB) * TB
    patches = rearrange_patches(img)                                    # [B, N, P]
    if B_pad != B:
        patches = jnp.pad(patches, ((0, B_pad - B), (0, 0), (0, 0)))
    pos = posemb_sincos_2d(IMG // PATCH, IMG // PATCH, D_MODEL)         # [N, D]
    pos_tiled = jnp.tile(pos, (TB, 1))                                  # [TB*N, D]

    in_specs = [
        pl.BlockSpec((TB, N_PATCHES, P_DIM), lambda i: (i, 0, 0)),
        pl.BlockSpec((TB * N_PATCHES, D_MODEL), lambda i: (0, 0)),
    ]
    for p in params:
        in_specs.append(pl.BlockSpec(p.shape, lambda i, nd=p.ndim: (0,) * nd))

    out = pl.pallas_call(
        vit_kernel,
        out_shape=jax.ShapeDtypeStruct((B_pad, D_MODEL), jnp.float32),
        grid=(B_pad // TB,),
        in_specs=in_specs,
        out_specs=pl.BlockSpec((TB, D_MODEL), lambda i: (i, 0)),
        compiler_params=pltpu.CompilerParams(
            dimension_semantics=("parallel",),
            vmem_limit_bytes=32 * 1024 * 1024,
        ),
    )(patches, pos_tiled, *params)
    return out[:B] if B_pad != B else out


if __name__ == "__main__":
    key = jax.random.PRNGKey(0)
    k_img, k_par = jax.random.split(key)
    x = jax.random.normal(k_img, (2, CHANNELS, IMG, IMG), dtype=jnp.float32)
    params = init_params(k_par)
    out = vit_forward(x, params)
    out = jax.block_until_ready(out)
    assert out.shape == (2, D_MODEL) and out.dtype == jnp.float32
    assert bool(jnp.all(jnp.isfinite(out)))
    print("KERNEL_OK")
</pallas_src>

<mosaic_0001>
module attributes {stable_mosaic.version = 11 : i64} {
  func.func @vit_kernel(%arg0: i32, %arg1: memref<2x16x48xf32, #tpu.memory_space<vmem>>, %arg2: memref<32x64xf32, #tpu.memory_space<vmem>>, %arg3: memref<25x256xf32, #tpu.memory_space<vmem>>, %arg4: memref<48x64xbf16, #tpu.memory_space<vmem>>, %arg5: memref<2x64x192xbf16, #tpu.memory_space<vmem>>, %arg6: memref<2x64x64xbf16, #tpu.memory_space<vmem>>, %arg7: memref<2x64x256xbf16, #tpu.memory_space<vmem>>, %arg8: memref<2x256x64xbf16, #tpu.memory_space<vmem>>, %arg9: memref<64x64xbf16, #tpu.memory_space<vmem>>, %arg10: memref<64x64xbf16, #tpu.memory_space<vmem>>, %arg11: memref<2x64xf32, #tpu.memory_space<vmem>>) attributes {dimension_semantics = [#tpu.dimension_semantics<parallel>], iteration_bounds = array<i64: 1>, scalar_prefetch = 0 : i64, scratch_operands = 0 : i64, tpu.core_type = #tpu.core_type<tc>, window_params = [{transform_indices = @transform_0, window_bounds = array<i64: 2, 16, 48>}, {pipeline_mode = #tpu.pipeline_mode<synchronous>, transform_indices = @transform_1, window_bounds = array<i64: 32, 64>}, {pipeline_mode = #tpu.pipeline_mode<synchronous>, transform_indices = @transform_2, window_bounds = array<i64: 25, 256>}, {pipeline_mode = #tpu.pipeline_mode<synchronous>, transform_indices = @transform_3, window_bounds = array<i64: 48, 64>}, {pipeline_mode = #tpu.pipeline_mode<synchronous>, transform_indices = @transform_4, window_bounds = array<i64: 2, 64, 192>}, {pipeline_mode = #tpu.pipeline_mode<synchronous>, transform_indices = @transform_5, window_bounds = array<i64: 2, 64, 64>}, {pipeline_mode = #tpu.pipeline_mode<synchronous>, transform_indices = @transform_6, window_bounds = array<i64: 2, 64, 256>}, {pipeline_mode = #tpu.pipeline_mode<synchronous>, transform_indices = @transform_7, window_bounds = array<i64: 2, 256, 64>}, {pipeline_mode = #tpu.pipeline_mode<synchronous>, transform_indices = @transform_8, window_bounds = array<i64: 64, 64>}, {pipeline_mode = #tpu.pipeline_mode<synchronous>, transform_indices = @transform_9, window_bounds = array<i64: 64, 64>}, {transform_indices = @transform_10, window_bounds = array<i64: 2, 64>}]} {
    %c0 = arith.constant 0 : index
    %c0_0 = arith.constant 0 : index
    %c0_1 = arith.constant 0 : index
    %0 = vector.load %arg1[%c0, %c0_0, %c0_1] : memref<2x16x48xf32, #tpu.memory_space<vmem>>, vector<2x16x48xf32>
    %1 = vector.shape_cast %0 : vector<2x16x48xf32> to vector<32x48xf32>
    %c0_2 = arith.constant 0 : index
    %c0_3 = arith.constant 0 : index
    %2 = vector.load %arg3[%c0_2, %c0_3] : memref<25x256xf32, #tpu.memory_space<vmem>>, vector<1x48xf32>
    %c1 = arith.constant 1 : index
    %c0_4 = arith.constant 0 : index
    %3 = vector.load %arg3[%c1, %c0_4] : memref<25x256xf32, #tpu.memory_space<vmem>>, vector<1x48xf32>
    %cst = arith.constant dense<0.000000e+00> : vector<32xf32>
    %4 = vector.multi_reduction <add>, %1, %cst [1] : vector<32x48xf32> to vector<32xf32>
    %5 = vector.shape_cast %4 : vector<32xf32> to vector<32x1xf32>
    %cst_5 = arith.constant 4.800000e+01 : f32
    %6 = vector.broadcast %cst_5 : f32 to vector<32x1xf32>
    %7 = arith.divf %5, %6 : vector<32x1xf32>
    %8 = vector.broadcast %7 : vector<32x1xf32> to vector<32x48xf32>
    %9 = arith.subf %1, %8 : vector<32x48xf32>
    %10 = arith.mulf %9, %9 : vector<32x48xf32>
    %cst_6 = arith.constant dense<0.000000e+00> : vector<32xf32>
    %11 = vector.multi_reduction <add>, %10, %cst_6 [1] : vector<32x48xf32> to vector<32xf32>
    %12 = vector.shape_cast %11 : vector<32xf32> to vector<32x1xf32>
    %cst_7 = arith.constant 4.800000e+01 : f32
    %13 = vector.broadcast %cst_7 : f32 to vector<32x1xf32>
    %14 = arith.divf %12, %13 : vector<32x1xf32>
    %15 = vector.broadcast %7 : vector<32x1xf32> to vector<32x48xf32>
    %16 = arith.subf %1, %15 : vector<32x48xf32>
    %cst_8 = arith.constant 9.99999974E-6 : f32
    %17 = vector.broadcast %cst_8 : f32 to vector<32x1xf32>
    %18 = arith.addf %14, %17 : vector<32x1xf32>
    %19 = math.rsqrt %18 : vector<32x1xf32>
    %20 = vector.broadcast %19 : vector<32x1xf32> to vector<32x48xf32>
    %21 = arith.mulf %16, %20 : vector<32x48xf32>
    %22 = vector.broadcast %2 : vector<1x48xf32> to vector<32x48xf32>
    %23 = arith.mulf %21, %22 : vector<32x48xf32>
    %24 = vector.broadcast %3 : vector<1x48xf32> to vector<32x48xf32>
    %25 = arith.addf %23, %24 : vector<32x48xf32>
    %26 = arith.truncf %25 : vector<32x48xf32> to vector<32x48xbf16>
    %c0_9 = arith.constant 0 : index
    %c0_10 = arith.constant 0 : index
    %27 = vector.load %arg4[%c0_9, %c0_10] : memref<48x64xbf16, #tpu.memory_space<vmem>>, vector<48x64xbf16>
    %cst_11 = arith.constant dense<0.000000e+00> : vector<32x64xf32>
    %28 = tpu.matmul %26, %27, %cst_11 {dimension_numbers = #tpu.dot_dimension_numbers<[1], [0], [0], [1], [0, 0, 1, 1], [], []>} : vector<32x48xbf16>, vector<48x64xbf16>, vector<32x64xf32> -> vector<32x64xf32>
    %c2 = arith.constant 2 : index
    %c0_12 = arith.constant 0 : index
    %29 = vector.load %arg3[%c2, %c0_12] : memref<25x256xf32, #tpu.memory_space<vmem>>, vector<1x64xf32>
    %30 = vector.broadcast %29 : vector<1x64xf32> to vector<32x64xf32>
    %31 = arith.addf %28, %30 : vector<32x64xf32>
    %c3 = arith.constant 3 : index
    %c0_13 = arith.constant 0 : index
    %32 = vector.load %arg3[%c3, %c0_13] : memref<25x256xf32, #tpu.memory_space<vmem>>, vector<1x64xf32>
    %c4 = arith.constant 4 : index
    %c0_14 = arith.constant 0 : index
    %33 = vector.load %arg3[%c4, %c0_14] : memref<25x256xf32, #tpu.memory_space<vmem>>, vector<1x64xf32>
    %cst_15 = arith.constant dense<0.000000e+00> : vector<32xf32>
    %34 = vector.multi_reduction <add>, %31, %cst_15 [1] : vector<32x64xf32> to vector<32xf32>
    %35 = vector.shape_cast %34 : vector<32xf32> to vector<32x1xf32>
    %cst_16 = arith.constant 6.400000e+01 : f32
    %36 = vector.broadcast %cst_16 : f32 to vector<32x1xf32>
    %37 = arith.divf %35, %36 : vector<32x1xf32>
    %38 = vector.broadcast %37 : vector<32x1xf32> to vector<32x64xf32>
    %39 = arith.subf %31, %38 : vector<32x64xf32>
    %40 = arith.mulf %39, %39 : vector<32x64xf32>
    %cst_17 = arith.constant dense<0.000000e+00> : vector<32xf32>
    %41 = vector.multi_reduction <add>, %40, %cst_17 [1] : vector<32x64xf32> to vector<32xf32>
    %42 = vector.shape_cast %41 : vector<32xf32> to vector<32x1xf32>
    %cst_18 = arith.constant 6.400000e+01 : f32
    %43 = vector.broadcast %cst_18 : f32 to vector<32x1xf32>
    %44 = arith.divf %42, %43 : vector<32x1xf32>
    %45 = vector.broadcast %37 : vector<32x1xf32> to vector<32x64xf32>
    %46 = arith.subf %31, %45 : vector<32x64xf32>
    %cst_19 = arith.constant 9.99999974E-6 : f32
    %47 = vector.broadcast %cst_19 : f32 to vector<32x1xf32>
    %48 = arith.addf %44, %47 : vector<32x1xf32>
    %49 = math.rsqrt %48 : vector<32x1xf32>
    %50 = vector.broadcast %49 : vector<32x1xf32> to vector<32x64xf32>
    %51 = arith.mulf %46, %50 : vector<32x64xf32>
    %52 = vector.broadcast %32 : vector<1x64xf32> to vector<32x64xf32>
    %53 = arith.mulf %51, %52 : vector<32x64xf32>
    %54 = vector.broadcast %33 : vector<1x64xf32> to vector<32x64xf32>
    %55 = arith.addf %53, %54 : vector<32x64xf32>
    %c0_20 = arith.constant 0 : index
    %c0_21 = arith.constant 0 : index
    %56 = vector.load %arg2[%c0_20, %c0_21] : memref<32x64xf32, #tpu.memory_space<vmem>>, vector<32x64xf32>
    %57 = arith.addf %55, %56 : vector<32x64xf32>
    %58 = arith.truncf %57 : vector<32x64xf32> to vector<32x64xbf16>
    %c0_22 = arith.constant 0 : index
    %c0_23 = arith.constant 0 : index
    %c0_24 = arith.constant 0 : index
    %59 = vector.load %arg5[%c0_22, %c0_23, %c0_24] : memref<2x64x192xbf16, #tpu.memory_space<vmem>>, vector<1x64x192xbf16>
    %60 = vector.shape_cast %59 : vector<1x64x192xbf16> to vector<64x192xbf16>
    %cst_25 = arith.constant dense<0.000000e+00> : vector<32x192xf32>
    %61 = tpu.matmul %58, %60, %cst_25 {dimension_numbers = #tpu.dot_dimension_numbers<[1], [0], [0], [1], [0, 0, 1, 1], [], []>} : vector<32x64xbf16>, vector<64x192xbf16>, vector<32x192xf32> -> vector<32x192xf32>
    %c5 = arith.constant 5 : index
    %c0_26 = arith.constant 0 : index
    %62 = vector.load %arg3[%c5, %c0_26] : memref<25x256xf32, #tpu.memory_space<vmem>>, vector<1x192xf32>
    %63 = vector.broadcast %62 : vector<1x192xf32> to vector<32x192xf32>
    %64 = arith.addf %61, %63 : vector<32x192xf32>
    %65 = vector.extract_strided_slice %64 {offsets = [0, 0], sizes = [32, 32], strides = [1, 1]} : vector<32x192xf32> to vector<32x32xf32>
    %66 = vector.extract_strided_slice %64 {offsets = [0, 64], sizes = [32, 32], strides = [1, 1]} : vector<32x192xf32> to vector<32x32xf32>
    %67 = vector.extract_strided_slice %64 {offsets = [0, 128], sizes = [32, 32], strides = [1, 1]} : vector<32x192xf32> to vector<32x32xf32>
    %68 = vector.shape_cast %65 : vector<32x32xf32> to vector<2x16x32xf32>
    %69 = arith.truncf %68 : vector<2x16x32xf32> to vector<2x16x32xbf16>
    %70 = vector.shape_cast %66 : vector<32x32xf32> to vector<2x16x32xf32>
    %71 = arith.truncf %70 : vector<2x16x32xf32> to vector<2x16x32xbf16>
    %72 = vector.shape_cast %67 : vector<32x32xf32> to vector<2x16x32xf32>
    %73 = arith.truncf %72 : vector<2x16x32xf32> to vector<2x16x32xbf16>
    "tpu.trace_start"() <{level = 10 : i32, message = "bnd,bmd->bnm"}> : () -> ()
    %cst_27 = arith.constant dense<0.000000e+00> : vector<2x16x16xf32>
    %74 = tpu.matmul %69, %71, %cst_27 {dimension_numbers = #tpu.dot_dimension_numbers<[2], [2], [1], [1], [0, 0, 0, 1, 1, 1], [0], [0]>} : vector<2x16x32xbf16>, vector<2x16x32xbf16>, vector<2x16x16xf32> -> vector<2x16x16xf32>
    "tpu.trace_stop"() : () -> ()
    %cst_28 = arith.constant dense<0xFF800000> : vector<2x16xf32>
    %75 = vector.multi_reduction <maximumf>, %74, %cst_28 [2] : vector<2x16x16xf32> to vector<2x16xf32>
    %76 = vector.shape_cast %75 : vector<2x16xf32> to vector<2x16x1xf32>
    %77 = vector.broadcast %76 : vector<2x16x1xf32> to vector<2x16x16xf32>
    %78 = arith.subf %74, %77 : vector<2x16x16xf32>
    %79 = math.exp %78 : vector<2x16x16xf32>
    %cst_29 = arith.constant dense<0.000000e+00> : vector<2x16xf32>
    %80 = vector.multi_reduction <add>, %79, %cst_29 [2] : vector<2x16x16xf32> to vector<2x16xf32>
    %81 = vector.shape_cast %80 : vector<2x16xf32> to vector<2x16x1xf32>
    %82 = tpu.reciprocal %81 {approx = true} : vector<2x16x1xf32> -> vector<2x16x1xf32>
    %83 = vector.broadcast %82 : vector<2x16x1xf32> to vector<2x16x16xf32>
    %84 = arith.mulf %79, %83 : vector<2x16x16xf32>
    %85 = arith.truncf %84 : vector<2x16x16xf32> to vector<2x16x16xbf16>
    "tpu.trace_start"() <{level = 10 : i32, message = "bnm,bmd->bnd"}> : () -> ()
    %cst_30 = arith.constant dense<0.000000e+00> : vector<2x16x32xf32>
    %86 = tpu.matmul %85, %73, %cst_30 {dimension_numbers = #tpu.dot_dimension_numbers<[2], [1], [1], [2], [0, 0, 0, 1, 1, 2], [0], [0]>} : vector<2x16x16xbf16>, vector<2x16x32xbf16>, vector<2x16x32xf32> -> vector<2x16x32xf32>
    "tpu.trace_stop"() : () -> ()
    %87 = vector.shape_cast %86 : vector<2x16x32xf32> to vector<32x32xf32>
    %88 = vector.extract_strided_slice %64 {offsets = [0, 32], sizes = [32, 32], strides = [1, 1]} : vector<32x192xf32> to vector<32x32xf32>
    %89 = vector.extract_strided_slice %64 {offsets = [0, 96], sizes = [32, 32], strides = [1, 1]} : vector<32x192xf32> to vector<32x32xf32>
    %90 = vector.extract_strided_slice %64 {offsets = [0, 160], sizes = [32, 32], strides = [1, 1]} : vector<32x192xf32> to vector<32x32xf32>
    %91 = vector.shape_cast %88 : vector<32x32xf32> to vector<2x16x32xf32>
    %92 = arith.truncf %91 : vector<2x16x32xf32> to vector<2x16x32xbf16>
    %93 = vector.shape_cast %89 : vector<32x32xf32> to vector<2x16x32xf32>
    %94 = arith.truncf %93 : vector<2x16x32xf32> to vector<2x16x32xbf16>
    %95 = vector.shape_cast %90 : vector<32x32xf32> to vector<2x16x32xf32>
    %96 = arith.truncf %95 : vector<2x16x32xf32> to vector<2x16x32xbf16>
    "tpu.trace_start"() <{level = 10 : i32, message = "bnd,bmd->bnm"}> : () -> ()
    %cst_31 = arith.constant dense<0.000000e+00> : vector<2x16x16xf32>
    %97 = tpu.matmul %92, %94, %cst_31 {dimension_numbers = #tpu.dot_dimension_numbers<[2], [2], [1], [1], [0, 0, 0, 1, 1, 1], [0], [0]>} : vector<2x16x32xbf16>, vector<2x16x32xbf16>, vector<2x16x16xf32> -> vector<2x16x16xf32>
    "tpu.trace_stop"() : () -> ()
    %cst_32 = arith.constant dense<0xFF800000> : vector<2x16xf32>
    %98 = vector.multi_reduction <maximumf>, %97, %cst_32 [2] : vector<2x16x16xf32> to vector<2x16xf32>
    %99 = vector.shape_cast %98 : vector<2x16xf32> to vector<2x16x1xf32>
    %100 = vector.broadcast %99 : vector<2x16x1xf32> to vector<2x16x16xf32>
    %101 = arith.subf %97, %100 : vector<2x16x16xf32>
    %102 = math.exp %101 : vector<2x16x16xf32>
    %cst_33 = arith.constant dense<0.000000e+00> : vector<2x16xf32>
    %103 = vector.multi_reduction <add>, %102, %cst_33 [2] : vector<2x16x16xf32> to vector<2x16xf32>
    %104 = vector.shape_cast %103 : vector<2x16xf32> to vector<2x16x1xf32>
    %105 = tpu.reciprocal %104 {approx = true} : vector<2x16x1xf32> -> vector<2x16x1xf32>
    %106 = vector.broadcast %105 : vector<2x16x1xf32> to vector<2x16x16xf32>
    %107 = arith.mulf %102, %106 : vector<2x16x16xf32>
    %108 = arith.truncf %107 : vector<2x16x16xf32> to vector<2x16x16xbf16>
    "tpu.trace_start"() <{level = 10 : i32, message = "bnm,bmd->bnd"}> : () -> ()
    %cst_34 = arith.constant dense<0.000000e+00> : vector<2x16x32xf32>
    %109 = tpu.matmul %108, %96, %cst_34 {dimension_numbers = #tpu.dot_dimension_numbers<[2], [1], [1], [2], [0, 0, 0, 1, 1, 2], [0], [0]>} : vector<2x16x16xbf16>, vector<2x16x32xbf16>, vector<2x16x32xf32> -> vector<2x16x32xf32>
    "tpu.trace_stop"() : () -> ()
    %110 = vector.shape_cast %109 : vector<2x16x32xf32> to vector<32x32xf32>
    %111 = tpu.concatenate %87, %110 in 1 : vector<32x32xf32>, vector<32x32xf32> -> vector<32x64xf32>
    %112 = arith.truncf %111 : vector<32x64xf32> to vector<32x64xbf16>
    %c0_35 = arith.constant 0 : index
    %c0_36 = arith.constant 0 : index
    %c0_37 = arith.constant 0 : index
    %113 = vector.load %arg6[%c0_35, %c0_36, %c0_37] : memref<2x64x64xbf16, #tpu.memory_space<vmem>>, vector<1x64x64xbf16>
    %114 = vector.shape_cast %113 : vector<1x64x64xbf16> to vector<64x64xbf16>
    %cst_38 = arith.constant dense<0.000000e+00> : vector<32x64xf32>
    %115 = tpu.matmul %112, %114, %cst_38 {dimension_numbers = #tpu.dot_dimension_numbers<[1], [0], [0], [1], [0, 0, 1, 1], [], []>} : vector<32x64xbf16>, vector<64x64xbf16>, vector<32x64xf32> -> vector<32x64xf32>
    %c6 = arith.constant 6 : index
    %c0_39 = arith.constant 0 : index
    %116 = vector.load %arg3[%c6, %c0_39] : memref<25x256xf32, #tpu.memory_space<vmem>>, vector<1x64xf32>
    %117 = vector.broadcast %116 : vector<1x64xf32> to vector<32x64xf32>
    %118 = arith.addf %115, %117 : vector<32x64xf32>
    %119 = arith.addf %57, %118 : vector<32x64xf32>
    %c7 = arith.constant 7 : index
    %c0_40 = arith.constant 0 : index
    %120 = vector.load %arg3[%c7, %c0_40] : memref<25x256xf32, #tpu.memory_space<vmem>>, vector<1x64xf32>
    %c8 = arith.constant 8 : index
    %c0_41 = arith.constant 0 : index
    %121 = vector.load %arg3[%c8, %c0_41] : memref<25x256xf32, #tpu.memory_space<vmem>>, vector<1x64xf32>
    %cst_42 = arith.constant dense<0.000000e+00> : vector<32xf32>
    %122 = vector.multi_reduction <add>, %119, %cst_42 [1] : vector<32x64xf32> to vector<32xf32>
    %123 = vector.shape_cast %122 : vector<32xf32> to vector<32x1xf32>
    %cst_43 = arith.constant 6.400000e+01 : f32
    %124 = vector.broadcast %cst_43 : f32 to vector<32x1xf32>
    %125 = arith.divf %123, %124 : vector<32x1xf32>
    %126 = vector.broadcast %125 : vector<32x1xf32> to vector<32x64xf32>
    %127 = arith.subf %119, %126 : vector<32x64xf32>
    %128 = arith.mulf %127, %127 : vector<32x64xf32>
    %cst_44 = arith.constant dense<0.000000e+00> : vector<32xf32>
    %129 = vector.multi_reduction <add>, %128, %cst_44 [1] : vector<32x64xf32> to vector<32xf32>
    %130 = vector.shape_cast %129 : vector<32xf32> to vector<32x1xf32>
    %cst_45 = arith.constant 6.400000e+01 : f32
    %131 = vector.broadcast %cst_45 : f32 to vector<32x1xf32>
    %132 = arith.divf %130, %131 : vector<32x1xf32>
    %133 = vector.broadcast %125 : vector<32x1xf32> to vector<32x64xf32>
    %134 = arith.subf %119, %133 : vector<32x64xf32>
    %cst_46 = arith.constant 9.99999974E-6 : f32
    %135 = vector.broadcast %cst_46 : f32 to vector<32x1xf32>
    %136 = arith.addf %132, %135 : vector<32x1xf32>
    %137 = math.rsqrt %136 : vector<32x1xf32>
    %138 = vector.broadcast %137 : vector<32x1xf32> to vector<32x64xf32>
    %139 = arith.mulf %134, %138 : vector<32x64xf32>
    %140 = vector.broadcast %120 : vector<1x64xf32> to vector<32x64xf32>
    %141 = arith.mulf %139, %140 : vector<32x64xf32>
    %142 = vector.broadcast %121 : vector<1x64xf32> to vector<32x64xf32>
    %143 = arith.addf %141, %142 : vector<32x64xf32>
    %144 = arith.truncf %143 : vector<32x64xf32> to vector<32x64xbf16>
    %c0_47 = arith.constant 0 : index
    %c0_48 = arith.constant 0 : index
    %c0_49 = arith.constant 0 : index
    %145 = vector.load %arg7[%c0_47, %c0_48, %c0_49] : memref<2x64x256xbf16, #tpu.memory_space<vmem>>, vector<1x64x256xbf16>
    %146 = vector.shape_cast %145 : vector<1x64x256xbf16> to vector<64x256xbf16>
    %cst_50 = arith.constant dense<0.000000e+00> : vector<32x256xf32>
    %147 = tpu.matmul %144, %146, %cst_50 {dimension_numbers = #tpu.dot_dimension_numbers<[1], [0], [0], [1], [0, 0, 1, 1], [], []>} : vector<32x64xbf16>, vector<64x256xbf16>, vector<32x256xf32> -> vector<32x256xf32>
    %c9 = arith.constant 9 : index
    %c0_51 = arith.constant 0 : index
    %148 = vector.load %arg3[%c9, %c0_51] : memref<25x256xf32, #tpu.memory_space<vmem>>, vector<1x256xf32>
    %149 = vector.broadcast %148 : vector<1x256xf32> to vector<32x256xf32>
    %150 = arith.addf %147, %149 : vector<32x256xf32>
    %cst_52 = arith.constant 0.000000e+00 : f32
    %151 = vector.broadcast %cst_52 : f32 to vector<32x256xf32>
    %152 = arith.maximumf %150, %151 : vector<32x256xf32>
    %153 = arith.truncf %152 : vector<32x256xf32> to vector<32x256xbf16>
    %c0_53 = arith.constant 0 : index
    %c0_54 = arith.constant 0 : index
    %c0_55 = arith.constant 0 : index
    %154 = vector.load %arg8[%c0_53, %c0_54, %c0_55] : memref<2x256x64xbf16, #tpu.memory_space<vmem>>, vector<1x256x64xbf16>
    %155 = vector.shape_cast %154 : vector<1x256x64xbf16> to vector<256x64xbf16>
    %cst_56 = arith.constant dense<0.000000e+00> : vector<32x64xf32>
    %156 = tpu.matmul %153, %155, %cst_56 {dimension_numbers = #tpu.dot_dimension_numbers<[1], [0], [0], [1], [0, 0, 1, 1], [], []>} : vector<32x256xbf16>, vector<256x64xbf16>, vector<32x64xf32> -> vector<32x64xf32>
    %c10 = arith.constant 10 : index
    %c0_57 = arith.constant 0 : index
    %157 = vector.load %arg3[%c10, %c0_57] : memref<25x256xf32, #tpu.memory_space<vmem>>, vector<1x64xf32>
    %158 = vector.broadcast %157 : vector<1x64xf32> to vector<32x64xf32>
    %159 = arith.addf %156, %158 : vector<32x64xf32>
    %160 = arith.addf %143, %159 : vector<32x64xf32>
    %c11 = arith.constant 11 : index
    %c0_58 = arith.constant 0 : index
    %161 = vector.load %arg3[%c11, %c0_58] : memref<25x256xf32, #tpu.memory_space<vmem>>, vector<1x64xf32>
    %c12 = arith.constant 12 : index
    %c0_59 = arith.constant 0 : index
    %162 = vector.load %arg3[%c12, %c0_59] : memref<25x256xf32, #tpu.memory_space<vmem>>, vector<1x64xf32>
    %cst_60 = arith.constant dense<0.000000e+00> : vector<32xf32>
    %163 = vector.multi_reduction <add>, %160, %cst_60 [1] : vector<32x64xf32> to vector<32xf32>
    %164 = vector.shape_cast %163 : vector<32xf32> to vector<32x1xf32>
    %cst_61 = arith.constant 6.400000e+01 : f32
    %165 = vector.broadcast %cst_61 : f32 to vector<32x1xf32>
    %166 = arith.divf %164, %165 : vector<32x1xf32>
    %167 = vector.broadcast %166 : vector<32x1xf32> to vector<32x64xf32>
    %168 = arith.subf %160, %167 : vector<32x64xf32>
    %169 = arith.mulf %168, %168 : vector<32x64xf32>
    %cst_62 = arith.constant dense<0.000000e+00> : vector<32xf32>
    %170 = vector.multi_reduction <add>, %169, %cst_62 [1] : vector<32x64xf32> to vector<32xf32>
    %171 = vector.shape_cast %170 : vector<32xf32> to vector<32x1xf32>
    %cst_63 = arith.constant 6.400000e+01 : f32
    %172 = vector.broadcast %cst_63 : f32 to vector<32x1xf32>
    %173 = arith.divf %171, %172 : vector<32x1xf32>
    %174 = vector.broadcast %166 : vector<32x1xf32> to vector<32x64xf32>
    %175 = arith.subf %160, %174 : vector<32x64xf32>
    %cst_64 = arith.constant 9.99999974E-6 : f32
    %176 = vector.broadcast %cst_64 : f32 to vector<32x1xf32>
    %177 = arith.addf %173, %176 : vector<32x1xf32>
    %178 = math.rsqrt %177 : vector<32x1xf32>
    %179 = vector.broadcast %178 : vector<32x1xf32> to vector<32x64xf32>
    %180 = arith.mulf %175, %179 : vector<32x64xf32>
    %181 = vector.broadcast %161 : vector<1x64xf32> to vector<32x64xf32>
    %182 = arith.mulf %180, %181 : vector<32x64xf32>
    %183 = vector.broadcast %162 : vector<1x64xf32> to vector<32x64xf32>
    %184 = arith.addf %182, %183 : vector<32x64xf32>
    %185 = arith.truncf %184 : vector<32x64xf32> to vector<32x64xbf16>
    %c1_65 = arith.constant 1 : index
    %c0_66 = arith.constant 0 : index
    %c0_67 = arith.constant 0 : index
    %186 = vector.load %arg5[%c1_65, %c0_66, %c0_67] : memref<2x64x192xbf16, #tpu.memory_space<vmem>>, vector<1x64x192xbf16>
    %187 = vector.shape_cast %186 : vector<1x64x192xbf16> to vector<64x192xbf16>
    %cst_68 = arith.constant dense<0.000000e+00> : vector<32x192xf32>
    %188 = tpu.matmul %185, %187, %cst_68 {dimension_numbers = #tpu.dot_dimension_numbers<[1], [0], [0], [1], [0, 0, 1, 1], [], []>} : vector<32x64xbf16>, vector<64x192xbf16>, vector<32x192xf32> -> vector<32x192xf32>
    %c13 = arith.constant 13 : index
    %c0_69 = arith.constant 0 : index
    %189 = vector.load %arg3[%c13, %c0_69] : memref<25x256xf32, #tpu.memory_space<vmem>>, vector<1x192xf32>
    %190 = vector.broadcast %189 : vector<1x192xf32> to vector<32x192xf32>
    %191 = arith.addf %188, %190 : vector<32x192xf32>
    %192 = vector.extract_strided_slice %191 {offsets = [0, 0], sizes = [32, 32], strides = [1, 1]} : vector<32x192xf32> to vector<32x32xf32>
    %193 = vector.extract_strided_slice %191 {offsets = [0, 64], sizes = [32, 32], strides = [1, 1]} : vector<32x192xf32> to vector<32x32xf32>
    %194 = vector.extract_strided_slice %191 {offsets = [0, 128], sizes = [32, 32], strides = [1, 1]} : vector<32x192xf32> to vector<32x32xf32>
    %195 = vector.shape_cast %192 : vector<32x32xf32> to vector<2x16x32xf32>
    %196 = arith.truncf %195 : vector<2x16x32xf32> to vector<2x16x32xbf16>
    %197 = vector.shape_cast %193 : vector<32x32xf32> to vector<2x16x32xf32>
    %198 = arith.truncf %197 : vector<2x16x32xf32> to vector<2x16x32xbf16>
    %199 = vector.shape_cast %194 : vector<32x32xf32> to vector<2x16x32xf32>
    %200 = arith.truncf %199 : vector<2x16x32xf32> to vector<2x16x32xbf16>
    "tpu.trace_start"() <{level = 10 : i32, message = "bnd,bmd->bnm"}> : () -> ()
    %cst_70 = arith.constant dense<0.000000e+00> : vector<2x16x16xf32>
    %201 = tpu.matmul %196, %198, %cst_70 {dimension_numbers = #tpu.dot_dimension_numbers<[2], [2], [1], [1], [0, 0, 0, 1, 1, 1], [0], [0]>} : vector<2x16x32xbf16>, vector<2x16x32xbf16>, vector<2x16x16xf32> -> vector<2x16x16xf32>
    "tpu.trace_stop"() : () -> ()
    %cst_71 = arith.constant dense<0xFF800000> : vector<2x16xf32>
    %202 = vector.multi_reduction <maximumf>, %201, %cst_71 [2] : vector<2x16x16xf32> to vector<2x16xf32>
    %203 = vector.shape_cast %202 : vector<2x16xf32> to vector<2x16x1xf32>
    %204 = vector.broadcast %203 : vector<2x16x1xf32> to vector<2x16x16xf32>
    %205 = arith.subf %201, %204 : vector<2x16x16xf32>
    %206 = math.exp %205 : vector<2x16x16xf32>
    %cst_72 = arith.constant dense<0.000000e+00> : vector<2x16xf32>
    %207 = vector.multi_reduction <add>, %206, %cst_72 [2] : vector<2x16x16xf32> to vector<2x16xf32>
    %208 = vector.shape_cast %207 : vector<2x16xf32> to vector<2x16x1xf32>
    %209 = tpu.reciprocal %208 {approx = true} : vector<2x16x1xf32> -> vector<2x16x1xf32>
    %210 = vector.broadcast %209 : vector<2x16x1xf32> to vector<2x16x16xf32>
    %211 = arith.mulf %206, %210 : vector<2x16x16xf32>
    %212 = arith.truncf %211 : vector<2x16x16xf32> to vector<2x16x16xbf16>
    "tpu.trace_start"() <{level = 10 : i32, message = "bnm,bmd->bnd"}> : () -> ()
    %cst_73 = arith.constant dense<0.000000e+00> : vector<2x16x32xf32>
    %213 = tpu.matmul %212, %200, %cst_73 {dimension_numbers = #tpu.dot_dimension_numbers<[2], [1], [1], [2], [0, 0, 0, 1, 1, 2], [0], [0]>} : vector<2x16x16xbf16>, vector<2x16x32xbf16>, vector<2x16x32xf32> -> vector<2x16x32xf32>
    "tpu.trace_stop"() : () -> ()
    %214 = vector.shape_cast %213 : vector<2x16x32xf32> to vector<32x32xf32>
    %215 = vector.extract_strided_slice %191 {offsets = [0, 32], sizes = [32, 32], strides = [1, 1]} : vector<32x192xf32> to vector<32x32xf32>
    %216 = vector.extract_strided_slice %191 {offsets = [0, 96], sizes = [32, 32], strides = [1, 1]} : vector<32x192xf32> to vector<32x32xf32>
    %217 = vector.extract_strided_slice %191 {offsets = [0, 160], sizes = [32, 32], strides = [1, 1]} : vector<32x192xf32> to vector<32x32xf32>
    %218 = vector.shape_cast %215 : vector<32x32xf32> to vector<2x16x32xf32>
    %219 = arith.truncf %218 : vector<2x16x32xf32> to vector<2x16x32xbf16>
    %220 = vector.shape_cast %216 : vector<32x32xf32> to vector<2x16x32xf32>
    %221 = arith.truncf %220 : vector<2x16x32xf32> to vector<2x16x32xbf16>
    %222 = vector.shape_cast %217 : vector<32x32xf32> to vector<2x16x32xf32>
    %223 = arith.truncf %222 : vector<2x16x32xf32> to vector<2x16x32xbf16>
    "tpu.trace_start"() <{level = 10 : i32, message = "bnd,bmd->bnm"}> : () -> ()
    %cst_74 = arith.constant dense<0.000000e+00> : vector<2x16x16xf32>
    %224 = tpu.matmul %219, %221, %cst_74 {dimension_numbers = #tpu.dot_dimension_numbers<[2], [2], [1], [1], [0, 0, 0, 1, 1, 1], [0], [0]>} : vector<2x16x32xbf16>, vector<2x16x32xbf16>, vector<2x16x16xf32> -> vector<2x16x16xf32>
    "tpu.trace_stop"() : () -> ()
    %cst_75 = arith.constant dense<0xFF800000> : vector<2x16xf32>
    %225 = vector.multi_reduction <maximumf>, %224, %cst_75 [2] : vector<2x16x16xf32> to vector<2x16xf32>
    %226 = vector.shape_cast %225 : vector<2x16xf32> to vector<2x16x1xf32>
    %227 = vector.broadcast %226 : vector<2x16x1xf32> to vector<2x16x16xf32>
    %228 = arith.subf %224, %227 : vector<2x16x16xf32>
    %229 = math.exp %228 : vector<2x16x16xf32>
    %cst_76 = arith.constant dense<0.000000e+00> : vector<2x16xf32>
    %230 = vector.multi_reduction <add>, %229, %cst_76 [2] : vector<2x16x16xf32> to vector<2x16xf32>
    %231 = vector.shape_cast %230 : vector<2x16xf32> to vector<2x16x1xf32>
    %232 = tpu.reciprocal %231 {approx = true} : vector<2x16x1xf32> -> vector<2x16x1xf32>
    %233 = vector.broadcast %232 : vector<2x16x1xf32> to vector<2x16x16xf32>
    %234 = arith.mulf %229, %233 : vector<2x16x16xf32>
    %235 = arith.truncf %234 : vector<2x16x16xf32> to vector<2x16x16xbf16>
    "tpu.trace_start"() <{level = 10 : i32, message = "bnm,bmd->bnd"}> : () -> ()
    %cst_77 = arith.constant dense<0.000000e+00> : vector<2x16x32xf32>
    %236 = tpu.matmul %235, %223, %cst_77 {dimension_numbers = #tpu.dot_dimension_numbers<[2], [1], [1], [2], [0, 0, 0, 1, 1, 2], [0], [0]>} : vector<2x16x16xbf16>, vector<2x16x32xbf16>, vector<2x16x32xf32> -> vector<2x16x32xf32>
    "tpu.trace_stop"() : () -> ()
    %237 = vector.shape_cast %236 : vector<2x16x32xf32> to vector<32x32xf32>
    %238 = tpu.concatenate %214, %237 in 1 : vector<32x32xf32>, vector<32x32xf32> -> vector<32x64xf32>
    %239 = arith.truncf %238 : vector<32x64xf32> to vector<32x64xbf16>
    %c1_78 = arith.constant 1 : index
    %c0_79 = arith.constant 0 : index
    %c0_80 = arith.constant 0 : index
    %240 = vector.load %arg6[%c1_78, %c0_79, %c0_80] : memref<2x64x64xbf16, #tpu.memory_space<vmem>>, vector<1x64x64xbf16>
    %241 = vector.shape_cast %240 : vector<1x64x64xbf16> to vector<64x64xbf16>
    %cst_81 = arith.constant dense<0.000000e+00> : vector<32x64xf32>
    %242 = tpu.matmul %239, %241, %cst_81 {dimension_numbers = #tpu.dot_dimension_numbers<[1], [0], [0], [1], [0, 0, 1, 1], [], []>} : vector<32x64xbf16>, vector<64x64xbf16>, vector<32x64xf32> -> vector<32x64xf32>
    %c14 = arith.constant 14 : index
    %c0_82 = arith.constant 0 : index
    %243 = vector.load %arg3[%c14, %c0_82] : memref<25x256xf32, #tpu.memory_space<vmem>>, vector<1x64xf32>
    %244 = vector.broadcast %243 : vector<1x64xf32> to vector<32x64xf32>
    %245 = arith.addf %242, %244 : vector<32x64xf32>
    %246 = arith.addf %184, %245 : vector<32x64xf32>
    %c15 = arith.constant 15 : index
    %c0_83 = arith.constant 0 : index
    %247 = vector.load %arg3[%c15, %c0_83] : memref<25x256xf32, #tpu.memory_space<vmem>>, vector<1x64xf32>
    %c16 = arith.constant 16 : index
    %c0_84 = arith.constant 0 : index
    %248 = vector.load %arg3[%c16, %c0_84] : memref<25x256xf32, #tpu.memory_space<vmem>>, vector<1x64xf32>
    %cst_85 = arith.constant dense<0.000000e+00> : vector<32xf32>
    %249 = vector.multi_reduction <add>, %246, %cst_85 [1] : vector<32x64xf32> to vector<32xf32>
    %250 = vector.shape_cast %249 : vector<32xf32> to vector<32x1xf32>
    %cst_86 = arith.constant 6.400000e+01 : f32
    %251 = vector.broadcast %cst_86 : f32 to vector<32x1xf32>
    %252 = arith.divf %250, %251 : vector<32x1xf32>
    %253 = vector.broadcast %252 : vector<32x1xf32> to vector<32x64xf32>
    %254 = arith.subf %246, %253 : vector<32x64xf32>
    %255 = arith.mulf %254, %254 : vector<32x64xf32>
    %cst_87 = arith.constant dense<0.000000e+00> : vector<32xf32>
    %256 = vector.multi_reduction <add>, %255, %cst_87 [1] : vector<32x64xf32> to vector<32xf32>
    %257 = vector.shape_cast %256 : vector<32xf32> to vector<32x1xf32>
    %cst_88 = arith.constant 6.400000e+01 : f32
    %258 = vector.broadcast %cst_88 : f32 to vector<32x1xf32>
    %259 = arith.divf %257, %258 : vector<32x1xf32>
    %260 = vector.broadcast %252 : vector<32x1xf32> to vector<32x64xf32>
    %261 = arith.subf %246, %260 : vector<32x64xf32>
    %cst_89 = arith.constant 9.99999974E-6 : f32
    %262 = vector.broadcast %cst_89 : f32 to vector<32x1xf32>
    %263 = arith.addf %259, %262 : vector<32x1xf32>
    %264 = math.rsqrt %263 : vector<32x1xf32>
    %265 = vector.broadcast %264 : vector<32x1xf32> to vector<32x64xf32>
    %266 = arith.mulf %261, %265 : vector<32x64xf32>
    %267 = vector.broadcast %247 : vector<1x64xf32> to vector<32x64xf32>
    %268 = arith.mulf %266, %267 : vector<32x64xf32>
    %269 = vector.broadcast %248 : vector<1x64xf32> to vector<32x64xf32>
    %270 = arith.addf %268, %269 : vector<32x64xf32>
    %271 = arith.truncf %270 : vector<32x64xf32> to vector<32x64xbf16>
    %c1_90 = arith.constant 1 : index
    %c0_91 = arith.constant 0 : index
    %c0_92 = arith.constant 0 : index
    %272 = vector.load %arg7[%c1_90, %c0_91, %c0_92] : memref<2x64x256xbf16, #tpu.memory_space<vmem>>, vector<1x64x256xbf16>
    %273 = vector.shape_cast %272 : vector<1x64x256xbf16> to vector<64x256xbf16>
    %cst_93 = arith.constant dense<0.000000e+00> : vector<32x256xf32>
    %274 = tpu.matmul %271, %273, %cst_93 {dimension_numbers = #tpu.dot_dimension_numbers<[1], [0], [0], [1], [0, 0, 1, 1], [], []>} : vector<32x64xbf16>, vector<64x256xbf16>, vector<32x256xf32> -> vector<32x256xf32>
    %c17 = arith.constant 17 : index
    %c0_94 = arith.constant 0 : index
    %275 = vector.load %arg3[%c17, %c0_94] : memref<25x256xf32, #tpu.memory_space<vmem>>, vector<1x256xf32>
    %276 = vector.broadcast %275 : vector<1x256xf32> to vector<32x256xf32>
    %277 = arith.addf %274, %276 : vector<32x256xf32>
    %cst_95 = arith.constant 0.000000e+00 : f32
    %278 = vector.broadcast %cst_95 : f32 to vector<32x256xf32>
    %279 = arith.maximumf %277, %278 : vector<32x256xf32>
    %280 = arith.truncf %279 : vector<32x256xf32> to vector<32x256xbf16>
    %c1_96 = arith.constant 1 : index
    %c0_97 = arith.constant 0 : index
    %c0_98 = arith.constant 0 : index
    %281 = vector.load %arg8[%c1_96, %c0_97, %c0_98] : memref<2x256x64xbf16, #tpu.memory_space<vmem>>, vector<1x256x64xbf16>
    %282 = vector.shape_cast %281 : vector<1x256x64xbf16> to vector<256x64xbf16>
    %cst_99 = arith.constant dense<0.000000e+00> : vector<32x64xf32>
    %283 = tpu.matmul %280, %282, %cst_99 {dimension_numbers = #tpu.dot_dimension_numbers<[1], [0], [0], [1], [0, 0, 1, 1], [], []>} : vector<32x256xbf16>, vector<256x64xbf16>, vector<32x64xf32> -> vector<32x64xf32>
    %c18 = arith.constant 18 : index
    %c0_100 = arith.constant 0 : index
    %284 = vector.load %arg3[%c18, %c0_100] : memref<25x256xf32, #tpu.memory_space<vmem>>, vector<1x64xf32>
    %285 = vector.broadcast %284 : vector<1x64xf32> to vector<32x64xf32>
    %286 = arith.addf %283, %285 : vector<32x64xf32>
    %287 = arith.addf %270, %286 : vector<32x64xf32>
    %c19 = arith.constant 19 : index
    %c0_101 = arith.constant 0 : index
    %288 = vector.load %arg3[%c19, %c0_101] : memref<25x256xf32, #tpu.memory_space<vmem>>, vector<1x64xf32>
    %c20 = arith.constant 20 : index
    %c0_102 = arith.constant 0 : index
    %289 = vector.load %arg3[%c20, %c0_102] : memref<25x256xf32, #tpu.memory_space<vmem>>, vector<1x64xf32>
    %cst_103 = arith.constant dense<0.000000e+00> : vector<32xf32>
    %290 = vector.multi_reduction <add>, %287, %cst_103 [1] : vector<32x64xf32> to vector<32xf32>
    %291 = vector.shape_cast %290 : vector<32xf32> to vector<32x1xf32>
    %cst_104 = arith.constant 6.400000e+01 : f32
    %292 = vector.broadcast %cst_104 : f32 to vector<32x1xf32>
    %293 = arith.divf %291, %292 : vector<32x1xf32>
    %294 = vector.broadcast %293 : vector<32x1xf32> to vector<32x64xf32>
    %295 = arith.subf %287, %294 : vector<32x64xf32>
    %296 = arith.mulf %295, %295 : vector<32x64xf32>
    %cst_105 = arith.constant dense<0.000000e+00> : vector<32xf32>
    %297 = vector.multi_reduction <add>, %296, %cst_105 [1] : vector<32x64xf32> to vector<32xf32>
    %298 = vector.shape_cast %297 : vector<32xf32> to vector<32x1xf32>
    %cst_106 = arith.constant 6.400000e+01 : f32
    %299 = vector.broadcast %cst_106 : f32 to vector<32x1xf32>
    %300 = arith.divf %298, %299 : vector<32x1xf32>
    %301 = vector.broadcast %293 : vector<32x1xf32> to vector<32x64xf32>
    %302 = arith.subf %287, %301 : vector<32x64xf32>
    %cst_107 = arith.constant 9.99999974E-6 : f32
    %303 = vector.broadcast %cst_107 : f32 to vector<32x1xf32>
    %304 = arith.addf %300, %303 : vector<32x1xf32>
    %305 = math.rsqrt %304 : vector<32x1xf32>
    %306 = vector.broadcast %305 : vector<32x1xf32> to vector<32x64xf32>
    %307 = arith.mulf %302, %306 : vector<32x64xf32>
    %308 = vector.broadcast %288 : vector<1x64xf32> to vector<32x64xf32>
    %309 = arith.mulf %307, %308 : vector<32x64xf32>
    %310 = vector.broadcast %289 : vector<1x64xf32> to vector<32x64xf32>
    %311 = arith.addf %309, %310 : vector<32x64xf32>
    %c21 = arith.constant 21 : index
    %c0_108 = arith.constant 0 : index
    %312 = vector.load %arg3[%c21, %c0_108] : memref<25x256xf32, #tpu.memory_space<vmem>>, vector<1x64xf32>
    %c22 = arith.constant 22 : index
    %c0_109 = arith.constant 0 : index
    %313 = vector.load %arg3[%c22, %c0_109] : memref<25x256xf32, #tpu.memory_space<vmem>>, vector<1x64xf32>
    %cst_110 = arith.constant dense<0.000000e+00> : vector<32xf32>
    %314 = vector.multi_reduction <add>, %311, %cst_110 [1] : vector<32x64xf32> to vector<32xf32>
    %315 = vector.shape_cast %314 : vector<32xf32> to vector<32x1xf32>
    %cst_111 = arith.constant 6.400000e+01 : f32
    %316 = vector.broadcast %cst_111 : f32 to vector<32x1xf32>
    %317 = arith.divf %315, %316 : vector<32x1xf32>
    %318 = vector.broadcast %317 : vector<32x1xf32> to vector<32x64xf32>
    %319 = arith.subf %311, %318 : vector<32x64xf32>
    %320 = arith.mulf %319, %319 : vector<32x64xf32>
    %cst_112 = arith.constant dense<0.000000e+00> : vector<32xf32>
    %321 = vector.multi_reduction <add>, %320, %cst_112 [1] : vector<32x64xf32> to vector<32xf32>
    %322 = vector.shape_cast %321 : vector<32xf32> to vector<32x1xf32>
    %cst_113 = arith.constant 6.400000e+01 : f32
    %323 = vector.broadcast %cst_113 : f32 to vector<32x1xf32>
    %324 = arith.divf %322, %323 : vector<32x1xf32>
    %325 = vector.broadcast %317 : vector<32x1xf32> to vector<32x64xf32>
    %326 = arith.subf %311, %325 : vector<32x64xf32>
    %cst_114 = arith.constant 9.99999974E-6 : f32
    %327 = vector.broadcast %cst_114 : f32 to vector<32x1xf32>
    %328 = arith.addf %324, %327 : vector<32x1xf32>
    %329 = math.rsqrt %328 : vector<32x1xf32>
    %330 = vector.broadcast %329 : vector<32x1xf32> to vector<32x64xf32>
    %331 = arith.mulf %326, %330 : vector<32x64xf32>
    %332 = vector.broadcast %312 : vector<1x64xf32> to vector<32x64xf32>
    %333 = arith.mulf %331, %332 : vector<32x64xf32>
    %334 = vector.broadcast %313 : vector<1x64xf32> to vector<32x64xf32>
    %335 = arith.addf %333, %334 : vector<32x64xf32>
    %336 = vector.shape_cast %335 : vector<32x64xf32> to vector<2x16x64xf32>
    %cst_115 = arith.constant dense<0.000000e+00> : vector<2x64xf32>
    %337 = vector.multi_reduction <add>, %336, %cst_115 [1] : vector<2x16x64xf32> to vector<2x64xf32>
    %cst_116 = arith.constant 1.600000e+01 : f32
    %338 = vector.broadcast %cst_116 : f32 to vector<2x64xf32>
    %339 = arith.divf %337, %338 : vector<2x64xf32>
    %340 = arith.truncf %339 : vector<2x64xf32> to vector<2x64xbf16>
    %c0_117 = arith.constant 0 : index
    %c0_118 = arith.constant 0 : index
    %341 = vector.load %arg9[%c0_117, %c0_118] : memref<64x64xbf16, #tpu.memory_space<vmem>>, vector<64x64xbf16>
    %cst_119 = arith.constant dense<0.000000e+00> : vector<2x64xf32>
    %342 = tpu.matmul %340, %341, %cst_119 {dimension_numbers = #tpu.dot_dimension_numbers<[1], [0], [0], [1], [0, 0, 1, 1], [], []>} : vector<2x64xbf16>, vector<64x64xbf16>, vector<2x64xf32> -> vector<2x64xf32>
    %c23 = arith.constant 23 : index
    %c0_120 = arith.constant 0 : index
    %343 = vector.load %arg3[%c23, %c0_120] : memref<25x256xf32, #tpu.memory_space<vmem>>, vector<1x64xf32>
    %344 = vector.broadcast %343 : vector<1x64xf32> to vector<2x64xf32>
    %345 = arith.addf %342, %344 : vector<2x64xf32>
    %346 = arith.negf %345 : vector<2x64xf32>
    %347 = math.exp %346 : vector<2x64xf32>
    %cst_121 = arith.constant 1.000000e+00 : f32
    %348 = vector.broadcast %cst_121 : f32 to vector<2x64xf32>
    %349 = arith.addf %348, %347 : vector<2x64xf32>
    %350 = arith.divf %348, %349 : vector<2x64xf32>
    %351 = arith.mulf %345, %350 : vector<2x64xf32>
    %352 = arith.truncf %351 : vector<2x64xf32> to vector<2x64xbf16>
    %c0_122 = arith.constant 0 : index
    %c0_123 = arith.constant 0 : index
    %353 = vector.load %arg10[%c0_122, %c0_123] : memref<64x64xbf16, #tpu.memory_space<vmem>>, vector<64x64xbf16>
    %cst_124 = arith.constant dense<0.000000e+00> : vector<2x64xf32>
    %354 = tpu.matmul %352, %353, %cst_124 {dimension_numbers = #tpu.dot_dimension_numbers<[1], [0], [0], [1], [0, 0, 1, 1], [], []>} : vector<2x64xbf16>, vector<64x64xbf16>, vector<2x64xf32> -> vector<2x64xf32>
    %c24 = arith.constant 24 : index
    %c0_125 = arith.constant 0 : index
    %355 = vector.load %arg3[%c24, %c0_125] : memref<25x256xf32, #tpu.memory_space<vmem>>, vector<1x64xf32>
    %356 = vector.broadcast %355 : vector<1x64xf32> to vector<2x64xf32>
    %357 = arith.addf %354, %356 : vector<2x64xf32>
    %c0_126 = arith.constant 0 : index
    %c0_127 = arith.constant 0 : index
    %358 = vector.load %arg11[%c0_126, %c0_127] : memref<2x64xf32, #tpu.memory_space<vmem>>, vector<2x64xf32>
    tpu.vector_store %arg11[%c0_126, %c0_127], %357 {strides = array<i32>} : memref<2x64xf32, #tpu.memory_space<vmem>>, vector<2x64xf32>,
    return
  }
  func.func @transform_0(%arg0: i32) -> (i32, i32, i32) {
    %c0_i32 = arith.constant 0 : i32
    %c0_i32_0 = arith.constant 0 : i32
    %c0_i32_1 = arith.constant 0 : i32
    return %arg0, %c0_i32, %c0_i32_0 : i32, i32, i32
  }
  func.func @transform_1(%arg0: i32) -> (i32, i32) {
    %c0_i32 = arith.constant 0 : i32
    %c0_i32_0 = arith.constant 0 : i32
    %c0_i32_1 = arith.constant 0 : i32
    return %c0_i32, %c0_i32_0 : i32, i32
  }
  func.func @transform_2(%arg0: i32) -> (i32, i32) {
    %c0_i32 = arith.constant 0 : i32
    %c0_i32_0 = arith.constant 0 : i32
    %c0_i32_1 = arith.constant 0 : i32
    return %c0_i32, %c0_i32_0 : i32, i32
  }
  func.func @transform_3(%arg0: i32) -> (i32, i32) {
    %c0_i32 = arith.constant 0 : i32
    %c0_i32_0 = arith.constant 0 : i32
    %c0_i32_1 = arith.constant 0 : i32
    return %c0_i32, %c0_i32_0 : i32, i32
  }
  func.func @transform_4(%arg0: i32) -> (i32, i32, i32) {
    %c0_i32 = arith.constant 0 : i32
    %c0_i32_0 = arith.constant 0 : i32
    %c0_i32_1 = arith.constant 0 : i32
    %c0_i32_2 = arith.constant 0 : i32
    return %c0_i32, %c0_i32_0, %c0_i32_1 : i32, i32, i32
  }
  func.func @transform_5(%arg0: i32) -> (i32, i32, i32) {
    %c0_i32 = arith.constant 0 : i32
    %c0_i32_0 = arith.constant 0 : i32
    %c0_i32_1 = arith.constant 0 : i32
    %c0_i32_2 = arith.constant 0 : i32
    return %c0_i32, %c0_i32_0, %c0_i32_1 : i32, i32, i32
  }
  func.func @transform_6(%arg0: i32) -> (i32, i32, i32) {
    %c0_i32 = arith.constant 0 : i32
    %c0_i32_0 = arith.constant 0 : i32
    %c0_i32_1 = arith.constant 0 : i32
    %c0_i32_2 = arith.constant 0 : i32
    return %c0_i32, %c0_i32_0, %c0_i32_1 : i32, i32, i32
  }
  func.func @transform_7(%arg0: i32) -> (i32, i32, i32) {
    %c0_i32 = arith.constant 0 : i32
    %c0_i32_0 = arith.constant 0 : i32
    %c0_i32_1 = arith.constant 0 : i32
    %c0_i32_2 = arith.constant 0 : i32
    return %c0_i32, %c0_i32_0, %c0_i32_1 : i32, i32, i32
  }
  func.func @transform_8(%arg0: i32) -> (i32, i32) {
    %c0_i32 = arith.constant 0 : i32
    %c0_i32_0 = arith.constant 0 : i32
    %c0_i32_1 = arith.constant 0 : i32
    return %c0_i32, %c0_i32_0 : i32, i32
  }
  func.func @transform_9(%arg0: i32) -> (i32, i32) {
    %c0_i32 = arith.constant 0 : i32
    %c0_i32_0 = arith.constant 0 : i32
    %c0_i32_1 = arith.constant 0 : i32
    return %c0_i32, %c0_i32_0 : i32, i32
  }
  func.func @transform_10(%arg0: i32) -> (i32, i32) {
    %c0_i32 = arith.constant 0 : i32
    %c0_i32_0 = arith.constant 0 : i32
    return %arg0, %c0_i32 : i32, i32
  }
}

</mosaic_0001>

<llo_original>
// kernel: vit_forward.1
$region0: #{vit_forward.1}
  #allocation0 [shape = 'u32[]', space=smem, size = 0x4, offset = 0x4, fixed_abs, tag = 'smem constant byte address 0x4 - core index']
  #allocation1 [shape = 'u32[144,128]{1,0:T(1,128)}', space=vmem, size = 0x12000, scoped, tag = 'internal scratch']
  %s0 = inlined_call_operand.vmem [shape: f32[2,16,48], index: 0, kind: input, shape index: {}]
  %s1 = inlined_call_operand.vmem [shape: f32[32,64], index: 1, kind: input, shape index: {}]
  %s2 = inlined_call_operand.vmem [shape: f32[25,256], index: 2, kind: input, shape index: {}]
  %s3 = inlined_call_operand.vmem [shape: bf16[48,64], index: 3, kind: input, shape index: {}]
  %s4 = inlined_call_operand.vmem [shape: bf16[2,64,192], index: 4, kind: input, shape index: {}]
  %s5 = inlined_call_operand.vmem [shape: bf16[2,64,64], index: 5, kind: input, shape index: {}]
  %s6 = inlined_call_operand.vmem [shape: bf16[2,64,256], index: 6, kind: input, shape index: {}]
  %s7 = inlined_call_operand.vmem [shape: bf16[2,256,64], index: 7, kind: input, shape index: {}]
  %s8 = inlined_call_operand.vmem [shape: bf16[64,64], index: 8, kind: input, shape index: {}]
  %s9 = inlined_call_operand.vmem [shape: bf16[64,64], index: 9, kind: input, shape index: {}]
  %s10 = inlined_call_operand.hbm [shape: f32[2,64], index: 10, kind: output, shape index: {}]
  %s11 = sld [smem:[#allocation0]]
  $region50: #{vit_forward.1} parent=0
    _
  %s13 = ssub.s32 1, %s11
  %s14 = scalar_select 0, %s13, %s11
  $region1: #{vit_forward.1} parent=0
    #allocation2 [shape = 'u8[1024]{0}', space=vmem, size = 0x400, scoped, tag = 'output window, operand 0, single buffered']
    #allocation3 [shape = 's32[1]{0}', space=sflag, size = 0x4, scoped, tag = 'scoped memory for vit_forward.1']
    %15 = vsyncpa [#allocation3], 0
    // Predicated region
    $region2: #{vit_forward.1} parent=1 // pred_check
      _
    $region3: #{vit_forward.1} parent=1 // pred_check_branch
      %17 = sbr.rel (0) target = $region5
    $region4: #{vit_forward.1} parent=1 // pred_region
      _
    $region5: #{vit_forward.1} parent=1 // pred_fallthru
      _
    // Predicated region
    $region6: #{vit_forward.1} parent=1 // pred_check
      _
    $region7: #{vit_forward.1} parent=1 // pred_check_branch
      %19 = sbr.rel (0) target = $region9
    $region8: #{vit_forward.1} parent=1 // pred_region
      _
    $region9: #{vit_forward.1} parent=1 // pred_fallthru
      _
    // Predicated region
    $region10: #{vit_forward.1} parent=1 // pred_check
      _
    $region11: #{vit_forward.1} parent=1 // pred_check_branch
      %21 = sbr.rel (0) target = $region13
    $region12: #{vit_forward.1} parent=1 // pred_region
      _
    $region13: #{vit_forward.1} parent=1 // pred_fallthru
      _
    // Predicated region
    $region14: #{vit_forward.1} parent=1 // pred_check
      _
    $region15: #{vit_forward.1} parent=1 // pred_check_branch
      %23 = sbr.rel (0) target = $region17
    $region16: #{vit_forward.1} parent=1 // pred_region
      _
    $region17: #{vit_forward.1} parent=1 // pred_fallthru
      _
    // Predicated region
    $region18: #{vit_forward.1} parent=1 // pred_check
      _
    $region19: #{vit_forward.1} parent=1 // pred_check_branch
      %25 = sbr.rel (0) target = $region21
    $region20: #{vit_forward.1} parent=1 // pred_region
      _
    $region21: #{vit_forward.1} parent=1 // pred_fallthru
      _
    // Predicated region
    $region22: #{vit_forward.1} parent=1 // pred_check
      _
    $region23: #{vit_forward.1} parent=1 // pred_check_branch
      %27 = sbr.rel (0) target = $region25
    $region24: #{vit_forward.1} parent=1 // pred_region
      _
    $region25: #{vit_forward.1} parent=1 // pred_fallthru
      _
    // Predicated region
    $region26: #{vit_forward.1} parent=1 // pred_check
      _
    $region27: #{vit_forward.1} parent=1 // pred_check_branch
      %29 = sbr.rel (0) target = $region29
    $region28: #{vit_forward.1} parent=1 // pred_region
      _
    $region29: #{vit_forward.1} parent=1 // pred_fallthru
      _
    // Predicated region
    $region30: #{vit_forward.1} parent=1 // pred_check
      _
    $region31: #{vit_forward.1} parent=1 // pred_check_branch
      %31 = sbr.rel (0) target = $region33
    $region32: #{vit_forward.1} parent=1 // pred_region
      _
    $region33: #{vit_forward.1} parent=1 // pred_fallthru
      _
    // Predicated region
    $region34: #{vit_forward.1} parent=1 // pred_check
      _
    $region35: #{vit_forward.1} parent=1 // pred_check_branch
      %33 = sbr.rel (0) target = $region37
    $region36: #{vit_forward.1} parent=1 // pred_region
      _
    $region37: #{vit_forward.1} parent=1 // pred_fallthru
      _
    // Predicated region
    $region38: #{vit_forward.1} parent=1 // pred_check
      _
    $region39: #{vit_forward.1} parent=1 // pred_check_branch
      %35 = sbr.rel (0) target = $region41
    $region40: #{vit_forward.1} parent=1 // pred_region
      _
    $region41: #{vit_forward.1} parent=1 // pred_fallthru
      _
    %v37 = vld [vmem:[%s0] sm:$0xff]
    %v38 = vld [vmem:[%s0 + $0x8] sm:$0xff]
    %v39 = vld [vmem:[%s0 + $0x10] sm:$0xff]
    %v40 = vld [vmem:[%s0 + $0x18] sm:$0xff]
    %v41 = vld [vmem:[%s2] ss:$0 sm:$0xff]
    %v42 = vld [vmem:[%s2 + $0x1] ss:$0 sm:$0xff]
    %vm43 = vcmask 392192
    %v44 = vsel %vm43, %v37, 0.0
    %45 = vadd.xlane.f32.xlu0 %v44
    %v46 = vpop.xlane.xlu0 %45
    %v47 = vsel %vm43, %v38, 0.0
    %48 = vadd.xlane.f32.xlu0 %v47
    %v49 = vpop.xlane.xlu0 %48
    %v50 = vsel %vm43, %v39, 0.0
    %51 = vadd.xlane.f32.xlu0 %v50
    %v52 = vpop.xlane.xlu0 %51
    %v53 = vsel %vm43, %v40, 0.0
    %54 = vadd.xlane.f32.xlu0 %v53
    %v55 = vpop.xlane.xlu0 %54
    %v56 = vrcp.pop 48.0
    %v57 = vmul.f32 %v46, %v56
    %v58 = vmul.f32 %v49, %v56
    %v59 = vmul.f32 %v52, %v56
    %v60 = vmul.f32 %v55, %v56
    %v61 = vsub.f32 %v37, %v57
    %v62 = vsub.f32 %v38, %v58
    %v63 = vsub.f32 %v39, %v59
    %v64 = vsub.f32 %v40, %v60
    %v65 = vmul.f32 %v61, %v61
    %v66 = vmul.f32 %v62, %v62
    %v67 = vmul.f32 %v63, %v63
    %v68 = vmul.f32 %v64, %v64
    %v69 = vsel %vm43, %v65, 0.0
    %70 = vadd.xlane.f32.xlu0 %v69
    %v71 = vpop.xlane.xlu0 %70
    %v72 = vsel %vm43, %v66, 0.0
    %73 = vadd.xlane.f32.xlu0 %v72
    %v74 = vpop.xlane.xlu0 %73
    %v75 = vsel %vm43, %v67, 0.0
    %76 = vadd.xlane.f32.xlu0 %v75
    %v77 = vpop.xlane.xlu0 %76
    %v78 = vsel %vm43, %v68, 0.0
    %79 = vadd.xlane.f32.xlu0 %v78
    %v80 = vpop.xlane.xlu0 %79
    %v81 = vmul.f32 %v71, %v56
    %v82 = vmul.f32 %v74, %v56
    %v83 = vmul.f32 %v77, %v56
    %v84 = vmul.f32 %v80, %v56
    %v85 = vadd.f32 %v81, 1e-05
    %v86 = vadd.f32 %v82, 1e-05
    %v87 = vadd.f32 %v83, 1e-05
    %v88 = vadd.f32 %v84, 1e-05
    %v89 = vrsqrt.pop %v85
    %v90 = vrsqrt.pop %v86
    %v91 = vrsqrt.pop %v87
    %v92 = vrsqrt.pop %v88
    %v93 = vmul.f32 %v61, %v89
    %v94 = vmul.f32 %v62, %v90
    %v95 = vmul.f32 %v63, %v91
    %v96 = vmul.f32 %v64, %v92
    %v97 = vmul.f32 %v93, %v41
    %v98 = vmul.f32 %v94, %v41
    %v99 = vmul.f32 %v95, %v41
    %v100 = vmul.f32 %v96, %v41
    %v101 = vadd.f32 %v97, %v42
    %v102 = vadd.f32 %v98, %v42
    %v103 = vadd.f32 %v99, %v42
    %v104 = vadd.f32 %v100, %v42
    %v105 = vpack.c.bf16 %v102, %v101
    %v106 = vpack.c.bf16 %v104, %v103
    %v107 = vld [vmem:[%s3] sm:$0xf]
    %v108 = vld [vmem:[%s3 + $0x4] sm:$0xf]
    %v109 = vld [vmem:[%s3 + $0x8] sm:$0xf]
    %v110 = vld [vmem:[%s3 + $0xc] sm:$0xf]
    %v111 = vld [vmem:[%s3 + $0x10] sm:$0xf]
    %v112 = vld [vmem:[%s3 + $0x14] sm:$0xf]
    %v113 = vld [vmem:[%s2 + $0x2] ss:$0 sm:$0xff]
    %v120 = vunpack.c.l.b16 %v107
    %v121 = vunpack.c.l.b16 %v108
    %v122 = vunpack.c.l.b16 %v109
    %v123 = vunpack.c.l.b16 %v110
    %v124 = vunpack.c.l.b16 %v111
    %v125 = vunpack.c.l.b16 %v112
    %v126 = vpack.c.b16 %v121, %v120
    %v127 = vpack.c.b16 %v123, %v122
    %v128 = vpack.c.b16 %v125, %v124
    %v133 = vsel %vm43, %v105, 0
    %v136 = vsel %vm43, %v106, 0
    %138 = vmatprep.subr.bf16.mxu0 0
    %139 = vmatpush1.bf16.msra.mxu0 0
    %140 = vmatprep.subr.bf16.mxu0 0
    %141 = vmatpush1.bf16.msra.mxu0 0
    %142 = vmatprep.subr.bf16.mxu0 0
    %143 = vmatpush1.bf16.msra.mxu0 0
    %144 = vmatprep.subr.bf16.mxu0 0
    %145 = vmatpush1.bf16.msra.mxu0 0
    %146 = vmatprep.subr.bf16.mxu0 0
    %147 = vmatpush1.bf16.msra.mxu0 0
    %148 = vmatprep.subr.bf16.mxu0 0
    %149 = vmatpush1.bf16.msra.mxu0 %v128
    %150 = vmatprep.subr.bf16.mxu0 0
    %151 = vmatpush1.bf16.msra.mxu0 %v127
    %152 = vmatprep.subr.bf16.mxu0 0
    %153 = vmatpush1.bf16.msra.mxu0 %v126
    %154 = vmatprep.subr.bf16.mxu0 0
    %155 = vmatpush2.bf16.msra.mxu0 0
    %156 = vmatprep.subr.bf16.mxu0 0
    %157 = vmatpush2.bf16.msra.mxu0 0
    %158 = vmatprep.subr.bf16.mxu0 0
    %159 = vmatpush2.bf16.msra.mxu0 0
    %160 = vmatprep.subr.bf16.mxu0 0
    %161 = vmatpush2.bf16.msra.mxu0 0
    %162 = vmatprep.subr.bf16.mxu0 0
    %163 = vmatpush2.bf16.msra.mxu0 0
    %164 = vmatprep.subr.bf16.mxu0 0
    %165 = vmatpush2.bf16.msra.mxu0 0
    %166 = vmatprep.subr.bf16.mxu0 0
    %167 = vmatpush2.bf16.msra.mxu0 0
    %168 = vmatprep.subr.bf16.mxu0 0
    %169 = vmatpush2.bf16.msra.mxu0 0
    %170 = vmatprep.mubr.bf16.mxu0 0
    %171 = vmatmul.mubr.bf16.gmra.mxu0 %v133
    %v172 = vpop.f32.mrf.mxu0
    %v173 = vadd.f32 %v113, %v172
    %v174 = vpop.f32.mrf.mxu0
    %v175 = vpop.f32.mrf.mxu0
    %v176 = vadd.f32 %v113, %v175
    %v177 = vpop.f32.mrf.mxu0
    %178 = vmatprep.mubr.bf16.mxu0 0
    %179 = vmatmul.mubr.bf16.gmra.mxu0 %v136
    %v180 = vpop.f32.mrf.mxu0
    %v181 = vadd.f32 %v113, %v180
    %v182 = vpop.f32.mrf.mxu0
    %v183 = vpop.f32.mrf.mxu0
    %v184 = vadd.f32 %v113, %v183
    %v185 = vpop.f32.mrf.mxu0
    %186 = vdwg.mxu0
    %v187 = vld [vmem:[%s2 + $0x3] ss:$0 sm:$0xff]
    %v188 = vld [vmem:[%s2 + $0x4] ss:$0 sm:$0xff]
    %vm189 = vcmask 523264
    %v190 = vsel %vm189, %v173, 0.0
    %191 = vadd.xlane.f32.xlu0 %v190
    %v192 = vpop.xlane.xlu0 %191
    %v193 = vsel %vm189, %v176, 0.0
    %194 = vadd.xlane.f32.xlu0 %v193
    %v195 = vpop.xlane.xlu0 %194
    %v196 = vsel %vm189, %v181, 0.0
    %197 = vadd.xlane.f32.xlu0 %v196
    %v198 = vpop.xlane.xlu0 %197
    %v199 = vsel %vm189, %v184, 0.0
    %200 = vadd.xlane.f32.xlu0 %v199
    %v201 = vpop.xlane.xlu0 %200
    %v202 = vrcp.pop 64.0
    %v203 = vmul.f32 %v192, %v202
    %v204 = vmul.f32 %v195, %v202
    %v205 = vmul.f32 %v198, %v202
    %v206 = vmul.f32 %v201, %v202
    %v207 = vsub.f32 %v173, %v203
    %v208 = vsub.f32 %v176, %v204
    %v209 = vsub.f32 %v181, %v205
    %v210 = vsub.f32 %v184, %v206
    %v211 = vmul.f32 %v207, %v207
    %v212 = vmul.f32 %v208, %v208
    %v213 = vmul.f32 %v209, %v209
    %v214 = vmul.f32 %v210, %v210
    %v215 = vsel %vm189, %v211, 0.0
    %216 = vadd.xlane.f32.xlu0 %v215
    %v217 = vpop.xlane.xlu0 %216
    %v218 = vsel %vm189, %v212, 0.0
    %219 = vadd.xlane.f32.xlu0 %v218
    %v220 = vpop.xlane.xlu0 %219
    %v221 = vsel %vm189, %v213, 0.0
    %222 = vadd.xlane.f32.xlu0 %v221
    %v223 = vpop.xlane.xlu0 %222
    %v224 = vsel %vm189, %v214, 0.0
    %225 = vadd.xlane.f32.xlu0 %v224
    %v226 = vpop.xlane.xlu0 %225
    %v227 = vmul.f32 %v217, %v202
    %v228 = vmul.f32 %v220, %v202
    %v229 = vmul.f32 %v223, %v202
    %v230 = vmul.f32 %v226, %v202
    %v231 = vadd.f32 %v227, 1e-05
    %v232 = vadd.f32 %v228, 1e-05
    %v233 = vadd.f32 %v229, 1e-05
    %v234 = vadd.f32 %v230, 1e-05
    %v235 = vrsqrt.pop %v231
    %v236 = vrsqrt.pop %v232
    %v237 = vrsqrt.pop %v233
    %v238 = vrsqrt.pop %v234
    %v239 = vmul.f32 %v207, %v235
    %v240 = vmul.f32 %v208, %v236
    %v241 = vmul.f32 %v209, %v237
    %v242 = vmul.f32 %v210, %v238
    %v243 = vmul.f32 %v239, %v187
    %v244 = vmul.f32 %v240, %v187
    %v245 = vmul.f32 %v241, %v187
    %v246 = vmul.f32 %v242, %v187
    %v247 = vadd.f32 %v243, %v188
    %v248 = vadd.f32 %v244, %v188
    %v249 = vadd.f32 %v245, %v188
    %v250 = vadd.f32 %v246, %v188
    %v251 = vld [vmem:[%s1] sm:$0xff]
    %v252 = vld [vmem:[%s1 + $0x8] sm:$0xff]
    %v253 = vld [vmem:[%s1 + $0x10] sm:$0xff]
    %v254 = vld [vmem:[%s1 + $0x18] sm:$0xff]
    %v255 = vadd.f32 %v247, %v251
    %v256 = vadd.f32 %v248, %v252
    %v257 = vadd.f32 %v249, %v253
    %v258 = vadd.f32 %v250, %v254
    %v259 = vpack.c.bf16 %v256, %v255
    %v260 = vpack.c.bf16 %v258, %v257
    %v261 = vld [vmem:[%s4] sm:$0xff]
    %v262 = vld [vmem:[%s4 + $0x8] sm:$0xff]
    %v263 = vld [vmem:[%s4 + $0x10] sm:$0xff]
    %v264 = vld [vmem:[%s4 + $0x18] sm:$0xff]
    %v265 = vld [vmem:[%s4 + $0x20] sm:$0xff]
    %v266 = vld [vmem:[%s4 + $0x28] sm:$0xff]
    %v267 = vld [vmem:[%s4 + $0x30] sm:$0xff]
    %v268 = vld [vmem:[%s4 + $0x38] sm:$0xff]
    %s269 = scalar_lea.vmem %s2, 5
    %v270 = vld [vmem:[%s269] ss:$8 sm:$0x3]
    %v272 = vlaneseq
    %v273 = vshrl.u32 %v272, 7
    %v274 = vsub.s32 0, %v273
    %v275 = vrot.slane %v270, %v274
    %v276 = vlaneseq
    %v277 = vshrl.u32 %v276, 7
    %v278 = vsub.s32 1, %v277
    %v279 = vrot.slane %v270, %v278
    %v290 = vunpack.c.l.b16 %v261
    %v291 = vunpack.c.h.b16 %v261
    %v292 = vunpack.c.l.b16 %v262
    %v293 = vunpack.c.h.b16 %v262
    %v294 = vunpack.c.l.b16 %v263
    %v295 = vunpack.c.h.b16 %v263
    %v296 = vunpack.c.l.b16 %v264
    %v297 = vunpack.c.h.b16 %v264
    %v298 = vunpack.c.l.b16 %v265
    %v299 = vunpack.c.h.b16 %v265
    %v300 = vunpack.c.l.b16 %v266
    %v301 = vunpack.c.h.b16 %v266
    %v302 = vunpack.c.l.b16 %v267
    %v303 = vunpack.c.h.b16 %v267
    %v304 = vunpack.c.l.b16 %v268
    %v305 = vunpack.c.h.b16 %v268
    %v306 = vpack.c.b16 %v292, %v290
    %v307 = vpack.c.b16 %v293, %v291
    %v308 = vpack.c.b16 %v296, %v294
    %v309 = vpack.c.b16 %v297, %v295
    %v310 = vpack.c.b16 %v300, %v298
    %v311 = vpack.c.b16 %v301, %v299
    %v312 = vpack.c.b16 %v304, %v302
    %v313 = vpack.c.b16 %v305, %v303
    %v323 = vsel %vm189, %v259, 0
    %v326 = vsel %vm189, %v260, 0
    %328 = vmatprep.subr.bf16.mxu0 0
    %329 = vmatpush1.bf16.msra.mxu0 0
    %330 = vmatprep.subr.bf16.mxu0 0
    %331 = vmatpush1.bf16.msra.mxu0 0
    %332 = vmatprep.subr.bf16.mxu0 0
    %333 = vmatpush1.bf16.msra.mxu0 0
    %334 = vmatprep.subr.bf16.mxu0 0
    %335 = vmatpush1.bf16.msra.mxu0 0
    %336 = vmatprep.subr.bf16.mxu0 %v313
    %337 = vmatpush1.bf16.msra.mxu0 %v312
    %338 = vmatprep.subr.bf16.mxu0 %v311
    %339 = vmatpush1.bf16.msra.mxu0 %v310
    %340 = vmatprep.subr.bf16.mxu0 %v309
    %341 = vmatpush1.bf16.msra.mxu0 %v308
    %342 = vmatprep.subr.bf16.mxu0 %v307
    %343 = vmatpush1.bf16.msra.mxu0 %v306
    %344 = vmatprep.subr.bf16.mxu0 0
    %345 = vmatpush2.bf16.msra.mxu0 0
    %346 = vmatprep.subr.bf16.mxu0 0
    %347 = vmatpush2.bf16.msra.mxu0 0
    %348 = vmatprep.subr.bf16.mxu0 0
    %349 = vmatpush2.bf16.msra.mxu0 0
    %350 = vmatprep.subr.bf16.mxu0 0
    %351 = vmatpush2.bf16.msra.mxu0 0
    %352 = vmatprep.subr.bf16.mxu0 0
    %353 = vmatpush2.bf16.msra.mxu0 0
    %354 = vmatprep.subr.bf16.mxu0 0
    %355 = vmatpush2.bf16.msra.mxu0 0
    %356 = vmatprep.subr.bf16.mxu0 0
    %357 = vmatpush2.bf16.msra.mxu0 0
    %358 = vmatprep.subr.bf16.mxu0 0
    %359 = vmatpush2.bf16.msra.mxu0 0
    %360 = vmatprep.mubr.bf16.mxu0 0
    %361 = vmatmul.mubr.bf16.gmra.mxu0 %v323
    %v362 = vpop.f32.mrf.mxu0
    %v363 = vadd.f32 %v275, %v362
    %v364 = vpop.f32.mrf.mxu0
    %v365 = vadd.f32 %v279, %v364
    %v366 = vpop.f32.mrf.mxu0
    %v367 = vadd.f32 %v275, %v366
    %v368 = vpop.f32.mrf.mxu0
    %v369 = vadd.f32 %v279, %v368
    %370 = vmatprep.mubr.bf16.mxu0 0
    %371 = vmatmul.mubr.bf16.gmra.mxu0 %v326
    %v372 = vpop.f32.mrf.mxu0
    %v373 = vadd.f32 %v275, %v372
    %v374 = vpop.f32.mrf.mxu0
    %v375 = vadd.f32 %v279, %v374
    %v376 = vpop.f32.mrf.mxu0
    %v377 = vadd.f32 %v275, %v376
    %v378 = vpop.f32.mrf.mxu0
    %v379 = vadd.f32 %v279, %v378
    %380 = vdwg.mxu0
    %v381 = vpack.c.bf16 %v367, %v363
    %v382 = vpack.c.bf16 %v377, %v373
    %v383 = vpack.c.bf16 %v369, %v365
    %v384 = vpack.c.bf16 %v379, %v375
    %386 = vrot.lane.b32.xlu0 %v381, 64
    %v387 = vpop.permute.xlu0 %386
    %vm388 = vcmask 261120
    %v390 = vsel %vm388, %v381, 0
    %v393 = vsel %vm388, %v387, 0
    %395 = vmatprep.subr.bf16.mxu0 0
    %396 = vmatpush1.bf16.xpose.msra.mxu0 0
    %397 = vmatprep.subr.bf16.mxu0 0
    %398 = vmatpush1.bf16.xpose.msra.mxu0 0
    %399 = vmatprep.subr.bf16.mxu0 0
    %400 = vmatpush1.bf16.xpose.msra.mxu0 0
    %401 = vmatprep.subr.bf16.mxu0 0
    %402 = vmatpush1.bf16.xpose.msra.mxu0 0
    %403 = vmatprep.subr.bf16.mxu0 0
    %404 = vmatpush1.bf16.xpose.msra.mxu0 0
    %405 = vmatprep.subr.bf16.mxu0 0
    %406 = vmatpush1.bf16.xpose.msra.mxu0 0
    %407 = vmatprep.subr.bf16.mxu0 0
    %408 = vmatpush1.bf16.xpose.msra.mxu0 0
    %409 = vmatprep.subr.bf16.mxu0 0
    %410 = vmatpush1.bf16.xpose.msra.mxu0 %v393
    %411 = vmatprep.subr.bf16.mxu0 0
    %412 = vmatpush2.bf16.xpose.msra.mxu0 0
    %413 = vmatprep.subr.bf16.mxu0 0
    %414 = vmatpush2.bf16.xpose.msra.mxu0 0
    %415 = vmatprep.subr.bf16.mxu0 0
    %416 = vmatpush2.bf16.xpose.msra.mxu0 0
    %417 = vmatprep.subr.bf16.mxu0 0
    %418 = vmatpush2.bf16.xpose.msra.mxu0 0
    %419 = vmatprep.subr.bf16.mxu0 0
    %420 = vmatpush2.bf16.xpose.msra.mxu0 0
    %421 = vmatprep.subr.bf16.mxu0 0
    %422 = vmatpush2.bf16.xpose.msra.mxu0 0
    %423 = vmatprep.subr.bf16.mxu0 0
    %424 = vmatpush2.bf16.xpose.msra.mxu0 0
    %425 = vmatprep.subr.bf16.mxu0 0
    %426 = vmatpush2.bf16.xpose.msra.mxu0 0
    %427 = vmatprep.mubr.bf16.mxu0 0
    %428 = vmatmul.mubr.bf16.gmra.mxu0 %v390
    %v429 = vpop.f32.mrf.mxu0
    %v430 = vadd.f32 0.0, %v429
    %v431 = vpop.f32.mrf.mxu0
    %v432 = vpop.f32.mrf.mxu0
    %v433 = vadd.f32 0.0, %v432
    %v434 = vpop.f32.mrf.mxu0
    %435 = vdwg.mxu0
    %437 = vrot.lane.b32.xlu0 %v382, 64
    %v438 = vpop.permute.xlu0 %437
    %v440 = vsel %vm388, %v382, 0
    %v443 = vsel %vm388, %v438, 0
    %445 = vmatprep.subr.bf16.mxu0 0
    %446 = vmatpush1.bf16.xpose.msra.mxu0 0
    %447 = vmatprep.subr.bf16.mxu0 0
    %448 = vmatpush1.bf16.xpose.msra.mxu0 0
    %449 = vmatprep.subr.bf16.mxu0 0
    %450 = vmatpush1.bf16.xpose.msra.mxu0 0
    %451 = vmatprep.subr.bf16.mxu0 0
    %452 = vmatpush1.bf16.xpose.msra.mxu0 0
    %453 = vmatprep.subr.bf16.mxu0 0
    %454 = vmatpush1.bf16.xpose.msra.mxu0 0
    %455 = vmatprep.subr.bf16.mxu0 0
    %456 = vmatpush1.bf16.xpose.msra.mxu0 0
    %457 = vmatprep.subr.bf16.mxu0 0
    %458 = vmatpush1.bf16.xpose.msra.mxu0 0
    %459 = vmatprep.subr.bf16.mxu0 0
    %460 = vmatpush1.bf16.xpose.msra.mxu0 %v443
    %461 = vmatprep.subr.bf16.mxu0 0
    %462 = vmatpush2.bf16.xpose.msra.mxu0 0
    %463 = vmatprep.subr.bf16.mxu0 0
    %464 = vmatpush2.bf16.xpose.msra.mxu0 0
    %465 = vmatprep.subr.bf16.mxu0 0
    %466 = vmatpush2.bf16.xpose.msra.mxu0 0
    %467 = vmatprep.subr.bf16.mxu0 0
    %468 = vmatpush2.bf16.xpose.msra.mxu0 0
    %469 = vmatprep.subr.bf16.mxu0 0
    %470 = vmatpush2.bf16.xpose.msra.mxu0 0
    %471 = vmatprep.subr.bf16.mxu0 0
    %472 = vmatpush2.bf16.xpose.msra.mxu0 0
    %473 = vmatprep.subr.bf16.mxu0 0
    %474 = vmatpush2.bf16.xpose.msra.mxu0 0
    %475 = vmatprep.subr.bf16.mxu0 0
    %476 = vmatpush2.bf16.xpose.msra.mxu0 0
    %477 = vmatprep.mubr.bf16.mxu0 0
    %478 = vmatmul.mubr.bf16.gmra.mxu0 %v440
    %v479 = vpop.f32.mrf.mxu0
    %v480 = vadd.f32 0.0, %v479
    %v481 = vpop.f32.mrf.mxu0
    %v482 = vpop.f32.mrf.mxu0
    %v483 = vadd.f32 0.0, %v482
    %v484 = vpop.f32.mrf.mxu0
    %485 = vdwg.mxu0
    %vm486 = vcmask 130048
    %v487 = vsel %vm486, %v430, -inf
    %488 = vmax.xlane.f32.xlu0 %v487
    %v489 = vpop.xlane.xlu0 %488
    %v490 = vsel %vm486, %v433, -inf
    %491 = vmax.xlane.f32.xlu0 %v490
    %v492 = vpop.xlane.xlu0 %491
    %v493 = vsel %vm486, %v480, -inf
    %494 = vmax.xlane.f32.xlu0 %v493
    %v495 = vpop.xlane.xlu0 %494
    %v496 = vsel %vm486, %v483, -inf
    %497 = vmax.xlane.f32.xlu0 %v496
    %v498 = vpop.xlane.xlu0 %497
    %v499 = vsub.f32 %v430, %v489
    %v500 = vsub.f32 %v433, %v492
    %v501 = vsub.f32 %v480, %v495
    %v502 = vsub.f32 %v483, %v498
    %v503 = vmul.f32 %v499, 1.442695
    %v504 = vpow.pop %v503
    %v505 = vmul.f32 %v500, 1.442695
    %v506 = vpow.pop %v505
    %v507 = vmul.f32 %v501, 1.442695
    %v508 = vpow.pop %v507
    %v509 = vmul.f32 %v502, 1.442695
    %v510 = vpow.pop %v509
    %v511 = vsel %vm486, %v504, 0.0
    %512 = vadd.xlane.f32.xlu0 %v511
    %v513 = vpop.xlane.xlu0 %512
    %v514 = vsel %vm486, %v506, 0.0
    %515 = vadd.xlane.f32.xlu0 %v514
    %v516 = vpop.xlane.xlu0 %515
    %v517 = vsel %vm486, %v508, 0.0
    %518 = vadd.xlane.f32.xlu0 %v517
    %v519 = vpop.xlane.xlu0 %518
    %v520 = vsel %vm486, %v510, 0.0
    %521 = vadd.xlane.f32.xlu0 %v520
    %v522 = vpop.xlane.xlu0 %521
    %v523 = vrcp.pop %v513
    %v524 = vrcp.pop %v516
    %v525 = vrcp.pop %v519
    %v526 = vrcp.pop %v522
    %v527 = vmul.f32 %v504, %v523
    %v528 = vmul.f32 %v506, %v524
    %v529 = vmul.f32 %v508, %v525
    %v530 = vmul.f32 %v510, %v526
    %v531 = vpack.c.bf16 %v528, %v527
    %v532 = vpack.c.bf16 %v530, %v529
    %v534 = vsel %vm486, %v531, 0
    %536 = vmatprep.subr.bf16.mxu0 0
    %537 = vmatpush1.bf16.msra.mxu0 0
    %538 = vmatprep.subr.bf16.mxu0 0
    %539 = vmatpush1.bf16.msra.mxu0 0
    %540 = vmatprep.subr.bf16.mxu0 0
    %541 = vmatpush1.bf16.msra.mxu0 0
    %542 = vmatprep.subr.bf16.mxu0 0
    %543 = vmatpush1.bf16.msra.mxu0 0
    %544 = vmatprep.subr.bf16.mxu0 0
    %545 = vmatpush1.bf16.msra.mxu0 0
    %546 = vmatprep.subr.bf16.mxu0 0
    %547 = vmatpush1.bf16.msra.mxu0 0
    %548 = vmatprep.subr.bf16.mxu0 0
    %549 = vmatpush1.bf16.msra.mxu0 0
    %550 = vmatprep.subr.bf16.mxu0 0
    %551 = vmatpush1.bf16.msra.mxu0 %v383
    %552 = vmatprep.subr.bf16.mxu0 0
    %553 = vmatpush2.bf16.msra.mxu0 0
    %554 = vmatprep.subr.bf16.mxu0 0
    %555 = vmatpush2.bf16.msra.mxu0 0
    %556 = vmatprep.subr.bf16.mxu0 0
    %557 = vmatpush2.bf16.msra.mxu0 0
    %558 = vmatprep.subr.bf16.mxu0 0
    %559 = vmatpush2.bf16.msra.mxu0 0
    %560 = vmatprep.subr.bf16.mxu0 0
    %561 = vmatpush2.bf16.msra.mxu0 0
    %562 = vmatprep.subr.bf16.mxu0 0
    %563 = vmatpush2.bf16.msra.mxu0 0
    %564 = vmatprep.subr.bf16.mxu0 0
    %565 = vmatpush2.bf16.msra.mxu0 0
    %566 = vmatprep.subr.bf16.mxu0 0
    %567 = vmatpush2.bf16.msra.mxu0 0
    %568 = vmatprep.mubr.bf16.mxu0 0
    %569 = vmatmul.mubr.bf16.gmra.mxu0 %v534
    %v570 = vpop.f32.mrf.mxu0
    %v571 = vadd.f32 0.0, %v570
    %v572 = vpop.f32.mrf.mxu0
    %v573 = vpop.f32.mrf.mxu0
    %v574 = vadd.f32 0.0, %v573
    %v575 = vpop.f32.mrf.mxu0
    %576 = vdwg.mxu0
    %v578 = vsel %vm486, %v532, 0
    %580 = vmatprep.subr.bf16.mxu0 0
    %581 = vmatpush1.bf16.msra.mxu0 0
    %582 = vmatprep.subr.bf16.mxu0 0
    %583 = vmatpush1.bf16.msra.mxu0 0
    %584 = vmatprep.subr.bf16.mxu0 0
    %585 = vmatpush1.bf16.msra.mxu0 0
    %586 = vmatprep.subr.bf16.mxu0 0
    %587 = vmatpush1.bf16.msra.mxu0 0
    %588 = vmatprep.subr.bf16.mxu0 0
    %589 = vmatpush1.bf16.msra.mxu0 0
    %590 = vmatprep.subr.bf16.mxu0 0
    %591 = vmatpush1.bf16.msra.mxu0 0
    %592 = vmatprep.subr.bf16.mxu0 0
    %593 = vmatpush1.bf16.msra.mxu0 0
    %594 = vmatprep.subr.bf16.mxu0 0
    %595 = vmatpush1.bf16.msra.mxu0 %v384
    %596 = vmatprep.subr.bf16.mxu0 0
    %597 = vmatpush2.bf16.msra.mxu0 0
    %598 = vmatprep.subr.bf16.mxu0 0
    %599 = vmatpush2.bf16.msra.mxu0 0
    %600 = vmatprep.subr.bf16.mxu0 0
    %601 = vmatpush2.bf16.msra.mxu0 0
    %602 = vmatprep.subr.bf16.mxu0 0
    %603 = vmatpush2.bf16.msra.mxu0 0
    %604 = vmatprep.subr.bf16.mxu0 0
    %605 = vmatpush2.bf16.msra.mxu0 0
    %606 = vmatprep.subr.bf16.mxu0 0
    %607 = vmatpush2.bf16.msra.mxu0 0
    %608 = vmatprep.subr.bf16.mxu0 0
    %609 = vmatpush2.bf16.msra.mxu0 0
    %610 = vmatprep.subr.bf16.mxu0 0
    %611 = vmatpush2.bf16.msra.mxu0 0
    %612 = vmatprep.mubr.bf16.mxu0 0
    %613 = vmatmul.mubr.bf16.gmra.mxu0 %v578
    %v614 = vpop.f32.mrf.mxu0
    %v615 = vadd.f32 0.0, %v614
    %v616 = vpop.f32.mrf.mxu0
    %v617 = vpop.f32.mrf.mxu0
    %v618 = vadd.f32 0.0, %v617
    %v619 = vpop.f32.mrf.mxu0
    %620 = vdwg.mxu0
    %621 = vrot.lane.b32.xlu0 %v381, 96
    %v622 = vpop.permute.xlu0 %621
    %623 = vrot.lane.b32.xlu0 %v381, 32
    %v624 = vpop.permute.xlu0 %623
    %v626 = vsel %vm388, %v622, 0
    %v629 = vsel %vm388, %v624, 0
    %631 = vmatprep.subr.bf16.mxu0 0
    %632 = vmatpush1.bf16.xpose.msra.mxu0 0
    %633 = vmatprep.subr.bf16.mxu0 0
    %634 = vmatpush1.bf16.xpose.msra.mxu0 0
    %635 = vmatprep.subr.bf16.mxu0 0
    %636 = vmatpush1.bf16.xpose.msra.mxu0 0
    %637 = vmatprep.subr.bf16.mxu0 0
    %638 = vmatpush1.bf16.xpose.msra.mxu0 0
    %639 = vmatprep.subr.bf16.mxu0 0
    %640 = vmatpush1.bf16.xpose.msra.mxu0 0
    %641 = vmatprep.subr.bf16.mxu0 0
    %642 = vmatpush1.bf16.xpose.msra.mxu0 0
    %643 = vmatprep.subr.bf16.mxu0 0
    %644 = vmatpush1.bf16.xpose.msra.mxu0 0
    %645 = vmatprep.subr.bf16.mxu0 0
    %646 = vmatpush1.bf16.xpose.msra.mxu0 %v629
    %647 = vmatprep.subr.bf16.mxu0 0
    %648 = vmatpush2.bf16.xpose.msra.mxu0 0
    %649 = vmatprep.subr.bf16.mxu0 0
    %650 = vmatpush2.bf16.xpose.msra.mxu0 0
    %651 = vmatprep.subr.bf16.mxu0 0
    %652 = vmatpush2.bf16.xpose.msra.mxu0 0
    %653 = vmatprep.subr.bf16.mxu0 0
    %654 = vmatpush2.bf16.xpose.msra.mxu0 0
    %655 = vmatprep.subr.bf16.mxu0 0
    %656 = vmatpush2.bf16.xpose.msra.mxu0 0
    %657 = vmatprep.subr.bf16.mxu0 0
    %658 = vmatpush2.bf16.xpose.msra.mxu0 0
    %659 = vmatprep.subr.bf16.mxu0 0
    %660 = vmatpush2.bf16.xpose.msra.mxu0 0
    %661 = vmatprep.subr.bf16.mxu0 0
    %662 = vmatpush2.bf16.xpose.msra.mxu0 0
    %663 = vmatprep.mubr.bf16.mxu0 0
    %664 = vmatmul.mubr.bf16.gmra.mxu0 %v626
    %v665 = vpop.f32.mrf.mxu0
    %v666 = vadd.f32 0.0, %v665
    %v667 = vpop.f32.mrf.mxu0
    %v668 = vpop.f32.mrf.mxu0
    %v669 = vadd.f32 0.0, %v668
    %v670 = vpop.f32.mrf.mxu0
    %671 = vdwg.mxu0
    %672 = vrot.lane.b32.xlu0 %v382, 96
    %v673 = vpop.permute.xlu0 %672
    %674 = vrot.lane.b32.xlu0 %v382, 32
    %v675 = vpop.permute.xlu0 %674
    %v677 = vsel %vm388, %v673, 0
    %v680 = vsel %vm388, %v675, 0
    %682 = vmatprep.subr.bf16.mxu0 0
    %683 = vmatpush1.bf16.xpose.msra.mxu0 0
    %684 = vmatprep.subr.bf16.mxu0 0
    %685 = vmatpush1.bf16.xpose.msra.mxu0 0
    %686 = vmatprep.subr.bf16.mxu0 0
    %687 = vmatpush1.bf16.xpose.msra.mxu0 0
    %688 = vmatprep.subr.bf16.mxu0 0
    %689 = vmatpush1.bf16.xpose.msra.mxu0 0
    %690 = vmatprep.subr.bf16.mxu0 0
    %691 = vmatpush1.bf16.xpose.msra.mxu0 0
    %692 = vmatprep.subr.bf16.mxu0 0
    %693 = vmatpush1.bf16.xpose.msra.mxu0 0
    %694 = vmatprep.subr.bf16.mxu0 0
    %695 = vmatpush1.bf16.xpose.msra.mxu0 0
    %696 = vmatprep.subr.bf16.mxu0 0
    %697 = vmatpush1.bf16.xpose.msra.mxu0 %v680
    %698 = vmatprep.subr.bf16.mxu0 0
    %699 = vmatpush2.bf16.xpose.msra.mxu0 0
    %700 = vmatprep.subr.bf16.mxu0 0
    %701 = vmatpush2.bf16.xpose.msra.mxu0 0
    %702 = vmatprep.subr.bf16.mxu0 0
    %703 = vmatpush2.bf16.xpose.msra.mxu0 0
    %704 = vmatprep.subr.bf16.mxu0 0
    %705 = vmatpush2.bf16.xpose.msra.mxu0 0
    %706 = vmatprep.subr.bf16.mxu0 0
    %707 = vmatpush2.bf16.xpose.msra.mxu0 0
    %708 = vmatprep.subr.bf16.mxu0 0
    %709 = vmatpush2.bf16.xpose.msra.mxu0 0
    %710 = vmatprep.subr.bf16.mxu0 0
    %711 = vmatpush2.bf16.xpose.msra.mxu0 0
    %712 = vmatprep.subr.bf16.mxu0 0
    %713 = vmatpush2.bf16.xpose.msra.mxu0 0
    %714 = vmatprep.mubr.bf16.mxu0 0
    %715 = vmatmul.mubr.bf16.gmra.mxu0 %v677
    %v716 = vpop.f32.mrf.mxu0
    %v717 = vadd.f32 0.0, %v716
    %v718 = vpop.f32.mrf.mxu0
    %v719 = vpop.f32.mrf.mxu0
    %v720 = vadd.f32 0.0, %v719
    %v721 = vpop.f32.mrf.mxu0
    %722 = vdwg.mxu0
    %v723 = vsel %vm486, %v666, -inf
    %724 = vmax.xlane.f32.xlu0 %v723
    %v725 = vpop.xlane.xlu0 %724
    %v726 = vsel %vm486, %v669, -inf
    %727 = vmax.xlane.f32.xlu0 %v726
    %v728 = vpop.xlane.xlu0 %727
    %v729 = vsel %vm486, %v717, -inf
    %730 = vmax.xlane.f32.xlu0 %v729
    %v731 = vpop.xlane.xlu0 %730
    %v732 = vsel %vm486, %v720, -inf
    %733 = vmax.xlane.f32.xlu0 %v732
    %v734 = vpop.xlane.xlu0 %733
    %v735 = vsub.f32 %v666, %v725
    %v736 = vsub.f32 %v669, %v728
    %v737 = vsub.f32 %v717, %v731
    %v738 = vsub.f32 %v720, %v734
    %v739 = vmul.f32 %v735, 1.442695
    %v740 = vpow.pop %v739
    %v741 = vmul.f32 %v736, 1.442695
    %v742 = vpow.pop %v741
    %v743 = vmul.f32 %v737, 1.442695
    %v744 = vpow.pop %v743
    %v745 = vmul.f32 %v738, 1.442695
    %v746 = vpow.pop %v745
    %v747 = vsel %vm486, %v740, 0.0
    %748 = vadd.xlane.f32.xlu0 %v747
    %v749 = vpop.xlane.xlu0 %748
    %v750 = vsel %vm486, %v742, 0.0
    %751 = vadd.xlane.f32.xlu0 %v750
    %v752 = vpop.xlane.xlu0 %751
    %v753 = vsel %vm486, %v744, 0.0
    %754 = vadd.xlane.f32.xlu0 %v753
    %v755 = vpop.xlane.xlu0 %754
    %v756 = vsel %vm486, %v746, 0.0
    %757 = vadd.xlane.f32.xlu0 %v756
    %v758 = vpop.xlane.xlu0 %757
    %v759 = vrcp.pop %v749
    %v760 = vrcp.pop %v752
    %v761 = vrcp.pop %v755
    %v762 = vrcp.pop %v758
    %v763 = vmul.f32 %v740, %v759
    %v764 = vmul.f32 %v742, %v760
    %v765 = vmul.f32 %v744, %v761
    %v766 = vmul.f32 %v746, %v762
    %v767 = vpack.c.bf16 %v764, %v763
    %v768 = vpack.c.bf16 %v766, %v765
    %770 = vrot.lane.b32.xlu0 %v383, 96
    %v771 = vpop.permute.xlu0 %770
    %v774 = vsel %vm486, %v767, 0
    %776 = vmatprep.subr.bf16.mxu0 0
    %777 = vmatpush1.bf16.msra.mxu0 0
    %778 = vmatprep.subr.bf16.mxu0 0
    %779 = vmatpush1.bf16.msra.mxu0 0
    %780 = vmatprep.subr.bf16.mxu0 0
    %781 = vmatpush1.bf16.msra.mxu0 0
    %782 = vmatprep.subr.bf16.mxu0 0
    %783 = vmatpush1.bf16.msra.mxu0 0
    %784 = vmatprep.subr.bf16.mxu0 0
    %785 = vmatpush1.bf16.msra.mxu0 0
    %786 = vmatprep.subr.bf16.mxu0 0
    %787 = vmatpush1.bf16.msra.mxu0 0
    %788 = vmatprep.subr.bf16.mxu0 0
    %789 = vmatpush1.bf16.msra.mxu0 0
    %790 = vmatprep.subr.bf16.mxu0 0
    %791 = vmatpush1.bf16.msra.mxu0 %v771
    %792 = vmatprep.subr.bf16.mxu0 0
    %793 = vmatpush2.bf16.msra.mxu0 0
    %794 = vmatprep.subr.bf16.mxu0 0
    %795 = vmatpush2.bf16.msra.mxu0 0
    %796 = vmatprep.subr.bf16.mxu0 0
    %797 = vmatpush2.bf16.msra.mxu0 0
    %798 = vmatprep.subr.bf16.mxu0 0
    %799 = vmatpush2.bf16.msra.mxu0 0
    %800 = vmatprep.subr.bf16.mxu0 0
    %801 = vmatpush2.bf16.msra.mxu0 0
    %802 = vmatprep.subr.bf16.mxu0 0
    %803 = vmatpush2.bf16.msra.mxu0 0
    %804 = vmatprep.subr.bf16.mxu0 0
    %805 = vmatpush2.bf16.msra.mxu0 0
    %806 = vmatprep.subr.bf16.mxu0 0
    %807 = vmatpush2.bf16.msra.mxu0 0
    %808 = vmatprep.mubr.bf16.mxu0 0
    %809 = vmatmul.mubr.bf16.gmra.mxu0 %v774
    %v810 = vpop.f32.mrf.mxu0
    %v811 = vadd.f32 0.0, %v810
    %v812 = vpop.f32.mrf.mxu0
    %v813 = vpop.f32.mrf.mxu0
    %v814 = vadd.f32 0.0, %v813
    %v815 = vpop.f32.mrf.mxu0
    %816 = vdwg.mxu0
    %818 = vrot.lane.b32.xlu0 %v384, 96
    %v819 = vpop.permute.xlu0 %818
    %v822 = vsel %vm486, %v768, 0
    %824 = vmatprep.subr.bf16.mxu0 0
    %825 = vmatpush1.bf16.msra.mxu0 0
    %826 = vmatprep.subr.bf16.mxu0 0
    %827 = vmatpush1.bf16.msra.mxu0 0
    %828 = vmatprep.subr.bf16.mxu0 0
    %829 = vmatpush1.bf16.msra.mxu0 0
    %830 = vmatprep.subr.bf16.mxu0 0
    %831 = vmatpush1.bf16.msra.mxu0 0
    %832 = vmatprep.subr.bf16.mxu0 0
    %833 = vmatpush1.bf16.msra.mxu0 0
    %834 = vmatprep.subr.bf16.mxu0 0
    %835 = vmatpush1.bf16.msra.mxu0 0
    %836 = vmatprep.subr.bf16.mxu0 0
    %837 = vmatpush1.bf16.msra.mxu0 0
    %838 = vmatprep.subr.bf16.mxu0 0
    %839 = vmatpush1.bf16.msra.mxu0 %v819
    %840 = vmatprep.subr.bf16.mxu0 0
    %841 = vmatpush2.bf16.msra.mxu0 0
    %842 = vmatprep.subr.bf16.mxu0 0
    %843 = vmatpush2.bf16.msra.mxu0 0
    %844 = vmatprep.subr.bf16.mxu0 0
    %845 = vmatpush2.bf16.msra.mxu0 0
    %846 = vmatprep.subr.bf16.mxu0 0
    %847 = vmatpush2.bf16.msra.mxu0 0
    %848 = vmatprep.subr.bf16.mxu0 0
    %849 = vmatpush2.bf16.msra.mxu0 0
    %850 = vmatprep.subr.bf16.mxu0 0
    %851 = vmatpush2.bf16.msra.mxu0 0
    %852 = vmatprep.subr.bf16.mxu0 0
    %853 = vmatpush2.bf16.msra.mxu0 0
    %854 = vmatprep.subr.bf16.mxu0 0
    %855 = vmatpush2.bf16.msra.mxu0 0
    %856 = vmatprep.mubr.bf16.mxu0 0
    %857 = vmatmul.mubr.bf16.gmra.mxu0 %v822
    %v858 = vpop.f32.mrf.mxu0
    %v859 = vadd.f32 0.0, %v858
    %v860 = vpop.f32.mrf.mxu0
    %v861 = vpop.f32.mrf.mxu0
    %v862 = vadd.f32 0.0, %v861
    %v863 = vpop.f32.mrf.mxu0
    %864 = vdwg.mxu0
    %869 = vrot.lane.b32.xlu0 %v811, 32
    %v870 = vpop.permute.xlu0 %869
    %871 = vrot.lane.b32.xlu0 %v814, 32
    %v872 = vpop.permute.xlu0 %871
    %873 = vrot.lane.b32.xlu0 %v859, 32
    %v874 = vpop.permute.xlu0 %873
    %875 = vrot.lane.b32.xlu0 %v862, 32
    %v876 = vpop.permute.xlu0 %875
    %v881 = vsel %vm388, %v571, %v870
    %v882 = vsel %vm388, %v574, %v872
    %v883 = vsel %vm388, %v615, %v874
    %v884 = vsel %vm388, %v618, %v876
    %v885 = vpack.c.bf16 %v882, %v881
    %v886 = vpack.c.bf16 %v884, %v883
    %v887 = vld [vmem:[%s5] sm:$0xf]
    %v888 = vld [vmem:[%s5 + $0x4] sm:$0xf]
    %v889 = vld [vmem:[%s5 + $0x8] sm:$0xf]
    %v890 = vld [vmem:[%s5 + $0xc] sm:$0xf]
    %v891 = vld [vmem:[%s5 + $0x10] sm:$0xf]
    %v892 = vld [vmem:[%s5 + $0x14] sm:$0xf]
    %v893 = vld [vmem:[%s5 + $0x18] sm:$0xf]
    %v894 = vld [vmem:[%s5 + $0x1c] sm:$0xf]
    %v895 = vld [vmem:[%s2 + $0x6] ss:$0 sm:$0xff]
    %v904 = vunpack.c.l.b16 %v887
    %v905 = vunpack.c.l.b16 %v888
    %v906 = vunpack.c.l.b16 %v889
    %v907 = vunpack.c.l.b16 %v890
    %v908 = vunpack.c.l.b16 %v891
    %v909 = vunpack.c.l.b16 %v892
    %v910 = vunpack.c.l.b16 %v893
    %v911 = vunpack.c.l.b16 %v894
    %v912 = vpack.c.b16 %v905, %v904
    %v913 = vpack.c.b16 %v907, %v906
    %v914 = vpack.c.b16 %v909, %v908
    %v915 = vpack.c.b16 %v911, %v910
    %v921 = vsel %vm189, %v885, 0
    %v924 = vsel %vm189, %v886, 0
    %926 = vmatprep.subr.bf16.mxu0 0
    %927 = vmatpush1.bf16.msra.mxu0 0
    %928 = vmatprep.subr.bf16.mxu0 0
    %929 = vmatpush1.bf16.msra.mxu0 0
    %930 = vmatprep.subr.bf16.mxu0 0
    %931 = vmatpush1.bf16.msra.mxu0 0
    %932 = vmatprep.subr.bf16.mxu0 0
    %933 = vmatpush1.bf16.msra.mxu0 0
    %934 = vmatprep.subr.bf16.mxu0 0
    %935 = vmatpush1.bf16.msra.mxu0 %v915
    %936 = vmatprep.subr.bf16.mxu0 0
    %937 = vmatpush1.bf16.msra.mxu0 %v914
    %938 = vmatprep.subr.bf16.mxu0 0
    %939 = vmatpush1.bf16.msra.mxu0 %v913
    %940 = vmatprep.subr.bf16.mxu0 0
    %941 = vmatpush1.bf16.msra.mxu0 %v912
    %942 = vmatprep.subr.bf16.mxu0 0
    %943 = vmatpush2.bf16.msra.mxu0 0
    %944 = vmatprep.subr.bf16.mxu0 0
    %945 = vmatpush2.bf16.msra.mxu0 0
    %946 = vmatprep.subr.bf16.mxu0 0
    %947 = vmatpush2.bf16.msra.mxu0 0
    %948 = vmatprep.subr.bf16.mxu0 0
    %949 = vmatpush2.bf16.msra.mxu0 0
    %950 = vmatprep.subr.bf16.mxu0 0
    %951 = vmatpush2.bf16.msra.mxu0 0
    %952 = vmatprep.subr.bf16.mxu0 0
    %953 = vmatpush2.bf16.msra.mxu0 0
    %954 = vmatprep.subr.bf16.mxu0 0
    %955 = vmatpush2.bf16.msra.mxu0 0
    %956 = vmatprep.subr.bf16.mxu0 0
    %957 = vmatpush2.bf16.msra.mxu0 0
    %958 = vmatprep.mubr.bf16.mxu0 0
    %959 = vmatmul.mubr.bf16.gmra.mxu0 %v921
    %v960 = vpop.f32.mrf.mxu0
    %v961 = vadd.f32 %v895, %v960
    %v962 = vpop.f32.mrf.mxu0
    %v963 = vpop.f32.mrf.mxu0
    %v964 = vadd.f32 %v895, %v963
    %v965 = vpop.f32.mrf.mxu0
    %966 = vmatprep.mubr.bf16.mxu0 0
    %967 = vmatmul.mubr.bf16.gmra.mxu0 %v924
    %v968 = vpop.f32.mrf.mxu0
    %v969 = vadd.f32 %v895, %v968
    %v970 = vpop.f32.mrf.mxu0
    %v971 = vpop.f32.mrf.mxu0
    %v972 = vadd.f32 %v895, %v971
    %v973 = vpop.f32.mrf.mxu0
    %974 = vdwg.mxu0
    %v975 = vadd.f32 %v255, %v961
    %v976 = vadd.f32 %v256, %v964
    %v977 = vadd.f32 %v257, %v969
    %v978 = vadd.f32 %v258, %v972
    %v979 = vld [vmem:[%s2 + $0x7] ss:$0 sm:$0xff]
    %v980 = vld [vmem:[%s2 + $0x10] ss:$0 sm:$0xff]
    %v981 = vsel %vm189, %v975, 0.0
    %982 = vadd.xlane.f32.xlu0 %v981
    %v983 = vpop.xlane.xlu0 %982
    %v984 = vsel %vm189, %v976, 0.0
    %985 = vadd.xlane.f32.xlu0 %v984
    %v986 = vpop.xlane.xlu0 %985
    %v987 = vsel %vm189, %v977, 0.0
    %988 = vadd.xlane.f32.xlu0 %v987
    %v989 = vpop.xlane.xlu0 %988
    %v990 = vsel %vm189, %v978, 0.0
    %991 = vadd.xlane.f32.xlu0 %v990
    %v992 = vpop.xlane.xlu0 %991
    %v993 = vmul.f32 %v983, %v202
    %v994 = vmul.f32 %v986, %v202
    %v995 = vmul.f32 %v989, %v202
    %v996 = vmul.f32 %v992, %v202
    %v997 = vsub.f32 %v975, %v993
    %v998 = vsub.f32 %v976, %v994
    %v999 = vsub.f32 %v977, %v995
    %v1000 = vsub.f32 %v978, %v996
    %v1001 = vmul.f32 %v997, %v997
    %v1002 = vmul.f32 %v998, %v998
    %v1003 = vmul.f32 %v999, %v999
    %v1004 = vmul.f32 %v1000, %v1000
    %v1005 = vsel %vm189, %v1001, 0.0
    %1006 = vadd.xlane.f32.xlu0 %v1005
    %v1007 = vpop.xlane.xlu0 %1006
    %v1008 = vsel %vm189, %v1002, 0.0
    %1009 = vadd.xlane.f32.xlu0 %v1008
    %v1010 = vpop.xlane.xlu0 %1009
    %v1011 = vsel %vm189, %v1003, 0.0
    %1012 = vadd.xlane.f32.xlu0 %v1011
    %v1013 = vpop.xlane.xlu0 %1012
    %v1014 = vsel %vm189, %v1004, 0.0
    %1015 = vadd.xlane.f32.xlu0 %v1014
    %v1016 = vpop.xlane.xlu0 %1015
    %v1017 = vmul.f32 %v1007, %v202
    %v1018 = vmul.f32 %v1010, %v202
    %v1019 = vmul.f32 %v1013, %v202
    %v1020 = vmul.f32 %v1016, %v202
    %v1021 = vadd.f32 %v1017, 1e-05
    %v1022 = vadd.f32 %v1018, 1e-05
    %v1023 = vadd.f32 %v1019, 1e-05
    %v1024 = vadd.f32 %v1020, 1e-05
    %v1025 = vrsqrt.pop %v1021
    %v1026 = vrsqrt.pop %v1022
    %v1027 = vrsqrt.pop %v1023
    %v1028 = vrsqrt.pop %v1024
    %v1029 = vmul.f32 %v997, %v1025
    %v1030 = vmul.f32 %v998, %v1026
    %v1031 = vmul.f32 %v999, %v1027
    %v1032 = vmul.f32 %v1000, %v1028
    %v1033 = vmul.f32 %v1029, %v979
    %v1034 = vmul.f32 %v1030, %v979
    %v1035 = vmul.f32 %v1031, %v979
    %v1036 = vmul.f32 %v1032, %v979
    %v1037 = vadd.f32 %v1033, %v980
    %v1038 = vadd.f32 %v1034, %v980
    %v1039 = vadd.f32 %v1035, %v980
    %v1040 = vadd.f32 %v1036, %v980
    %v1041 = vpack.c.bf16 %v1038, %v1037
    %v1042 = vpack.c.bf16 %v1040, %v1039
    %v1043 = vld [vmem:[%s6] sm:$0xff]
    %v1044 = vld [vmem:[%s6 + $0x8] sm:$0xff]
    %v1045 = vld [vmem:[%s6 + $0x10] sm:$0xff]
    %v1046 = vld [vmem:[%s6 + $0x18] sm:$0xff]
    %v1047 = vld [vmem:[%s6 + $0x20] sm:$0xff]
    %v1048 = vld [vmem:[%s6 + $0x28] sm:$0xff]
    %v1049 = vld [vmem:[%s6 + $0x30] sm:$0xff]
    %v1050 = vld [vmem:[%s6 + $0x38] sm:$0xff]
    %s1051 = scalar_lea.vmem %s2, 17
    %v1052 = vld [vmem:[%s1051] ss:$8 sm:$0x3]
    %v1054 = vlaneseq
    %v1055 = vshrl.u32 %v1054, 7
    %v1056 = vsub.s32 0, %v1055
    %v1057 = vrot.slane %v1052, %v1056
    %v1058 = vlaneseq
    %v1059 = vshrl.u32 %v1058, 7
    %v1060 = vsub.s32 1, %v1059
    %v1061 = vrot.slane %v1052, %v1060
    %v1072 = vunpack.c.l.b16 %v1043
    %v1073 = vunpack.c.h.b16 %v1043
    %v1074 = vunpack.c.l.b16 %v1044
    %v1075 = vunpack.c.h.b16 %v1044
    %v1076 = vunpack.c.l.b16 %v1045
    %v1077 = vunpack.c.h.b16 %v1045
    %v1078 = vunpack.c.l.b16 %v1046
    %v1079 = vunpack.c.h.b16 %v1046
    %v1080 = vunpack.c.l.b16 %v1047
    %v1081 = vunpack.c.h.b16 %v1047
    %v1082 = vunpack.c.l.b16 %v1048
    %v1083 = vunpack.c.h.b16 %v1048
    %v1084 = vunpack.c.l.b16 %v1049
    %v1085 = vunpack.c.h.b16 %v1049
    %v1086 = vunpack.c.l.b16 %v1050
    %v1087 = vunpack.c.h.b16 %v1050
    %v1088 = vpack.c.b16 %v1074, %v1072
    %v1089 = vpack.c.b16 %v1075, %v1073
    %v1090 = vpack.c.b16 %v1078, %v1076
    %v1091 = vpack.c.b16 %v1079, %v1077
    %v1092 = vpack.c.b16 %v1082, %v1080
    %v1093 = vpack.c.b16 %v1083, %v1081
    %v1094 = vpack.c.b16 %v1086, %v1084
    %v1095 = vpack.c.b16 %v1087, %v1085
    %v1105 = vsel %vm189, %v1041, 0
    %v1108 = vsel %vm189, %v1042, 0
    %1110 = vmatprep.subr.bf16.mxu0 0
    %1111 = vmatpush1.bf16.msra.mxu0 0
    %1112 = vmatprep.subr.bf16.mxu0 0
    %1113 = vmatpush1.bf16.msra.mxu0 0
    %1114 = vmatprep.subr.bf16.mxu0 0
    %1115 = vmatpush1.bf16.msra.mxu0 0
    %1116 = vmatprep.subr.bf16.mxu0 0
    %1117 = vmatpush1.bf16.msra.mxu0 0
    %1118 = vmatprep.subr.bf16.mxu0 %v1095
    %1119 = vmatpush1.bf16.msra.mxu0 %v1094
    %1120 = vmatprep.subr.bf16.mxu0 %v1093
    %1121 = vmatpush1.bf16.msra.mxu0 %v1092
    %1122 = vmatprep.subr.bf16.mxu0 %v1091
    %1123 = vmatpush1.bf16.msra.mxu0 %v1090
    %1124 = vmatprep.subr.bf16.mxu0 %v1089
    %1125 = vmatpush1.bf16.msra.mxu0 %v1088
    %1126 = vmatprep.subr.bf16.mxu0 0
    %1127 = vmatpush2.bf16.msra.mxu0 0
    %1128 = vmatprep.subr.bf16.mxu0 0
    %1129 = vmatpush2.bf16.msra.mxu0 0
    %1130 = vmatprep.subr.bf16.mxu0 0
    %1131 = vmatpush2.bf16.msra.mxu0 0
    %1132 = vmatprep.subr.bf16.mxu0 0
    %1133 = vmatpush2.bf16.msra.mxu0 0
    %1134 = vmatprep.subr.bf16.mxu0 0
    %1135 = vmatpush2.bf16.msra.mxu0 0
    %1136 = vmatprep.subr.bf16.mxu0 0
    %1137 = vmatpush2.bf16.msra.mxu0 0
    %1138 = vmatprep.subr.bf16.mxu0 0
    %1139 = vmatpush2.bf16.msra.mxu0 0
    %1140 = vmatprep.subr.bf16.mxu0 0
    %1141 = vmatpush2.bf16.msra.mxu0 0
    %1142 = vmatprep.mubr.bf16.mxu0 0
    %1143 = vmatmul.mubr.bf16.gmra.mxu0 %v1105
    %v1144 = vpop.f32.mrf.mxu0
    %v1145 = vadd.f32 %v1057, %v1144
    %v1146 = vpop.f32.mrf.mxu0
    %v1147 = vadd.f32 %v1061, %v1146
    %v1148 = vpop.f32.mrf.mxu0
    %v1149 = vadd.f32 %v1057, %v1148
    %v1150 = vpop.f32.mrf.mxu0
    %v1151 = vadd.f32 %v1061, %v1150
    %1152 = vmatprep.mubr.bf16.mxu0 0
    %1153 = vmatmul.mubr.bf16.gmra.mxu0 %v1108
    %v1154 = vpop.f32.mrf.mxu0
    %v1155 = vadd.f32 %v1057, %v1154
    %v1156 = vpop.f32.mrf.mxu0
    %v1157 = vadd.f32 %v1061, %v1156
    %v1158 = vpop.f32.mrf.mxu0
    %v1159 = vadd.f32 %v1057, %v1158
    %v1160 = vpop.f32.mrf.mxu0
    %v1161 = vadd.f32 %v1061, %v1160
    %1162 = vdwg.mxu0
    %v1163 = vmax.f32 %v1145, 0.0
    %v1164 = vmax.f32 %v1147, 0.0
    %v1165 = vmax.f32 %v1149, 0.0
    %v1166 = vmax.f32 %v1151, 0.0
    %v1167 = vmax.f32 %v1155, 0.0
    %v1168 = vmax.f32 %v1157, 0.0
    %v1169 = vmax.f32 %v1159, 0.0
    %v1170 = vmax.f32 %v1161, 0.0
    %v1171 = vpack.c.bf16 %v1165, %v1163
    %v1172 = vpack.c.bf16 %v1166, %v1164
    %v1173 = vpack.c.bf16 %v1169, %v1167
    %v1174 = vpack.c.bf16 %v1170, %v1168
    %v1175 = vld [vmem:[%s7] sm:$0xf]
    %v1176 = vld [vmem:[%s7 + $0x4] sm:$0xf]
    %v1177 = vld [vmem:[%s7 + $0x8] sm:$0xf]
    %v1178 = vld [vmem:[%s7 + $0xc] sm:$0xf]
    %v1179 = vld [vmem:[%s7 + $0x10] sm:$0xf]
    %v1180 = vld [vmem:[%s7 + $0x14] sm:$0xf]
    %v1181 = vld [vmem:[%s7 + $0x18] sm:$0xf]
    %v1182 = vld [vmem:[%s7 + $0x1c] sm:$0xf]
    %v1183 = vld [vmem:[%s7 + $0x20] sm:$0xf]
    %v1184 = vld [vmem:[%s7 + $0x24] sm:$0xf]
    %v1185 = vld [vmem:[%s7 + $0x28] sm:$0xf]
    %v1186 = vld [vmem:[%s7 + $0x2c] sm:$0xf]
    %v1187 = vld [vmem:[%s7 + $0x30] sm:$0xf]
    %v1188 = vld [vmem:[%s7 + $0x34] sm:$0xf]
    %v1189 = vld [vmem:[%s7 + $0x38] sm:$0xf]
    %v1190 = vld [vmem:[%s7 + $0x3c] sm:$0xf]
    %v1191 = vld [vmem:[%s7 + $0x40] sm:$0xf]
    %v1192 = vld [vmem:[%s7 + $0x44] sm:$0xf]
    %v1193 = vld [vmem:[%s7 + $0x48] sm:$0xf]
    %v1194 = vld [vmem:[%s7 + $0x4c] sm:$0xf]
    %v1195 = vld [vmem:[%s7 + $0x50] sm:$0xf]
    %v1196 = vld [vmem:[%s7 + $0x54] sm:$0xf]
    %v1197 = vld [vmem:[%s7 + $0x58] sm:$0xf]
    %v1198 = vld [vmem:[%s7 + $0x5c] sm:$0xf]
    %v1199 = vld [vmem:[%s7 + $0x60] sm:$0xf]
    %v1200 = vld [vmem:[%s7 + $0x64] sm:$0xf]
    %v1201 = vld [vmem:[%s7 + $0x68] sm:$0xf]
    %v1202 = vld [vmem:[%s7 + $0x6c] sm:$0xf]
    %v1203 = vld [vmem:[%s7 + $0x70] sm:$0xf]
    %v1204 = vld [vmem:[%s7 + $0x74] sm:$0xf]
    %v1205 = vld [vmem:[%s7 + $0x78] sm:$0xf]
    %v1206 = vld [vmem:[%s7 + $0x7c] sm:$0xf]
    %v1207 = vld [vmem:[%s2 + $0x12] ss:$0 sm:$0xff]
    %v1240 = vunpack.c.l.b16 %v1175
    %v1241 = vunpack.c.l.b16 %v1176
    %v1242 = vunpack.c.l.b16 %v1177
    %v1243 = vunpack.c.l.b16 %v1178
    %v1244 = vunpack.c.l.b16 %v1179
    %v1245 = vunpack.c.l.b16 %v1180
    %v1246 = vunpack.c.l.b16 %v1181
    %v1247 = vunpack.c.l.b16 %v1182
    %v1248 = vunpack.c.l.b16 %v1183
    %v1249 = vunpack.c.l.b16 %v1184
    %v1250 = vunpack.c.l.b16 %v1185
    %v1251 = vunpack.c.l.b16 %v1186
    %v1252 = vunpack.c.l.b16 %v1187
    %v1253 = vunpack.c.l.b16 %v1188
    %v1254 = vunpack.c.l.b16 %v1189
    %v1255 = vunpack.c.l.b16 %v1190
    %v1256 = vunpack.c.l.b16 %v1191
    %v1257 = vunpack.c.l.b16 %v1192
    %v1258 = vunpack.c.l.b16 %v1193
    %v1259 = vunpack.c.l.b16 %v1194
    %v1260 = vunpack.c.l.b16 %v1195
    %v1261 = vunpack.c.l.b16 %v1196
    %v1262 = vunpack.c.l.b16 %v1197
    %v1263 = vunpack.c.l.b16 %v1198
    %v1264 = vunpack.c.l.b16 %v1199
    %v1265 = vunpack.c.l.b16 %v1200
    %v1266 = vunpack.c.l.b16 %v1201
    %v1267 = vunpack.c.l.b16 %v1202
    %v1268 = vunpack.c.l.b16 %v1203
    %v1269 = vunpack.c.l.b16 %v1204
    %v1270 = vunpack.c.l.b16 %v1205
    %v1271 = vunpack.c.l.b16 %v1206
    %v1272 = vpack.c.b16 %v1241, %v1240
    %v1273 = vpack.c.b16 %v1243, %v1242
    %v1274 = vpack.c.b16 %v1245, %v1244
    %v1275 = vpack.c.b16 %v1247, %v1246
    %v1276 = vpack.c.b16 %v1249, %v1248
    %v1277 = vpack.c.b16 %v1251, %v1250
    %v1278 = vpack.c.b16 %v1253, %v1252
    %v1279 = vpack.c.b16 %v1255, %v1254
    %v1280 = vpack.c.b16 %v1257, %v1256
    %v1281 = vpack.c.b16 %v1259, %v1258
    %v1282 = vpack.c.b16 %v1261, %v1260
    %v1283 = vpack.c.b16 %v1263, %v1262
    %v1284 = vpack.c.b16 %v1265, %v1264
    %v1285 = vpack.c.b16 %v1267, %v1266
    %v1286 = vpack.c.b16 %v1269, %v1268
    %v1287 = vpack.c.b16 %v1271, %v1270
    %1304 = vmatprep.subr.bf16.mxu0 0
    %1305 = vmatpush1.bf16.msra.mxu0 %v1279
    %1306 = vmatprep.subr.bf16.mxu0 0
    %1307 = vmatpush1.bf16.msra.mxu0 %v1278
    %1308 = vmatprep.subr.bf16.mxu0 0
    %1309 = vmatpush1.bf16.msra.mxu0 %v1277
    %1310 = vmatprep.subr.bf16.mxu0 0
    %1311 = vmatpush1.bf16.msra.mxu0 %v1276
    %1312 = vmatprep.subr.bf16.mxu0 0
    %1313 = vmatpush1.bf16.msra.mxu0 %v1275
    %1314 = vmatprep.subr.bf16.mxu0 0
    %1315 = vmatpush1.bf16.msra.mxu0 %v1274
    %1316 = vmatprep.subr.bf16.mxu0 0
    %1317 = vmatpush1.bf16.msra.mxu0 %v1273
    %1318 = vmatprep.subr.bf16.mxu0 0
    %1319 = vmatpush1.bf16.msra.mxu0 %v1272
    %1320 = vmatprep.subr.bf16.mxu0 0
    %1321 = vmatpush2.bf16.msra.mxu0 %v1287
    %1322 = vmatprep.subr.bf16.mxu0 0
    %1323 = vmatpush2.bf16.msra.mxu0 %v1286
    %1324 = vmatprep.subr.bf16.mxu0 0
    %1325 = vmatpush2.bf16.msra.mxu0 %v1285
    %1326 = vmatprep.subr.bf16.mxu0 0
    %1327 = vmatpush2.bf16.msra.mxu0 %v1284
    %1328 = vmatprep.subr.bf16.mxu0 0
    %1329 = vmatpush2.bf16.msra.mxu0 %v1283
    %1330 = vmatprep.subr.bf16.mxu0 0
    %1331 = vmatpush2.bf16.msra.mxu0 %v1282
    %1332 = vmatprep.subr.bf16.mxu0 0
    %1333 = vmatpush2.bf16.msra.mxu0 %v1281
    %1334 = vmatprep.subr.bf16.mxu0 0
    %1335 = vmatpush2.bf16.msra.mxu0 %v1280
    %1336 = vmatprep.mubr.bf16.mxu0 %v1172
    %1337 = vmatmul.mubr.bf16.gmra.mxu0 %v1171
    %v1338 = vpop.f32.mrf.mxu0
    %v1339 = vadd.f32 %v1207, %v1338
    %v1340 = vpop.f32.mrf.mxu0
    %v1341 = vpop.f32.mrf.mxu0
    %v1342 = vadd.f32 %v1207, %v1341
    %v1343 = vpop.f32.mrf.mxu0
    %1344 = vmatprep.mubr.bf16.mxu0 %v1174
    %1345 = vmatmul.mubr.bf16.gmra.mxu0 %v1173
    %v1346 = vpop.f32.mrf.mxu0
    %v1347 = vadd.f32 %v1207, %v1346
    %v1348 = vpop.f32.mrf.mxu0
    %v1349 = vpop.f32.mrf.mxu0
    %v1350 = vadd.f32 %v1207, %v1349
    %v1351 = vpop.f32.mrf.mxu0
    %1352 = vdwg.mxu0
    %v1353 = vadd.f32 %v1037, %v1339
    %v1354 = vadd.f32 %v1038, %v1342
    %v1355 = vadd.f32 %v1039, %v1347
    %v1356 = vadd.f32 %v1040, %v1350
    %v1357 = vld [vmem:[%s2 + $0x13] ss:$0 sm:$0xff]
    %v1358 = vld [vmem:[%s2 + $0x14] ss:$0 sm:$0xff]
    %v1359 = vsel %vm189, %v1353, 0.0
    %1360 = vadd.xlane.f32.xlu0 %v1359
    %v1361 = vpop.xlane.xlu0 %1360
    %v1362 = vsel %vm189, %v1354, 0.0
    %1363 = vadd.xlane.f32.xlu0 %v1362
    %v1364 = vpop.xlane.xlu0 %1363
    %v1365 = vsel %vm189, %v1355, 0.0
    %1366 = vadd.xlane.f32.xlu0 %v1365
    %v1367 = vpop.xlane.xlu0 %1366
    %v1368 = vsel %vm189, %v1356, 0.0
    %1369 = vadd.xlane.f32.xlu0 %v1368
    %v1370 = vpop.xlane.xlu0 %1369
    %v1371 = vmul.f32 %v1361, %v202
    %v1372 = vmul.f32 %v1364, %v202
    %v1373 = vmul.f32 %v1367, %v202
    %v1374 = vmul.f32 %v1370, %v202
    %v1375 = vsub.f32 %v1353, %v1371
    %v1376 = vsub.f32 %v1354, %v1372
    %v1377 = vsub.f32 %v1355, %v1373
    %v1378 = vsub.f32 %v1356, %v1374
    %v1379 = vmul.f32 %v1375, %v1375
    %v1380 = vmul.f32 %v1376, %v1376
    %v1381 = vmul.f32 %v1377, %v1377
    %v1382 = vmul.f32 %v1378, %v1378
    %v1383 = vsel %vm189, %v1379, 0.0
    %1384 = vadd.xlane.f32.xlu0 %v1383
    %v1385 = vpop.xlane.xlu0 %1384
    %v1386 = vsel %vm189, %v1380, 0.0
    %1387 = vadd.xlane.f32.xlu0 %v1386
    %v1388 = vpop.xlane.xlu0 %1387
    %v1389 = vsel %vm189, %v1381, 0.0
    %1390 = vadd.xlane.f32.xlu0 %v1389
    %v1391 = vpop.xlane.xlu0 %1390
    %v1392 = vsel %vm189, %v1382, 0.0
    %1393 = vadd.xlane.f32.xlu0 %v1392
    %v1394 = vpop.xlane.xlu0 %1393
    %v1395 = vmul.f32 %v1385, %v202
    %v1396 = vmul.f32 %v1388, %v202
    %v1397 = vmul.f32 %v1391, %v202
    %v1398 = vmul.f32 %v1394, %v202
    %v1399 = vadd.f32 %v1395, 1e-05
    %v1400 = vadd.f32 %v1396, 1e-05
    %v1401 = vadd.f32 %v1397, 1e-05
    %v1402 = vadd.f32 %v1398, 1e-05
    %v1403 = vrsqrt.pop %v1399
    %v1404 = vrsqrt.pop %v1400
    %v1405 = vrsqrt.pop %v1401
    %v1406 = vrsqrt.pop %v1402
    %v1407 = vmul.f32 %v1375, %v1403
    %v1408 = vmul.f32 %v1376, %v1404
    %v1409 = vmul.f32 %v1377, %v1405
    %v1410 = vmul.f32 %v1378, %v1406
    %v1411 = vmul.f32 %v1407, %v1357
    %v1412 = vmul.f32 %v1408, %v1357
    %v1413 = vmul.f32 %v1409, %v1357
    %v1414 = vmul.f32 %v1410, %v1357
    %v1415 = vadd.f32 %v1411, %v1358
    %v1416 = vadd.f32 %v1412, %v1358
    %v1417 = vadd.f32 %v1413, %v1358
    %v1418 = vadd.f32 %v1414, %v1358
    %v1419 = vpack.c.bf16 %v1416, %v1415
    %v1420 = vpack.c.bf16 %v1418, %v1417
    %s1421 = scalar_lea.vmem %s4, 64
    %v1422 = vld [vmem:[%s1421] sm:$0xff]
    %v1423 = vld [vmem:[%s1421 + $0x8] sm:$0xff]
    %v1424 = vld [vmem:[%s1421 + $0x10] sm:$0xff]
    %v1425 = vld [vmem:[%s1421 + $0x18] sm:$0xff]
    %v1426 = vld [vmem:[%s1421 + $0x20] sm:$0xff]
    %v1427 = vld [vmem:[%s1421 + $0x28] sm:$0xff]
    %v1428 = vld [vmem:[%s1421 + $0x30] sm:$0xff]
    %v1429 = vld [vmem:[%s1421 + $0x38] sm:$0xff]
    %s1430 = scalar_lea.vmem %s2, 21
    %v1431 = vld [vmem:[%s1430] ss:$8 sm:$0x3]
    %v1433 = vlaneseq
    %v1434 = vshrl.u32 %v1433, 7
    %v1435 = vsub.s32 0, %v1434
    %v1436 = vrot.slane %v1431, %v1435
    %v1437 = vlaneseq
    %v1438 = vshrl.u32 %v1437, 7
    %v1439 = vsub.s32 1, %v1438
    %v1440 = vrot.slane %v1431, %v1439
    %v1451 = vunpack.c.l.b16 %v1422
    %v1452 = vunpack.c.h.b16 %v1422
    %v1453 = vunpack.c.l.b16 %v1423
    %v1454 = vunpack.c.h.b16 %v1423
    %v1455 = vunpack.c.l.b16 %v1424
    %v1456 = vunpack.c.h.b16 %v1424
    %v1457 = vunpack.c.l.b16 %v1425
    %v1458 = vunpack.c.h.b16 %v1425
    %v1459 = vunpack.c.l.b16 %v1426
    %v1460 = vunpack.c.h.b16 %v1426
    %v1461 = vunpack.c.l.b16 %v1427
    %v1462 = vunpack.c.h.b16 %v1427
    %v1463 = vunpack.c.l.b16 %v1428
    %v1464 = vunpack.c.h.b16 %v1428
    %v1465 = vunpack.c.l.b16 %v1429
    %v1466 = vunpack.c.h.b16 %v1429
    %v1467 = vpack.c.b16 %v1453, %v1451
    %v1468 = vpack.c.b16 %v1454, %v1452
    %v1469 = vpack.c.b16 %v1457, %v1455
    %v1470 = vpack.c.b16 %v1458, %v1456
    %v1471 = vpack.c.b16 %v1461, %v1459
    %v1472 = vpack.c.b16 %v1462, %v1460
    %v1473 = vpack.c.b16 %v1465, %v1463
    %v1474 = vpack.c.b16 %v1466, %v1464
    %v1484 = vsel %vm189, %v1419, 0
    %v1487 = vsel %vm189, %v1420, 0
    %1489 = vmatprep.subr.bf16.mxu0 0
    %1490 = vmatpush1.bf16.msra.mxu0 0
    %1491 = vmatprep.subr.bf16.mxu0 0
    %1492 = vmatpush1.bf16.msra.mxu0 0
    %1493 = vmatprep.subr.bf16.mxu0 0
    %1494 = vmatpush1.bf16.msra.mxu0 0
    %1495 = vmatprep.subr.bf16.mxu0 0
    %1496 = vmatpush1.bf16.msra.mxu0 0
    %1497 = vmatprep.subr.bf16.mxu0 %v1474
    %1498 = vmatpush1.bf16.msra.mxu0 %v1473
    %1499 = vmatprep.subr.bf16.mxu0 %v1472
    %1500 = vmatpush1.bf16.msra.mxu0 %v1471
    %1501 = vmatprep.subr.bf16.mxu0 %v1470
    %1502 = vmatpush1.bf16.msra.mxu0 %v1469
    %1503 = vmatprep.subr.bf16.mxu0 %v1468
    %1504 = vmatpush1.bf16.msra.mxu0 %v1467
    %1505 = vmatprep.subr.bf16.mxu0 0
    %1506 = vmatpush2.bf16.msra.mxu0 0
    %1507 = vmatprep.subr.bf16.mxu0 0
    %1508 = vmatpush2.bf16.msra.mxu0 0
    %1509 = vmatprep.subr.bf16.mxu0 0
    %1510 = vmatpush2.bf16.msra.mxu0 0
    %1511 = vmatprep.subr.bf16.mxu0 0
    %1512 = vmatpush2.bf16.msra.mxu0 0
    %1513 = vmatprep.subr.bf16.mxu0 0
    %1514 = vmatpush2.bf16.msra.mxu0 0
    %1515 = vmatprep.subr.bf16.mxu0 0
    %1516 = vmatpush2.bf16.msra.mxu0 0
    %1517 = vmatprep.subr.bf16.mxu0 0
    %1518 = vmatpush2.bf16.msra.mxu0 0
    %1519 = vmatprep.subr.bf16.mxu0 0
    %1520 = vmatpush2.bf16.msra.mxu0 0
    %1521 = vmatprep.mubr.bf16.mxu0 0
    %1522 = vmatmul.mubr.bf16.gmra.mxu0 %v1484
    %v1523 = vpop.f32.mrf.mxu0
    %v1524 = vadd.f32 %v1436, %v1523
    %v1525 = vpop.f32.mrf.mxu0
    %v1526 = vadd.f32 %v1440, %v1525
    %v1527 = vpop.f32.mrf.mxu0
    %v1528 = vadd.f32 %v1436, %v1527
    %v1529 = vpop.f32.mrf.mxu0
    %v1530 = vadd.f32 %v1440, %v1529
    %1531 = vmatprep.mubr.bf16.mxu0 0
    %1532 = vmatmul.mubr.bf16.gmra.mxu0 %v1487
    %v1533 = vpop.f32.mrf.mxu0
    %v1534 = vadd.f32 %v1436, %v1533
    %v1535 = vpop.f32.mrf.mxu0
    %v1536 = vadd.f32 %v1440, %v1535
    %v1537 = vpop.f32.mrf.mxu0
    %v1538 = vadd.f32 %v1436, %v1537
    %v1539 = vpop.f32.mrf.mxu0
    %v1540 = vadd.f32 %v1440, %v1539
    %1541 = vdwg.mxu0
    %v1542 = vpack.c.bf16 %v1528, %v1524
    %v1543 = vpack.c.bf16 %v1538, %v1534
    %v1544 = vpack.c.bf16 %v1530, %v1526
    %v1545 = vpack.c.bf16 %v1540, %v1536
    %1547 = vrot.lane.b32.xlu0 %v1542, 64
    %v1548 = vpop.permute.xlu0 %1547
    %v1550 = vsel %vm388, %v1542, 0
    %v1553 = vsel %vm388, %v1548, 0
    %1555 = vmatprep.subr.bf16.mxu0 0
    %1556 = vmatpush1.bf16.xpose.msra.mxu0 0
    %1557 = vmatprep.subr.bf16.mxu0 0
    %1558 = vmatpush1.bf16.xpose.msra.mxu0 0
    %1559 = vmatprep.subr.bf16.mxu0 0
    %1560 = vmatpush1.bf16.xpose.msra.mxu0 0
    %1561 = vmatprep.subr.bf16.mxu0 0
    %1562 = vmatpush1.bf16.xpose.msra.mxu0 0
    %1563 = vmatprep.subr.bf16.mxu0 0
    %1564 = vmatpush1.bf16.xpose.msra.mxu0 0
    %1565 = vmatprep.subr.bf16.mxu0 0
    %1566 = vmatpush1.bf16.xpose.msra.mxu0 0
    %1567 = vmatprep.subr.bf16.mxu0 0
    %1568 = vmatpush1.bf16.xpose.msra.mxu0 0
    %1569 = vmatprep.subr.bf16.mxu0 0
    %1570 = vmatpush1.bf16.xpose.msra.mxu0 %v1553
    %1571 = vmatprep.subr.bf16.mxu0 0
    %1572 = vmatpush2.bf16.xpose.msra.mxu0 0
    %1573 = vmatprep.subr.bf16.mxu0 0
    %1574 = vmatpush2.bf16.xpose.msra.mxu0 0
    %1575 = vmatprep.subr.bf16.mxu0 0
    %1576 = vmatpush2.bf16.xpose.msra.mxu0 0
    %1577 = vmatprep.subr.bf16.mxu0 0
    %1578 = vmatpush2.bf16.xpose.msra.mxu0 0
    %1579 = vmatprep.subr.bf16.mxu0 0
    %1580 = vmatpush2.bf16.xpose.msra.mxu0 0
    %1581 = vmatprep.subr.bf16.mxu0 0
    %1582 = vmatpush2.bf16.xpose.msra.mxu0 0
    %1583 = vmatprep.subr.bf16.mxu0 0
    %1584 = vmatpush2.bf16.xpose.msra.mxu0 0
    %1585 = vmatprep.subr.bf16.mxu0 0
    %1586 = vmatpush2.bf16.xpose.msra.mxu0 0
    %1587 = vmatprep.mubr.bf16.mxu0 0
    %1588 = vmatmul.mubr.bf16.gmra.mxu0 %v1550
    %v1589 = vpop.f32.mrf.mxu0
    %v1590 = vadd.f32 0.0, %v1589
    %v1591 = vpop.f32.mrf.mxu0
    %v1592 = vpop.f32.mrf.mxu0
    %v1593 = vadd.f32 0.0, %v1592
    %v1594 = vpop.f32.mrf.mxu0
    %1595 = vdwg.mxu0
    %1597 = vrot.lane.b32.xlu0 %v1543, 64
    %v1598 = vpop.permute.xlu0 %1597
    %v1600 = vsel %vm388, %v1543, 0
    %v1603 = vsel %vm388, %v1598, 0
    %1605 = vmatprep.subr.bf16.mxu0 0
    %1606 = vmatpush1.bf16.xpose.msra.mxu0 0
    %1607 = vmatprep.subr.bf16.mxu0 0
    %1608 = vmatpush1.bf16.xpose.msra.mxu0 0
    %1609 = vmatprep.subr.bf16.mxu0 0
    %1610 = vmatpush1.bf16.xpose.msra.mxu0 0
    %1611 = vmatprep.subr.bf16.mxu0 0
    %1612 = vmatpush1.bf16.xpose.msra.mxu0 0
    %1613 = vmatprep.subr.bf16.mxu0 0
    %1614 = vmatpush1.bf16.xpose.msra.mxu0 0
    %1615 = vmatprep.subr.bf16.mxu0 0
    %1616 = vmatpush1.bf16.xpose.msra.mxu0 0
    %1617 = vmatprep.subr.bf16.mxu0 0
    %1618 = vmatpush1.bf16.xpose.msra.mxu0 0
    %1619 = vmatprep.subr.bf16.mxu0 0
    %1620 = vmatpush1.bf16.xpose.msra.mxu0 %v1603
    %1621 = vmatprep.subr.bf16.mxu0 0
    %1622 = vmatpush2.bf16.xpose.msra.mxu0 0
    %1623 = vmatprep.subr.bf16.mxu0 0
    %1624 = vmatpush2.bf16.xpose.msra.mxu0 0
    %1625 = vmatprep.subr.bf16.mxu0 0
    %1626 = vmatpush2.bf16.xpose.msra.mxu0 0
    %1627 = vmatprep.subr.bf16.mxu0 0
    %1628 = vmatpush2.bf16.xpose.msra.mxu0 0
    %1629 = vmatprep.subr.bf16.mxu0 0
    %1630 = vmatpush2.bf16.xpose.msra.mxu0 0
    %1631 = vmatprep.subr.bf16.mxu0 0
    %1632 = vmatpush2.bf16.xpose.msra.mxu0 0
    %1633 = vmatprep.subr.bf16.mxu0 0
    %1634 = vmatpush2.bf16.xpose.msra.mxu0 0
    %1635 = vmatprep.subr.bf16.mxu0 0
    %1636 = vmatpush2.bf16.xpose.msra.mxu0 0
    %1637 = vmatprep.mubr.bf16.mxu0 0
    %1638 = vmatmul.mubr.bf16.gmra.mxu0 %v1600
    %v1639 = vpop.f32.mrf.mxu0
    %v1640 = vadd.f32 0.0, %v1639
    %v1641 = vpop.f32.mrf.mxu0
    %v1642 = vpop.f32.mrf.mxu0
    %v1643 = vadd.f32 0.0, %v1642
    %v1644 = vpop.f32.mrf.mxu0
    %1645 = vdwg.mxu0
    %v1646 = vsel %vm486, %v1590, -inf
    %1647 = vmax.xlane.f32.xlu0 %v1646
    %v1648 = vpop.xlane.xlu0 %1647
    %v1649 = vsel %vm486, %v1593, -inf
    %1650 = vmax.xlane.f32.xlu0 %v1649
    %v1651 = vpop.xlane.xlu0 %1650
    %v1652 = vsel %vm486, %v1640, -inf
    %1653 = vmax.xlane.f32.xlu0 %v1652
    %v1654 = vpop.xlane.xlu0 %1653
    %v1655 = vsel %vm486, %v1643, -inf
    %1656 = vmax.xlane.f32.xlu0 %v1655
    %v1657 = vpop.xlane.xlu0 %1656
    %v1658 = vsub.f32 %v1590, %v1648
    %v1659 = vsub.f32 %v1593, %v1651
    %v1660 = vsub.f32 %v1640, %v1654
    %v1661 = vsub.f32 %v1643, %v1657
    %v1662 = vmul.f32 %v1658, 1.442695
    %v1663 = vpow.pop %v1662
    %v1664 = vmul.f32 %v1659, 1.442695
    %v1665 = vpow.pop %v1664
    %v1666 = vmul.f32 %v1660, 1.442695
    %v1667 = vpow.pop %v1666
    %v1668 = vmul.f32 %v1661, 1.442695
    %v1669 = vpow.pop %v1668
    %v1670 = vsel %vm486, %v1663, 0.0
    %1671 = vadd.xlane.f32.xlu0 %v1670
    %v1672 = vpop.xlane.xlu0 %1671
    %v1673 = vsel %vm486, %v1665, 0.0
    %1674 = vadd.xlane.f32.xlu0 %v1673
    %v1675 = vpop.xlane.xlu0 %1674
    %v1676 = vsel %vm486, %v1667, 0.0
    %1677 = vadd.xlane.f32.xlu0 %v1676
    %v1678 = vpop.xlane.xlu0 %1677
    %v1679 = vsel %vm486, %v1669, 0.0
    %1680 = vadd.xlane.f32.xlu0 %v1679
    %v1681 = vpop.xlane.xlu0 %1680
    %v1682 = vrcp.pop %v1672
    %v1683 = vrcp.pop %v1675
    %v1684 = vrcp.pop %v1678
    %v1685 = vrcp.pop %v1681
    %v1686 = vmul.f32 %v1663, %v1682
    %v1687 = vmul.f32 %v1665, %v1683
    %v1688 = vmul.f32 %v1667, %v1684
    %v1689 = vmul.f32 %v1669, %v1685
    %v1690 = vpack.c.bf16 %v1687, %v1686
    %v1691 = vpack.c.bf16 %v1689, %v1688
    %v1693 = vsel %vm486, %v1690, 0
    %1695 = vmatprep.subr.bf16.mxu0 0
    %1696 = vmatpush1.bf16.msra.mxu0 0
    %1697 = vmatprep.subr.bf16.mxu0 0
    %1698 = vmatpush1.bf16.msra.mxu0 0
    %1699 = vmatprep.subr.bf16.mxu0 0
    %1700 = vmatpush1.bf16.msra.mxu0 0
    %1701 = vmatprep.subr.bf16.mxu0 0
    %1702 = vmatpush1.bf16.msra.mxu0 0
    %1703 = vmatprep.subr.bf16.mxu0 0
    %1704 = vmatpush1.bf16.msra.mxu0 0
    %1705 = vmatprep.subr.bf16.mxu0 0
    %1706 = vmatpush1.bf16.msra.mxu0 0
    %1707 = vmatprep.subr.bf16.mxu0 0
    %1708 = vmatpush1.bf16.msra.mxu0 0
    %1709 = vmatprep.subr.bf16.mxu0 0
    %1710 = vmatpush1.bf16.msra.mxu0 %v1544
    %1711 = vmatprep.subr.bf16.mxu0 0
    %1712 = vmatpush2.bf16.msra.mxu0 0
    %1713 = vmatprep.subr.bf16.mxu0 0
    %1714 = vmatpush2.bf16.msra.mxu0 0
    %1715 = vmatprep.subr.bf16.mxu0 0
    %1716 = vmatpush2.bf16.msra.mxu0 0
    %1717 = vmatprep.subr.bf16.mxu0 0
    %1718 = vmatpush2.bf16.msra.mxu0 0
    %1719 = vmatprep.subr.bf16.mxu0 0
    %1720 = vmatpush2.bf16.msra.mxu0 0
    %1721 = vmatprep.subr.bf16.mxu0 0
    %1722 = vmatpush2.bf16.msra.mxu0 0
    %1723 = vmatprep.subr.bf16.mxu0 0
    %1724 = vmatpush2.bf16.msra.mxu0 0
    %1725 = vmatprep.subr.bf16.mxu0 0
    %1726 = vmatpush2.bf16.msra.mxu0 0
    %1727 = vmatprep.mubr.bf16.mxu0 0
    %1728 = vmatmul.mubr.bf16.gmra.mxu0 %v1693
    %v1729 = vpop.f32.mrf.mxu0
    %v1730 = vadd.f32 0.0, %v1729
    %v1731 = vpop.f32.mrf.mxu0
    %v1732 = vpop.f32.mrf.mxu0
    %v1733 = vadd.f32 0.0, %v1732
    %v1734 = vpop.f32.mrf.mxu0
    %1735 = vdwg.mxu0
    %v1737 = vsel %vm486, %v1691, 0
    %1739 = vmatprep.subr.bf16.mxu0 0
    %1740 = vmatpush1.bf16.msra.mxu0 0
    %1741 = vmatprep.subr.bf16.mxu0 0
    %1742 = vmatpush1.bf16.msra.mxu0 0
    %1743 = vmatprep.subr.bf16.mxu0 0
    %1744 = vmatpush1.bf16.msra.mxu0 0
    %1745 = vmatprep.subr.bf16.mxu0 0
    %1746 = vmatpush1.bf16.msra.mxu0 0
    %1747 = vmatprep.subr.bf16.mxu0 0
    %1748 = vmatpush1.bf16.msra.mxu0 0
    %1749 = vmatprep.subr.bf16.mxu0 0
    %1750 = vmatpush1.bf16.msra.mxu0 0
    %1751 = vmatprep.subr.bf16.mxu0 0
    %1752 = vmatpush1.bf16.msra.mxu0 0
    %1753 = vmatprep.subr.bf16.mxu0 0
    %1754 = vmatpush1.bf16.msra.mxu0 %v1545
    %1755 = vmatprep.subr.bf16.mxu0 0
    %1756 = vmatpush2.bf16.msra.mxu0 0
    %1757 = vmatprep.subr.bf16.mxu0 0
    %1758 = vmatpush2.bf16.msra.mxu0 0
    %1759 = vmatprep.subr.bf16.mxu0 0
    %1760 = vmatpush2.bf16.msra.mxu0 0
    %1761 = vmatprep.subr.bf16.mxu0 0
    %1762 = vmatpush2.bf16.msra.mxu0 0
    %1763 = vmatprep.subr.bf16.mxu0 0
    %1764 = vmatpush2.bf16.msra.mxu0 0
    %1765 = vmatprep.subr.bf16.mxu0 0
    %1766 = vmatpush2.bf16.msra.mxu0 0
    %1767 = vmatprep.subr.bf16.mxu0 0
    %1768 = vmatpush2.bf16.msra.mxu0 0
    %1769 = vmatprep.subr.bf16.mxu0 0
    %1770 = vmatpush2.bf16.msra.mxu0 0
    %1771 = vmatprep.mubr.bf16.mxu0 0
    %1772 = vmatmul.mubr.bf16.gmra.mxu0 %v1737
    %v1773 = vpop.f32.mrf.mxu0
    %v1774 = vadd.f32 0.0, %v1773
    %v1775 = vpop.f32.mrf.mxu0
    %v1776 = vpop.f32.mrf.mxu0
    %v1777 = vadd.f32 0.0, %v1776
    %v1778 = vpop.f32.mrf.mxu0
    %1779 = vdwg.mxu0
    %1780 = vrot.lane.b32.xlu0 %v1542, 96
    %v1781 = vpop.permute.xlu0 %1780
    %1782 = vrot.lane.b32.xlu0 %v1542, 32
    %v1783 = vpop.permute.xlu0 %1782
    %v1785 = vsel %vm388, %v1781, 0
    %v1788 = vsel %vm388, %v1783, 0
    %1790 = vmatprep.subr.bf16.mxu0 0
    %1791 = vmatpush1.bf16.xpose.msra.mxu0 0
    %1792 = vmatprep.subr.bf16.mxu0 0
    %1793 = vmatpush1.bf16.xpose.msra.mxu0 0
    %1794 = vmatprep.subr.bf16.mxu0 0
    %1795 = vmatpush1.bf16.xpose.msra.mxu0 0
    %1796 = vmatprep.subr.bf16.mxu0 0
    %1797 = vmatpush1.bf16.xpose.msra.mxu0 0
    %1798 = vmatprep.subr.bf16.mxu0 0
    %1799 = vmatpush1.bf16.xpose.msra.mxu0 0
    %1800 = vmatprep.subr.bf16.mxu0 0
    %1801 = vmatpush1.bf16.xpose.msra.mxu0 0
    %1802 = vmatprep.subr.bf16.mxu0 0
    %1803 = vmatpush1.bf16.xpose.msra.mxu0 0
    %1804 = vmatprep.subr.bf16.mxu0 0
    %1805 = vmatpush1.bf16.xpose.msra.mxu0 %v1788
    %1806 = vmatprep.subr.bf16.mxu0 0
    %1807 = vmatpush2.bf16.xpose.msra.mxu0 0
    %1808 = vmatprep.subr.bf16.mxu0 0
    %1809 = vmatpush2.bf16.xpose.msra.mxu0 0
    %1810 = vmatprep.subr.bf16.mxu0 0
    %1811 = vmatpush2.bf16.xpose.msra.mxu0 0
    %1812 = vmatprep.subr.bf16.mxu0 0
    %1813 = vmatpush2.bf16.xpose.msra.mxu0 0
    %1814 = vmatprep.subr.bf16.mxu0 0
    %1815 = vmatpush2.bf16.xpose.msra.mxu0 0
    %1816 = vmatprep.subr.bf16.mxu0 0
    %1817 = vmatpush2.bf16.xpose.msra.mxu0 0
    %1818 = vmatprep.subr.bf16.mxu0 0
    %1819 = vmatpush2.bf16.xpose.msra.mxu0 0
    %1820 = vmatprep.subr.bf16.mxu0 0
    %1821 = vmatpush2.bf16.xpose.msra.mxu0 0
    %1822 = vmatprep.mubr.bf16.mxu0 0
    %1823 = vmatmul.mubr.bf16.gmra.mxu0 %v1785
    %v1824 = vpop.f32.mrf.mxu0
    %v1825 = vadd.f32 0.0, %v1824
    %v1826 = vpop.f32.mrf.mxu0
    %v1827 = vpop.f32.mrf.mxu0
    %v1828 = vadd.f32 0.0, %v1827
    %v1829 = vpop.f32.mrf.mxu0
    %1830 = vdwg.mxu0
    %1831 = vrot.lane.b32.xlu0 %v1543, 96
    %v1832 = vpop.permute.xlu0 %1831
    %1833 = vrot.lane.b32.xlu0 %v1543, 32
    %v1834 = vpop.permute.xlu0 %1833
    %v1836 = vsel %vm388, %v1832, 0
    %v1839 = vsel %vm388, %v1834, 0
    %1841 = vmatprep.subr.bf16.mxu0 0
    %1842 = vmatpush1.bf16.xpose.msra.mxu0 0
    %1843 = vmatprep.subr.bf16.mxu0 0
    %1844 = vmatpush1.bf16.xpose.msra.mxu0 0
    %1845 = vmatprep.subr.bf16.mxu0 0
    %1846 = vmatpush1.bf16.xpose.msra.mxu0 0
    %1847 = vmatprep.subr.bf16.mxu0 0
    %1848 = vmatpush1.bf16.xpose.msra.mxu0 0
    %1849 = vmatprep.subr.bf16.mxu0 0
    %1850 = vmatpush1.bf16.xpose.msra.mxu0 0
    %1851 = vmatprep.subr.bf16.mxu0 0
    %1852 = vmatpush1.bf16.xpose.msra.mxu0 0
    %1853 = vmatprep.subr.bf16.mxu0 0
    %1854 = vmatpush1.bf16.xpose.msra.mxu0 0
    %1855 = vmatprep.subr.bf16.mxu0 0
    %1856 = vmatpush1.bf16.xpose.msra.mxu0 %v1839
    %1857 = vmatprep.subr.bf16.mxu0 0
    %1858 = vmatpush2.bf16.xpose.msra.mxu0 0
    %1859 = vmatprep.subr.bf16.mxu0 0
    %1860 = vmatpush2.bf16.xpose.msra.mxu0 0
    %1861 = vmatprep.subr.bf16.mxu0 0
    %1862 = vmatpush2.bf16.xpose.msra.mxu0 0
    %1863 = vmatprep.subr.bf16.mxu0 0
    %1864 = vmatpush2.bf16.xpose.msra.mxu0 0
    %1865 = vmatprep.subr.bf16.mxu0 0
    %1866 = vmatpush2.bf16.xpose.msra.mxu0 0
    %1867 = vmatprep.subr.bf16.mxu0 0
    %1868 = vmatpush2.bf16.xpose.msra.mxu0 0
    %1869 = vmatprep.subr.bf16.mxu0 0
    %1870 = vmatpush2.bf16.xpose.msra.mxu0 0
    %1871 = vmatprep.subr.bf16.mxu0 0
    %1872 = vmatpush2.bf16.xpose.msra.mxu0 0
    %1873 = vmatprep.mubr.bf16.mxu0 0
    %1874 = vmatmul.mubr.bf16.gmra.mxu0 %v1836
    %v1875 = vpop.f32.mrf.mxu0
    %v1876 = vadd.f32 0.0, %v1875
    %v1877 = vpop.f32.mrf.mxu0
    %v1878 = vpop.f32.mrf.mxu0
    %v1879 = vadd.f32 0.0, %v1878
    %v1880 = vpop.f32.mrf.mxu0
    %1881 = vdwg.mxu0
    %v1882 = vsel %vm486, %v1825, -inf
    %1883 = vmax.xlane.f32.xlu0 %v1882
    %v1884 = vpop.xlane.xlu0 %1883
    %v1885 = vsel %vm486, %v1828, -inf
    %1886 = vmax.xlane.f32.xlu0 %v1885
    %v1887 = vpop.xlane.xlu0 %1886
    %v1888 = vsel %vm486, %v1876, -inf
    %1889 = vmax.xlane.f32.xlu0 %v1888
    %v1890 = vpop.xlane.xlu0 %1889
    %v1891 = vsel %vm486, %v1879, -inf
    %1892 = vmax.xlane.f32.xlu0 %v1891
    %v1893 = vpop.xlane.xlu0 %1892
    %v1894 = vsub.f32 %v1825, %v1884
    %v1895 = vsub.f32 %v1828, %v1887
    %v1896 = vsub.f32 %v1876, %v1890
    %v1897 = vsub.f32 %v1879, %v1893
    %v1898 = vmul.f32 %v1894, 1.442695
    %v1899 = vpow.pop %v1898
    %v1900 = vmul.f32 %v1895, 1.442695
    %v1901 = vpow.pop %v1900
    %v1902 = vmul.f32 %v1896, 1.442695
    %v1903 = vpow.pop %v1902
    %v1904 = vmul.f32 %v1897, 1.442695
    %v1905 = vpow.pop %v1904
    %v1906 = vsel %vm486, %v1899, 0.0
    %1907 = vadd.xlane.f32.xlu0 %v1906
    %v1908 = vpop.xlane.xlu0 %1907
    %v1909 = vsel %vm486, %v1901, 0.0
    %1910 = vadd.xlane.f32.xlu0 %v1909
    %v1911 = vpop.xlane.xlu0 %1910
    %v1912 = vsel %vm486, %v1903, 0.0
    %1913 = vadd.xlane.f32.xlu0 %v1912
    %v1914 = vpop.xlane.xlu0 %1913
    %v1915 = vsel %vm486, %v1905, 0.0
    %1916 = vadd.xlane.f32.xlu0 %v1915
    %v1917 = vpop.xlane.xlu0 %1916
    %v1918 = vrcp.pop %v1908
    %v1919 = vrcp.pop %v1911
    %v1920 = vrcp.pop %v1914
    %v1921 = vrcp.pop %v1917
    %v1922 = vmul.f32 %v1899, %v1918
    %v1923 = vmul.f32 %v1901, %v1919
    %v1924 = vmul.f32 %v1903, %v1920
    %v1925 = vmul.f32 %v1905, %v1921
    %v1926 = vpack.c.bf16 %v1923, %v1922
    %v1927 = vpack.c.bf16 %v1925, %v1924
    %1929 = vrot.lane.b32.xlu0 %v1544, 96
    %v1930 = vpop.permute.xlu0 %1929
    %v1933 = vsel %vm486, %v1926, 0
    %1935 = vmatprep.subr.bf16.mxu0 0
    %1936 = vmatpush1.bf16.msra.mxu0 0
    %1937 = vmatprep.subr.bf16.mxu0 0
    %1938 = vmatpush1.bf16.msra.mxu0 0
    %1939 = vmatprep.subr.bf16.mxu0 0
    %1940 = vmatpush1.bf16.msra.mxu0 0
    %1941 = vmatprep.subr.bf16.mxu0 0
    %1942 = vmatpush1.bf16.msra.mxu0 0
    %1943 = vmatprep.subr.bf16.mxu0 0
    %1944 = vmatpush1.bf16.msra.mxu0 0
    %1945 = vmatprep.subr.bf16.mxu0 0
    %1946 = vmatpush1.bf16.msra.mxu0 0
    %1947 = vmatprep.subr.bf16.mxu0 0
    %1948 = vmatpush1.bf16.msra.mxu0 0
    %1949 = vmatprep.subr.bf16.mxu0 0
    %1950 = vmatpush1.bf16.msra.mxu0 %v1930
    %1951 = vmatprep.subr.bf16.mxu0 0
    %1952 = vmatpush2.bf16.msra.mxu0 0
    %1953 = vmatprep.subr.bf16.mxu0 0
    %1954 = vmatpush2.bf16.msra.mxu0 0
    %1955 = vmatprep.subr.bf16.mxu0 0
    %1956 = vmatpush2.bf16.msra.mxu0 0
    %1957 = vmatprep.subr.bf16.mxu0 0
    %1958 = vmatpush2.bf16.msra.mxu0 0
    %1959 = vmatprep.subr.bf16.mxu0 0
    %1960 = vmatpush2.bf16.msra.mxu0 0
    %1961 = vmatprep.subr.bf16.mxu0 0
    %1962 = vmatpush2.bf16.msra.mxu0 0
    %1963 = vmatprep.subr.bf16.mxu0 0
    %1964 = vmatpush2.bf16.msra.mxu0 0
    %1965 = vmatprep.subr.bf16.mxu0 0
    %1966 = vmatpush2.bf16.msra.mxu0 0
    %1967 = vmatprep.mubr.bf16.mxu0 0
    %1968 = vmatmul.mubr.bf16.gmra.mxu0 %v1933
    %v1969 = vpop.f32.mrf.mxu0
    %v1970 = vadd.f32 0.0, %v1969
    %v1971 = vpop.f32.mrf.mxu0
    %v1972 = vpop.f32.mrf.mxu0
    %v1973 = vadd.f32 0.0, %v1972
    %v1974 = vpop.f32.mrf.mxu0
    %1975 = vdwg.mxu0
    %1977 = vrot.lane.b32.xlu0 %v1545, 96
    %v1978 = vpop.permute.xlu0 %1977
    %v1981 = vsel %vm486, %v1927, 0
    %1983 = vmatprep.subr.bf16.mxu0 0
    %1984 = vmatpush1.bf16.msra.mxu0 0
    %1985 = vmatprep.subr.bf16.mxu0 0
    %1986 = vmatpush1.bf16.msra.mxu0 0
    %1987 = vmatprep.subr.bf16.mxu0 0
    %1988 = vmatpush1.bf16.msra.mxu0 0
    %1989 = vmatprep.subr.bf16.mxu0 0
    %1990 = vmatpush1.bf16.msra.mxu0 0
    %1991 = vmatprep.subr.bf16.mxu0 0
    %1992 = vmatpush1.bf16.msra.mxu0 0
    %1993 = vmatprep.subr.bf16.mxu0 0
    %1994 = vmatpush1.bf16.msra.mxu0 0
    %1995 = vmatprep.subr.bf16.mxu0 0
    %1996 = vmatpush1.bf16.msra.mxu0 0
    %1997 = vmatprep.subr.bf16.mxu0 0
    %1998 = vmatpush1.bf16.msra.mxu0 %v1978
    %1999 = vmatprep.subr.bf16.mxu0 0
    %2000 = vmatpush2.bf16.msra.mxu0 0
    %2001 = vmatprep.subr.bf16.mxu0 0
    %2002 = vmatpush2.bf16.msra.mxu0 0
    %2003 = vmatprep.subr.bf16.mxu0 0
    %2004 = vmatpush2.bf16.msra.mxu0 0
    %2005 = vmatprep.subr.bf16.mxu0 0
    %2006 = vmatpush2.bf16.msra.mxu0 0
    %2007 = vmatprep.subr.bf16.mxu0 0
    %2008 = vmatpush2.bf16.msra.mxu0 0
    %2009 = vmatprep.subr.bf16.mxu0 0
    %2010 = vmatpush2.bf16.msra.mxu0 0
    %2011 = vmatprep.subr.bf16.mxu0 0
    %2012 = vmatpush2.bf16.msra.mxu0 0
    %2013 = vmatprep.subr.bf16.mxu0 0
    %2014 = vmatpush2.bf16.msra.mxu0 0
    %2015 = vmatprep.mubr.bf16.mxu0 0
    %2016 = vmatmul.mubr.bf16.gmra.mxu0 %v1981
    %v2017 = vpop.f32.mrf.mxu0
    %v2018 = vadd.f32 0.0, %v2017
    %v2019 = vpop.f32.mrf.mxu0
    %v2020 = vpop.f32.mrf.mxu0
    %v2021 = vadd.f32 0.0, %v2020
    %v2022 = vpop.f32.mrf.mxu0
    %2023 = vdwg.mxu0
    %2028 = vrot.lane.b32.xlu0 %v1970, 32
    %v2029 = vpop.permute.xlu0 %2028
    %2030 = vrot.lane.b32.xlu0 %v1973, 32
    %v2031 = vpop.permute.xlu0 %2030
    %2032 = vrot.lane.b32.xlu0 %v2018, 32
    %v2033 = vpop.permute.xlu0 %2032
    %2034 = vrot.lane.b32.xlu0 %v2021, 32
    %v2035 = vpop.permute.xlu0 %2034
    %v2040 = vsel %vm388, %v1730, %v2029
    %v2041 = vsel %vm388, %v1733, %v2031
    %v2042 = vsel %vm388, %v1774, %v2033
    %v2043 = vsel %vm388, %v1777, %v2035
    %v2044 = vpack.c.bf16 %v2041, %v2040
    %v2045 = vpack.c.bf16 %v2043, %v2042
    %s2046 = scalar_lea.vmem %s5, 32
    %v2047 = vld [vmem:[%s2046] sm:$0xf]
    %v2048 = vld [vmem:[%s2046 + $0x4] sm:$0xf]
    %v2049 = vld [vmem:[%s2046 + $0x8] sm:$0xf]
    %v2050 = vld [vmem:[%s2046 + $0xc] sm:$0xf]
    %v2051 = vld [vmem:[%s2046 + $0x10] sm:$0xf]
    %v2052 = vld [vmem:[%s2046 + $0x14] sm:$0xf]
    %v2053 = vld [vmem:[%s2046 + $0x18] sm:$0xf]
    %v2054 = vld [vmem:[%s2046 + $0x1c] sm:$0xf]
    %v2055 = vld [vmem:[%s2 + $0x16] ss:$0 sm:$0xff]
    %v2064 = vunpack.c.l.b16 %v2047
    %v2065 = vunpack.c.l.b16 %v2048
    %v2066 = vunpack.c.l.b16 %v2049
    %v2067 = vunpack.c.l.b16 %v2050
    %v2068 = vunpack.c.l.b16 %v2051
    %v2069 = vunpack.c.l.b16 %v2052
    %v2070 = vunpack.c.l.b16 %v2053
    %v2071 = vunpack.c.l.b16 %v2054
    %v2072 = vpack.c.b16 %v2065, %v2064
    %v2073 = vpack.c.b16 %v2067, %v2066
    %v2074 = vpack.c.b16 %v2069, %v2068
    %v2075 = vpack.c.b16 %v2071, %v2070
    %v2081 = vsel %vm189, %v2044, 0
    %v2084 = vsel %vm189, %v2045, 0
    %2086 = vmatprep.subr.bf16.mxu0 0
    %2087 = vmatpush1.bf16.msra.mxu0 0
    %2088 = vmatprep.subr.bf16.mxu0 0
    %2089 = vmatpush1.bf16.msra.mxu0 0
    %2090 = vmatprep.subr.bf16.mxu0 0
    %2091 = vmatpush1.bf16.msra.mxu0 0
    %2092 = vmatprep.subr.bf16.mxu0 0
    %2093 = vmatpush1.bf16.msra.mxu0 0
    %2094 = vmatprep.subr.bf16.mxu0 0
    %2095 = vmatpush1.bf16.msra.mxu0 %v2075
    %2096 = vmatprep.subr.bf16.mxu0 0
    %2097 = vmatpush1.bf16.msra.mxu0 %v2074
    %2098 = vmatprep.subr.bf16.mxu0 0
    %2099 = vmatpush1.bf16.msra.mxu0 %v2073
    %2100 = vmatprep.subr.bf16.mxu0 0
    %2101 = vmatpush1.bf16.msra.mxu0 %v2072
    %2102 = vmatprep.subr.bf16.mxu0 0
    %2103 = vmatpush2.bf16.msra.mxu0 0
    %2104 = vmatprep.subr.bf16.mxu0 0
    %2105 = vmatpush2.bf16.msra.mxu0 0
    %2106 = vmatprep.subr.bf16.mxu0 0
    %2107 = vmatpush2.bf16.msra.mxu0 0
    %2108 = vmatprep.subr.bf16.mxu0 0
    %2109 = vmatpush2.bf16.msra.mxu0 0
    %2110 = vmatprep.subr.bf16.mxu0 0
    %2111 = vmatpush2.bf16.msra.mxu0 0
    %2112 = vmatprep.subr.bf16.mxu0 0
    %2113 = vmatpush2.bf16.msra.mxu0 0
    %2114 = vmatprep.subr.bf16.mxu0 0
    %2115 = vmatpush2.bf16.msra.mxu0 0
    %2116 = vmatprep.subr.bf16.mxu0 0
    %2117 = vmatpush2.bf16.msra.mxu0 0
    %2118 = vmatprep.mubr.bf16.mxu0 0
    %2119 = vmatmul.mubr.bf16.gmra.mxu0 %v2081
    %v2120 = vpop.f32.mrf.mxu0
    %v2121 = vadd.f32 %v2055, %v2120
    %v2122 = vpop.f32.mrf.mxu0
    %v2123 = vpop.f32.mrf.mxu0
    %v2124 = vadd.f32 %v2055, %v2123
    %v2125 = vpop.f32.mrf.mxu0
    %2126 = vmatprep.mubr.bf16.mxu0 0
    %2127 = vmatmul.mubr.bf16.gmra.mxu0 %v2084
    %v2128 = vpop.f32.mrf.mxu0
    %v2129 = vadd.f32 %v2055, %v2128
    %v2130 = vpop.f32.mrf.mxu0
    %v2131 = vpop.f32.mrf.mxu0
    %v2132 = vadd.f32 %v2055, %v2131
    %v2133 = vpop.f32.mrf.mxu0
    %2134 = vdwg.mxu0
    %v2135 = vadd.f32 %v1415, %v2121
    %v2136 = vadd.f32 %v1416, %v2124
    %v2137 = vadd.f32 %v1417, %v2129
    %v2138 = vadd.f32 %v1418, %v2132
    %v2139 = vld [vmem:[%s2 + $0x17] ss:$0 sm:$0xff]
    %v2140 = vld [vmem:[%s2 + $0x20] ss:$0 sm:$0xff]
    %v2141 = vsel %vm189, %v2135, 0.0
    %2142 = vadd.xlane.f32.xlu0 %v2141
    %v2143 = vpop.xlane.xlu0 %2142
    %v2144 = vsel %vm189, %v2136, 0.0
    %2145 = vadd.xlane.f32.xlu0 %v2144
    %v2146 = vpop.xlane.xlu0 %2145
    %v2147 = vsel %vm189, %v2137, 0.0
    %2148 = vadd.xlane.f32.xlu0 %v2147
    %v2149 = vpop.xlane.xlu0 %2148
    %v2150 = vsel %vm189, %v2138, 0.0
    %2151 = vadd.xlane.f32.xlu0 %v2150
    %v2152 = vpop.xlane.xlu0 %2151
    %v2153 = vmul.f32 %v2143, %v202
    %v2154 = vmul.f32 %v2146, %v202
    %v2155 = vmul.f32 %v2149, %v202
    %v2156 = vmul.f32 %v2152, %v202
    %v2157 = vsub.f32 %v2135, %v2153
    %v2158 = vsub.f32 %v2136, %v2154
    %v2159 = vsub.f32 %v2137, %v2155
    %v2160 = vsub.f32 %v2138, %v2156
    %v2161 = vmul.f32 %v2157, %v2157
    %v2162 = vmul.f32 %v2158, %v2158
    %v2163 = vmul.f32 %v2159, %v2159
    %v2164 = vmul.f32 %v2160, %v2160
    %v2165 = vsel %vm189, %v2161, 0.0
    %2166 = vadd.xlane.f32.xlu0 %v2165
    %v2167 = vpop.xlane.xlu0 %2166
    %v2168 = vsel %vm189, %v2162, 0.0
    %2169 = vadd.xlane.f32.xlu0 %v2168
    %v2170 = vpop.xlane.xlu0 %2169
    %v2171 = vsel %vm189, %v2163, 0.0
    %2172 = vadd.xlane.f32.xlu0 %v2171
    %v2173 = vpop.xlane.xlu0 %2172
    %v2174 = vsel %vm189, %v2164, 0.0
    %2175 = vadd.xlane.f32.xlu0 %v2174
    %v2176 = vpop.xlane.xlu0 %2175
    %v2177 = vmul.f32 %v2167, %v202
    %v2178 = vmul.f32 %v2170, %v202
    %v2179 = vmul.f32 %v2173, %v202
    %v2180 = vmul.f32 %v2176, %v202
    %v2181 = vadd.f32 %v2177, 1e-05
    %v2182 = vadd.f32 %v2178, 1e-05
    %v2183 = vadd.f32 %v2179, 1e-05
    %v2184 = vadd.f32 %v2180, 1e-05
    %v2185 = vrsqrt.pop %v2181
    %v2186 = vrsqrt.pop %v2182
    %v2187 = vrsqrt.pop %v2183
    %v2188 = vrsqrt.pop %v2184
    %v2189 = vmul.f32 %v2157, %v2185
    %v2190 = vmul.f32 %v2158, %v2186
    %v2191 = vmul.f32 %v2159, %v2187
    %v2192 = vmul.f32 %v2160, %v2188
    %v2193 = vmul.f32 %v2189, %v2139
    %v2194 = vmul.f32 %v2190, %v2139
    %v2195 = vmul.f32 %v2191, %v2139
    %v2196 = vmul.f32 %v2192, %v2139
    %v2197 = vadd.f32 %v2193, %v2140
    %v2198 = vadd.f32 %v2194, %v2140
    %v2199 = vadd.f32 %v2195, %v2140
    %v2200 = vadd.f32 %v2196, %v2140
    %v2201 = vpack.c.bf16 %v2198, %v2197
    %v2202 = vpack.c.bf16 %v2200, %v2199
    %s2203 = scalar_lea.vmem %s6, 64
    %v2204 = vld [vmem:[%s2203] sm:$0xff]
    %v2205 = vld [vmem:[%s2203 + $0x8] sm:$0xff]
    %v2206 = vld [vmem:[%s2203 + $0x10] sm:$0xff]
    %v2207 = vld [vmem:[%s2203 + $0x18] sm:$0xff]
    %v2208 = vld [vmem:[%s2203 + $0x20] sm:$0xff]
    %v2209 = vld [vmem:[%s2203 + $0x28] sm:$0xff]
    %v2210 = vld [vmem:[%s2203 + $0x30] sm:$0xff]
    %v2211 = vld [vmem:[%s2203 + $0x38] sm:$0xff]
    %s2212 = scalar_lea.vmem %s2, 33
    %v2213 = vld [vmem:[%s2212] ss:$8 sm:$0x3]
    %v2215 = vlaneseq
    %v2216 = vshrl.u32 %v2215, 7
    %v2217 = vsub.s32 0, %v2216
    %v2218 = vrot.slane %v2213, %v2217
    %v2219 = vlaneseq
    %v2220 = vshrl.u32 %v2219, 7
    %v2221 = vsub.s32 1, %v2220
    %v2222 = vrot.slane %v2213, %v2221
    %v2233 = vunpack.c.l.b16 %v2204
    %v2234 = vunpack.c.h.b16 %v2204
    %v2235 = vunpack.c.l.b16 %v2205
    %v2236 = vunpack.c.h.b16 %v2205
    %v2237 = vunpack.c.l.b16 %v2206
    %v2238 = vunpack.c.h.b16 %v2206
    %v2239 = vunpack.c.l.b16 %v2207
    %v2240 = vunpack.c.h.b16 %v2207
    %v2241 = vunpack.c.l.b16 %v2208
    %v2242 = vunpack.c.h.b16 %v2208
    %v2243 = vunpack.c.l.b16 %v2209
    %v2244 = vunpack.c.h.b16 %v2209
    %v2245 = vunpack.c.l.b16 %v2210
    %v2246 = vunpack.c.h.b16 %v2210
    %v2247 = vunpack.c.l.b16 %v2211
    %v2248 = vunpack.c.h.b16 %v2211
    %v2249 = vpack.c.b16 %v2235, %v2233
    %v2250 = vpack.c.b16 %v2236, %v2234
    %v2251 = vpack.c.b16 %v2239, %v2237
    %v2252 = vpack.c.b16 %v2240, %v2238
    %v2253 = vpack.c.b16 %v2243, %v2241
    %v2254 = vpack.c.b16 %v2244, %v2242
    %v2255 = vpack.c.b16 %v2247, %v2245
    %v2256 = vpack.c.b16 %v2248, %v2246
    %v2266 = vsel %vm189, %v2201, 0
    %v2269 = vsel %vm189, %v2202, 0
    %2271 = vmatprep.subr.bf16.mxu0 0
    %2272 = vmatpush1.bf16.msra.mxu0 0
    %2273 = vmatprep.subr.bf16.mxu0 0
    %2274 = vmatpush1.bf16.msra.mxu0 0
    %2275 = vmatprep.subr.bf16.mxu0 0
    %2276 = vmatpush1.bf16.msra.mxu0 0
    %2277 = vmatprep.subr.bf16.mxu0 0
    %2278 = vmatpush1.bf16.msra.mxu0 0
    %2279 = vmatprep.subr.bf16.mxu0 %v2256
    %2280 = vmatpush1.bf16.msra.mxu0 %v2255
    %2281 = vmatprep.subr.bf16.mxu0 %v2254
    %2282 = vmatpush1.bf16.msra.mxu0 %v2253
    %2283 = vmatprep.subr.bf16.mxu0 %v2252
    %2284 = vmatpush1.bf16.msra.mxu0 %v2251
    %2285 = vmatprep.subr.bf16.mxu0 %v2250
    %2286 = vmatpush1.bf16.msra.mxu0 %v2249
    %2287 = vmatprep.subr.bf16.mxu0 0
    %2288 = vmatpush2.bf16.msra.mxu0 0
    %2289 = vmatprep.subr.bf16.mxu0 0
    %2290 = vmatpush2.bf16.msra.mxu0 0
    %2291 = vmatprep.subr.bf16.mxu0 0
    %2292 = vmatpush2.bf16.msra.mxu0 0
    %2293 = vmatprep.subr.bf16.mxu0 0
    %2294 = vmatpush2.bf16.msra.mxu0 0
    %2295 = vmatprep.subr.bf16.mxu0 0
    %2296 = vmatpush2.bf16.msra.mxu0 0
    %2297 = vmatprep.subr.bf16.mxu0 0
    %2298 = vmatpush2.bf16.msra.mxu0 0
    %2299 = vmatprep.subr.bf16.mxu0 0
    %2300 = vmatpush2.bf16.msra.mxu0 0
    %2301 = vmatprep.subr.bf16.mxu0 0
    %2302 = vmatpush2.bf16.msra.mxu0 0
    %2303 = vmatprep.mubr.bf16.mxu0 0
    %2304 = vmatmul.mubr.bf16.gmra.mxu0 %v2266
    %v2305 = vpop.f32.mrf.mxu0
    %v2306 = vadd.f32 %v2218, %v2305
    %v2307 = vpop.f32.mrf.mxu0
    %v2308 = vadd.f32 %v2222, %v2307
    %v2309 = vpop.f32.mrf.mxu0
    %v2310 = vadd.f32 %v2218, %v2309
    %v2311 = vpop.f32.mrf.mxu0
    %v2312 = vadd.f32 %v2222, %v2311
    %2313 = vmatprep.mubr.bf16.mxu0 0
    %2314 = vmatmul.mubr.bf16.gmra.mxu0 %v2269
    %v2315 = vpop.f32.mrf.mxu0
    %v2316 = vadd.f32 %v2218, %v2315
    %v2317 = vpop.f32.mrf.mxu0
    %v2318 = vadd.f32 %v2222, %v2317
    %v2319 = vpop.f32.mrf.mxu0
    %v2320 = vadd.f32 %v2218, %v2319
    %v2321 = vpop.f32.mrf.mxu0
    %v2322 = vadd.f32 %v2222, %v2321
    %2323 = vdwg.mxu0
    %v2324 = vmax.f32 %v2306, 0.0
    %v2325 = vmax.f32 %v2308, 0.0
    %v2326 = vmax.f32 %v2310, 0.0
    %v2327 = vmax.f32 %v2312, 0.0
    %v2328 = vmax.f32 %v2316, 0.0
    %v2329 = vmax.f32 %v2318, 0.0
    %v2330 = vmax.f32 %v2320, 0.0
    %v2331 = vmax.f32 %v2322, 0.0
    %v2332 = vpack.c.bf16 %v2326, %v2324
    %v2333 = vpack.c.bf16 %v2327, %v2325
    %v2334 = vpack.c.bf16 %v2330, %v2328
    %v2335 = vpack.c.bf16 %v2331, %v2329
    %s2336 = scalar_lea.vmem %s7, 128
    %v2337 = vld [vmem:[%s2336] sm:$0xf]
    %v2338 = vld [vmem:[%s2336 + $0x4] sm:$0xf]
    %v2339 = vld [vmem:[%s2336 + $0x8] sm:$0xf]
    %v2340 = vld [vmem:[%s2336 + $0xc] sm:$0xf]
    %v2341 = vld [vmem:[%s2336 + $0x10] sm:$0xf]
    %v2342 = vld [vmem:[%s2336 + $0x14] sm:$0xf]
    %v2343 = vld [vmem:[%s2336 + $0x18] sm:$0xf]
    %v2344 = vld [vmem:[%s2336 + $0x1c] sm:$0xf]
    %v2345 = vld [vmem:[%s2336 + $0x20] sm:$0xf]
    %v2346 = vld [vmem:[%s2336 + $0x24] sm:$0xf]
    %v2347 = vld [vmem:[%s2336 + $0x28] sm:$0xf]
    %v2348 = vld [vmem:[%s2336 + $0x2c] sm:$0xf]
    %v2349 = vld [vmem:[%s2336 + $0x30] sm:$0xf]
    %v2350 = vld [vmem:[%s2336 + $0x34] sm:$0xf]
    %v2351 = vld [vmem:[%s2336 + $0x38] sm:$0xf]
    %v2352 = vld [vmem:[%s2336 + $0x3c] sm:$0xf]
    %v2353 = vld [vmem:[%s2336 + $0x40] sm:$0xf]
    %v2354 = vld [vmem:[%s2336 + $0x44] sm:$0xf]
    %v2355 = vld [vmem:[%s2336 + $0x48] sm:$0xf]
    %v2356 = vld [vmem:[%s2336 + $0x4c] sm:$0xf]
    %v2357 = vld [vmem:[%s2336 + $0x50] sm:$0xf]
    %v2358 = vld [vmem:[%s2336 + $0x54] sm:$0xf]
    %v2359 = vld [vmem:[%s2336 + $0x58] sm:$0xf]
    %v2360 = vld [vmem:[%s2336 + $0x5c] sm:$0xf]
    %v2361 = vld [vmem:[%s2336 + $0x60] sm:$0xf]
    %v2362 = vld [vmem:[%s2336 + $0x64] sm:$0xf]
    %v2363 = vld [vmem:[%s2336 + $0x68] sm:$0xf]
    %v2364 = vld [vmem:[%s2336 + $0x6c] sm:$0xf]
    %v2365 = vld [vmem:[%s2336 + $0x70] sm:$0xf]
    %v2366 = vld [vmem:[%s2336 + $0x74] sm:$0xf]
    %v2367 = vld [vmem:[%s2336 + $0x78] sm:$0xf]
    %v2368 = vld [vmem:[%s2336 + $0x7c] sm:$0xf]
    %v2369 = vld [vmem:[%s2 + $0x22] ss:$0 sm:$0xff]
    %v2402 = vunpack.c.l.b16 %v2337
    %v2403 = vunpack.c.l.b16 %v2338
    %v2404 = vunpack.c.l.b16 %v2339
    %v2405 = vunpack.c.l.b16 %v2340
    %v2406 = vunpack.c.l.b16 %v2341
    %v2407 = vunpack.c.l.b16 %v2342
    %v2408 = vunpack.c.l.b16 %v2343
    %v2409 = vunpack.c.l.b16 %v2344
    %v2410 = vunpack.c.l.b16 %v2345
    %v2411 = vunpack.c.l.b16 %v2346
    %v2412 = vunpack.c.l.b16 %v2347
    %v2413 = vunpack.c.l.b16 %v2348
    %v2414 = vunpack.c.l.b16 %v2349
    %v2415 = vunpack.c.l.b16 %v2350
    %v2416 = vunpack.c.l.b16 %v2351
    %v2417 = vunpack.c.l.b16 %v2352
    %v2418 = vunpack.c.l.b16 %v2353
    %v2419 = vunpack.c.l.b16 %v2354
    %v2420 = vunpack.c.l.b16 %v2355
    %v2421 = vunpack.c.l.b16 %v2356
    %v2422 = vunpack.c.l.b16 %v2357
    %v2423 = vunpack.c.l.b16 %v2358
    %v2424 = vunpack.c.l.b16 %v2359
    %v2425 = vunpack.c.l.b16 %v2360
    %v2426 = vunpack.c.l.b16 %v2361
    %v2427 = vunpack.c.l.b16 %v2362
    %v2428 = vunpack.c.l.b16 %v2363
    %v2429 = vunpack.c.l.b16 %v2364
    %v2430 = vunpack.c.l.b16 %v2365
    %v2431 = vunpack.c.l.b16 %v2366
    %v2432 = vunpack.c.l.b16 %v2367
    %v2433 = vunpack.c.l.b16 %v2368
    %v2434 = vpack.c.b16 %v2403, %v2402
    %v2435 = vpack.c.b16 %v2405, %v2404
    %v2436 = vpack.c.b16 %v2407, %v2406
    %v2437 = vpack.c.b16 %v2409, %v2408
    %v2438 = vpack.c.b16 %v2411, %v2410
    %v2439 = vpack.c.b16 %v2413, %v2412
    %v2440 = vpack.c.b16 %v2415, %v2414
    %v2441 = vpack.c.b16 %v2417, %v2416
    %v2442 = vpack.c.b16 %v2419, %v2418
    %v2443 = vpack.c.b16 %v2421, %v2420
    %v2444 = vpack.c.b16 %v2423, %v2422
    %v2445 = vpack.c.b16 %v2425, %v2424
    %v2446 = vpack.c.b16 %v2427, %v2426
    %v2447 = vpack.c.b16 %v2429, %v2428
    %v2448 = vpack.c.b16 %v2431, %v2430
    %v2449 = vpack.c.b16 %v2433, %v2432
    %2466 = vmatprep.subr.bf16.mxu0 0
    %2467 = vmatpush1.bf16.msra.mxu0 %v2441
    %2468 = vmatprep.subr.bf16.mxu0 0
    %2469 = vmatpush1.bf16.msra.mxu0 %v2440
    %2470 = vmatprep.subr.bf16.mxu0 0
    %2471 = vmatpush1.bf16.msra.mxu0 %v2439
    %2472 = vmatprep.subr.bf16.mxu0 0
    %2473 = vmatpush1.bf16.msra.mxu0 %v2438
    %2474 = vmatprep.subr.bf16.mxu0 0
    %2475 = vmatpush1.bf16.msra.mxu0 %v2437
    %2476 = vmatprep.subr.bf16.mxu0 0
    %2477 = vmatpush1.bf16.msra.mxu0 %v2436
    %2478 = vmatprep.subr.bf16.mxu0 0
    %2479 = vmatpush1.bf16.msra.mxu0 %v2435
    %2480 = vmatprep.subr.bf16.mxu0 0
    %2481 = vmatpush1.bf16.msra.mxu0 %v2434
    %2482 = vmatprep.subr.bf16.mxu0 0
    %2483 = vmatpush2.bf16.msra.mxu0 %v2449
    %2484 = vmatprep.subr.bf16.mxu0 0
    %2485 = vmatpush2.bf16.msra.mxu0 %v2448
    %2486 = vmatprep.subr.bf16.mxu0 0
    %2487 = vmatpush2.bf16.msra.mxu0 %v2447
    %2488 = vmatprep.subr.bf16.mxu0 0
    %2489 = vmatpush2.bf16.msra.mxu0 %v2446
    %2490 = vmatprep.subr.bf16.mxu0 0
    %2491 = vmatpush2.bf16.msra.mxu0 %v2445
    %2492 = vmatprep.subr.bf16.mxu0 0
    %2493 = vmatpush2.bf16.msra.mxu0 %v2444
    %2494 = vmatprep.subr.bf16.mxu0 0
    %2495 = vmatpush2.bf16.msra.mxu0 %v2443
    %2496 = vmatprep.subr.bf16.mxu0 0
    %2497 = vmatpush2.bf16.msra.mxu0 %v2442
    %2498 = vmatprep.mubr.bf16.mxu0 %v2333
    %2499 = vmatmul.mubr.bf16.gmra.mxu0 %v2332
    %v2500 = vpop.f32.mrf.mxu0
    %v2501 = vadd.f32 %v2369, %v2500
    %v2502 = vpop.f32.mrf.mxu0
    %v2503 = vpop.f32.mrf.mxu0
    %v2504 = vadd.f32 %v2369, %v2503
    %v2505 = vpop.f32.mrf.mxu0
    %2506 = vmatprep.mubr.bf16.mxu0 %v2335
    %2507 = vmatmul.mubr.bf16.gmra.mxu0 %v2334
    %v2508 = vpop.f32.mrf.mxu0
    %v2509 = vadd.f32 %v2369, %v2508
    %v2510 = vpop.f32.mrf.mxu0
    %v2511 = vpop.f32.mrf.mxu0
    %v2512 = vadd.f32 %v2369, %v2511
    %v2513 = vpop.f32.mrf.mxu0
    %2514 = vdwg.mxu0
    %v2515 = vadd.f32 %v2197, %v2501
    %v2516 = vadd.f32 %v2198, %v2504
    %v2517 = vadd.f32 %v2199, %v2509
    %v2518 = vadd.f32 %v2200, %v2512
    %v2519 = vld [vmem:[%s2 + $0x23] ss:$0 sm:$0xff]
    %v2520 = vld [vmem:[%s2 + $0x24] ss:$0 sm:$0xff]
    %v2521 = vsel %vm189, %v2515, 0.0
    %2522 = vadd.xlane.f32.xlu0 %v2521
    %v2523 = vpop.xlane.xlu0 %2522
    %v2524 = vsel %vm189, %v2516, 0.0
    %2525 = vadd.xlane.f32.xlu0 %v2524
    %v2526 = vpop.xlane.xlu0 %2525
    %v2527 = vsel %vm189, %v2517, 0.0
    %2528 = vadd.xlane.f32.xlu0 %v2527
    %v2529 = vpop.xlane.xlu0 %2528
    %v2530 = vsel %vm189, %v2518, 0.0
    %2531 = vadd.xlane.f32.xlu0 %v2530
    %v2532 = vpop.xlane.xlu0 %2531
    %v2533 = vmul.f32 %v2523, %v202
    %v2534 = vmul.f32 %v2526, %v202
    %v2535 = vmul.f32 %v2529, %v202
    %v2536 = vmul.f32 %v2532, %v202
    %v2537 = vsub.f32 %v2515, %v2533
    %v2538 = vsub.f32 %v2516, %v2534
    %v2539 = vsub.f32 %v2517, %v2535
    %v2540 = vsub.f32 %v2518, %v2536
    %v2541 = vmul.f32 %v2537, %v2537
    %v2542 = vmul.f32 %v2538, %v2538
    %v2543 = vmul.f32 %v2539, %v2539
    %v2544 = vmul.f32 %v2540, %v2540
    %v2545 = vsel %vm189, %v2541, 0.0
    %2546 = vadd.xlane.f32.xlu0 %v2545
    %v2547 = vpop.xlane.xlu0 %2546
    %v2548 = vsel %vm189, %v2542, 0.0
    %2549 = vadd.xlane.f32.xlu0 %v2548
    %v2550 = vpop.xlane.xlu0 %2549
    %v2551 = vsel %vm189, %v2543, 0.0
    %2552 = vadd.xlane.f32.xlu0 %v2551
    %v2553 = vpop.xlane.xlu0 %2552
    %v2554 = vsel %vm189, %v2544, 0.0
    %2555 = vadd.xlane.f32.xlu0 %v2554
    %v2556 = vpop.xlane.xlu0 %2555
    %v2557 = vmul.f32 %v2547, %v202
    %v2558 = vmul.f32 %v2550, %v202
    %v2559 = vmul.f32 %v2553, %v202
    %v2560 = vmul.f32 %v2556, %v202
    %v2561 = vadd.f32 %v2557, 1e-05
    %v2562 = vadd.f32 %v2558, 1e-05
    %v2563 = vadd.f32 %v2559, 1e-05
    %v2564 = vadd.f32 %v2560, 1e-05
    %v2565 = vrsqrt.pop %v2561
    %v2566 = vrsqrt.pop %v2562
    %v2567 = vrsqrt.pop %v2563
    %v2568 = vrsqrt.pop %v2564
    %v2569 = vmul.f32 %v2537, %v2565
    %v2570 = vmul.f32 %v2538, %v2566
    %v2571 = vmul.f32 %v2539, %v2567
    %v2572 = vmul.f32 %v2540, %v2568
    %v2573 = vmul.f32 %v2569, %v2519
    %v2574 = vmul.f32 %v2570, %v2519
    %v2575 = vmul.f32 %v2571, %v2519
    %v2576 = vmul.f32 %v2572, %v2519
    %v2577 = vadd.f32 %v2573, %v2520
    %v2578 = vadd.f32 %v2574, %v2520
    %v2579 = vadd.f32 %v2575, %v2520
    %v2580 = vadd.f32 %v2576, %v2520
    %v2581 = vld [vmem:[%s2 + $0x25] ss:$0 sm:$0xff]
    %v2582 = vld [vmem:[%s2 + $0x26] ss:$0 sm:$0xff]
    %v2583 = vsel %vm189, %v2577, 0.0
    %2584 = vadd.xlane.f32.xlu0 %v2583
    %v2585 = vpop.xlane.xlu0 %2584
    %v2586 = vsel %vm189, %v2578, 0.0
    %2587 = vadd.xlane.f32.xlu0 %v2586
    %v2588 = vpop.xlane.xlu0 %2587
    %v2589 = vsel %vm189, %v2579, 0.0
    %2590 = vadd.xlane.f32.xlu0 %v2589
    %v2591 = vpop.xlane.xlu0 %2590
    %v2592 = vsel %vm189, %v2580, 0.0
    %2593 = vadd.xlane.f32.xlu0 %v2592
    %v2594 = vpop.xlane.xlu0 %2593
    %v2595 = vmul.f32 %v2585, %v202
    %v2596 = vmul.f32 %v2588, %v202
    %v2597 = vmul.f32 %v2591, %v202
    %v2598 = vmul.f32 %v2594, %v202
    %v2599 = vsub.f32 %v2577, %v2595
    %v2600 = vsub.f32 %v2578, %v2596
    %v2601 = vsub.f32 %v2579, %v2597
    %v2602 = vsub.f32 %v2580, %v2598
    %v2603 = vmul.f32 %v2599, %v2599
    %v2604 = vmul.f32 %v2600, %v2600
    %v2605 = vmul.f32 %v2601, %v2601
    %v2606 = vmul.f32 %v2602, %v2602
    %v2607 = vsel %vm189, %v2603, 0.0
    %2608 = vadd.xlane.f32.xlu0 %v2607
    %v2609 = vpop.xlane.xlu0 %2608
    %v2610 = vsel %vm189, %v2604, 0.0
    %2611 = vadd.xlane.f32.xlu0 %v2610
    %v2612 = vpop.xlane.xlu0 %2611
    %v2613 = vsel %vm189, %v2605, 0.0
    %2614 = vadd.xlane.f32.xlu0 %v2613
    %v2615 = vpop.xlane.xlu0 %2614
    %v2616 = vsel %vm189, %v2606, 0.0
    %2617 = vadd.xlane.f32.xlu0 %v2616
    %v2618 = vpop.xlane.xlu0 %2617
    %v2619 = vmul.f32 %v2609, %v202
    %v2620 = vmul.f32 %v2612, %v202
    %v2621 = vmul.f32 %v2615, %v202
    %v2622 = vmul.f32 %v2618, %v202
    %v2623 = vadd.f32 %v2619, 1e-05
    %v2624 = vadd.f32 %v2620, 1e-05
    %v2625 = vadd.f32 %v2621, 1e-05
    %v2626 = vadd.f32 %v2622, 1e-05
    %v2627 = vrsqrt.pop %v2623
    %v2628 = vrsqrt.pop %v2624
    %v2629 = vrsqrt.pop %v2625
    %v2630 = vrsqrt.pop %v2626
    %v2631 = vmul.f32 %v2599, %v2627
    %v2632 = vmul.f32 %v2600, %v2628
    %v2633 = vmul.f32 %v2601, %v2629
    %v2634 = vmul.f32 %v2602, %v2630
    %v2635 = vmul.f32 %v2631, %v2581
    %v2636 = vmul.f32 %v2632, %v2581
    %v2637 = vmul.f32 %v2633, %v2581
    %v2638 = vmul.f32 %v2634, %v2581
    %v2639 = vadd.f32 %v2635, %v2582
    %v2640 = vadd.f32 %v2636, %v2582
    %v2641 = vadd.f32 %v2637, %v2582
    %v2642 = vadd.f32 %v2638, %v2582
    %v2643 = vsel %vm189, %v2639, 0.0
    %v2644 = vsel %vm189, %v2640, 0.0
    %v2645 = vadd.f32 %v2643, %v2644
    %v2646 = vrot.slane %v2645, 4
    %v2647 = vadd.f32 %v2645, %v2646
    %v2648 = vrot.slane %v2647, 2
    %v2649 = vadd.f32 %v2647, %v2648
    %v2650 = vrot.slane %v2649, 1
    %v2651 = vadd.f32 %v2649, %v2650
    %v2652 = vsel %vm189, %v2641, 0.0
    %v2653 = vsel %vm189, %v2642, 0.0
    %v2654 = vadd.f32 %v2652, %v2653
    %v2655 = vrot.slane %v2654, 4
    %v2656 = vadd.f32 %v2654, %v2655
    %v2657 = vrot.slane %v2656, 2
    %v2658 = vadd.f32 %v2656, %v2657
    %v2659 = vrot.slane %v2658, 1
    %v2660 = vadd.f32 %v2658, %v2659
    %v2661 = vrcp.pop 16.0
    %v2662 = vmul.f32 %v2651, %v2661
    %v2663 = vmul.f32 %v2660, %v2661
    %v2664 = vpack.c.bf16 %v2662, %v2662
    %v2665 = vpack.c.bf16 %v2663, %v2663
    %v2666 = vld [vmem:[%s8] sm:$0xf]
    %v2667 = vld [vmem:[%s8 + $0x4] sm:$0xf]
    %v2668 = vld [vmem:[%s8 + $0x8] sm:$0xf]
    %v2669 = vld [vmem:[%s8 + $0xc] sm:$0xf]
    %v2670 = vld [vmem:[%s8 + $0x10] sm:$0xf]
    %v2671 = vld [vmem:[%s8 + $0x14] sm:$0xf]
    %v2672 = vld [vmem:[%s8 + $0x18] sm:$0xf]
    %v2673 = vld [vmem:[%s8 + $0x1c] sm:$0xf]
    %v2674 = vld [vmem:[%s2 + $0x27] ss:$0 sm:$0xff]
    %v2677 = vunpack.c.l.b16 %v2664
    %v2678 = vunpack.c.l.b16 %v2665
    %vm2679 = vcmask 1041409
    %v2680 = vsel %vm2679, %v2678, %v2677
    %v2681 = vpack.c.b16 %v2680, %v2680
    %v2690 = vunpack.c.l.b16 %v2666
    %v2691 = vunpack.c.l.b16 %v2667
    %v2692 = vunpack.c.l.b16 %v2668
    %v2693 = vunpack.c.l.b16 %v2669
    %v2694 = vunpack.c.l.b16 %v2670
    %v2695 = vunpack.c.l.b16 %v2671
    %v2696 = vunpack.c.l.b16 %v2672
    %v2697 = vunpack.c.l.b16 %v2673
    %v2698 = vpack.c.b16 %v2691, %v2690
    %v2699 = vpack.c.b16 %v2693, %v2692
    %v2700 = vpack.c.b16 %v2695, %v2694
    %v2701 = vpack.c.b16 %v2697, %v2696
    %v2707 = vsel %vm189, %v2681, 0
    %2709 = vmatprep.subr.bf16.mxu0 0
    %2710 = vmatpush1.bf16.msra.mxu0 0
    %2711 = vmatprep.subr.bf16.mxu0 0
    %2712 = vmatpush1.bf16.msra.mxu0 0
    %2713 = vmatprep.subr.bf16.mxu0 0
    %2714 = vmatpush1.bf16.msra.mxu0 0
    %2715 = vmatprep.subr.bf16.mxu0 0
    %2716 = vmatpush1.bf16.msra.mxu0 0
    %2717 = vmatprep.subr.bf16.mxu0 0
    %2718 = vmatpush1.bf16.msra.mxu0 %v2701
    %2719 = vmatprep.subr.bf16.mxu0 0
    %2720 = vmatpush1.bf16.msra.mxu0 %v2700
    %2721 = vmatprep.subr.bf16.mxu0 0
    %2722 = vmatpush1.bf16.msra.mxu0 %v2699
    %2723 = vmatprep.subr.bf16.mxu0 0
    %2724 = vmatpush1.bf16.msra.mxu0 %v2698
    %2725 = vmatprep.subr.bf16.mxu0 0
    %2726 = vmatpush2.bf16.msra.mxu0 0
    %2727 = vmatprep.subr.bf16.mxu0 0
    %2728 = vmatpush2.bf16.msra.mxu0 0
    %2729 = vmatprep.subr.bf16.mxu0 0
    %2730 = vmatpush2.bf16.msra.mxu0 0
    %2731 = vmatprep.subr.bf16.mxu0 0
    %2732 = vmatpush2.bf16.msra.mxu0 0
    %2733 = vmatprep.subr.bf16.mxu0 0
    %2734 = vmatpush2.bf16.msra.mxu0 0
    %2735 = vmatprep.subr.bf16.mxu0 0
    %2736 = vmatpush2.bf16.msra.mxu0 0
    %2737 = vmatprep.subr.bf16.mxu0 0
    %2738 = vmatpush2.bf16.msra.mxu0 0
    %2739 = vmatprep.subr.bf16.mxu0 0
    %2740 = vmatpush2.bf16.msra.mxu0 0
    %2741 = vmatprep.mubr.bf16.mxu0 0
    %2742 = vmatmul.mubr.bf16.gmra.mxu0 %v2707
    %v2743 = vpop.f32.mrf.mxu0
    %v2744 = vadd.f32 %v2674, %v2743
    %v2745 = vpop.f32.mrf.mxu0
    %v2746 = vpop.f32.mrf.mxu0
    %v2747 = vpop.f32.mrf.mxu0
    %2748 = vdwg.mxu0
    %v2749 = vxor.u32 %v2744, 2147483648
    %v2750 = vmul.f32 %v2749, 1.442695
    %v2751 = vpow.pop %v2750
    %v2752 = vadd.f32 %v2751, 1.0
    %v2753 = vrcp.pop %v2752
    %v2754 = vmul.f32 1.0, %v2753
    %v2755 = vmul.f32 %v2744, %v2754
    %v2756 = vpack.c.bf16 %v2755, %v2755
    %v2757 = vld [vmem:[%s9] sm:$0xf]
    %v2758 = vld [vmem:[%s9 + $0x4] sm:$0xf]
    %v2759 = vld [vmem:[%s9 + $0x8] sm:$0xf]
    %v2760 = vld [vmem:[%s9 + $0xc] sm:$0xf]
    %v2761 = vld [vmem:[%s9 + $0x10] sm:$0xf]
    %v2762 = vld [vmem:[%s9 + $0x14] sm:$0xf]
    %v2763 = vld [vmem:[%s9 + $0x18] sm:$0xf]
    %v2764 = vld [vmem:[%s9 + $0x1c] sm:$0xf]
    %v2765 = vld [vmem:[%s2 + $0x30] ss:$0 sm:$0xff]
    %v2774 = vunpack.c.l.b16 %v2757
    %v2775 = vunpack.c.l.b16 %v2758
    %v2776 = vunpack.c.l.b16 %v2759
    %v2777 = vunpack.c.l.b16 %v2760
    %v2778 = vunpack.c.l.b16 %v2761
    %v2779 = vunpack.c.l.b16 %v2762
    %v2780 = vunpack.c.l.b16 %v2763
    %v2781 = vunpack.c.l.b16 %v2764
    %v2782 = vpack.c.b16 %v2775, %v2774
    %v2783 = vpack.c.b16 %v2777, %v2776
    %v2784 = vpack.c.b16 %v2779, %v2778
    %v2785 = vpack.c.b16 %v2781, %v2780
    %v2791 = vsel %vm189, %v2756, 0
    %2793 = vmatprep.subr.bf16.mxu0 0
    %2794 = vmatpush1.bf16.msra.mxu0 0
    %2795 = vmatprep.subr.bf16.mxu0 0
    %2796 = vmatpush1.bf16.msra.mxu0 0
    %2797 = vmatprep.subr.bf16.mxu0 0
    %2798 = vmatpush1.bf16.msra.mxu0 0
    %2799 = vmatprep.subr.bf16.mxu0 0
    %2800 = vmatpush1.bf16.msra.mxu0 0
    %2801 = vmatprep.subr.bf16.mxu0 0
    %2802 = vmatpush1.bf16.msra.mxu0 %v2785
    %2803 = vmatprep.subr.bf16.mxu0 0
    %2804 = vmatpush1.bf16.msra.mxu0 %v2784
    %2805 = vmatprep.subr.bf16.mxu0 0
    %2806 = vmatpush1.bf16.msra.mxu0 %v2783
    %2807 = vmatprep.subr.bf16.mxu0 0
    %2808 = vmatpush1.bf16.msra.mxu0 %v2782
    %2809 = vmatprep.subr.bf16.mxu0 0
    %2810 = vmatpush2.bf16.msra.mxu0 0
    %2811 = vmatprep.subr.bf16.mxu0 0
    %2812 = vmatpush2.bf16.msra.mxu0 0
    %2813 = vmatprep.subr.bf16.mxu0 0
    %2814 = vmatpush2.bf16.msra.mxu0 0
    %2815 = vmatprep.subr.bf16.mxu0 0
    %2816 = vmatpush2.bf16.msra.mxu0 0
    %2817 = vmatprep.subr.bf16.mxu0 0
    %2818 = vmatpush2.bf16.msra.mxu0 0
    %2819 = vmatprep.subr.bf16.mxu0 0
    %2820 = vmatpush2.bf16.msra.mxu0 0
    %2821 = vmatprep.subr.bf16.mxu0 0
    %2822 = vmatpush2.bf16.msra.mxu0 0
    %2823 = vmatprep.subr.bf16.mxu0 0
    %2824 = vmatpush2.bf16.msra.mxu0 0
    %2825 = vmatprep.mubr.bf16.mxu0 0
    %2826 = vmatmul.mubr.bf16.gmra.mxu0 %v2791
    %v2827 = vpop.f32.mrf.mxu0
    %v2828 = vadd.f32 %v2765, %v2827
    %v2829 = vpop.f32.mrf.mxu0
    %v2830 = vpop.f32.mrf.mxu0
    %v2831 = vpop.f32.mrf.mxu0
    %2832 = vdwg.mxu0
    %vm2833 = vcmask 517120
    %2834 = vst.msk [vmem:[#allocation2] sm:$0x3] %vm2833, %v2828
    // Predicated region
    $region42: #{vit_forward.1} parent=1 // pred_check
      _
    $region43: #{vit_forward.1} parent=1 // pred_check_branch
      %2836 = sbr.rel (0) target = $region45
    $region44: #{vit_forward.1} parent=1 // pred_region
      %s2838 = ssub.s32 32, 32
      %2839 = vsyncadd [#allocation3], %s2838
      %s2841 = sshll.u32 [#allocation2], 4
      %s2842 = int_to_ptr.vmem [resolvable:$true] %s2841
      %2844 = dma.vmem_to_hbm [thread:$0]  %s2842, 32, %s10, [#allocation3]
    $region45: #{vit_forward.1} parent=1 // pred_fallthru
      _
    // Predicated region
    $region46: #{vit_forward.1} parent=1 // pred_check
      _
    $region47: #{vit_forward.1} parent=1 // pred_check_branch
      %2846 = sbr.rel (0) target = $region49
    $region48: #{vit_forward.1} parent=1 // pred_region
      %2847 = dma.done [#allocation3], 32
    $region49: #{vit_forward.1} parent=1 // pred_fallthru
      _
    %2848 = vsyncpa [#allocation3], 1

</llo_original>
